<compile_context>
chip_gen: v7x
topology: tpu7x:2x2x1
jax: 0.10.0
libtpu: 0.0.40
codegen_flags: <defaults>
</compile_context>

<pallas_src>
import functools
import math

import jax
import jax.numpy as jnp
from jax import lax
from jax.experimental import pallas as pl
from jax.experimental.pallas import tpu as pltpu


# --------------------------------------------------------------------------
# Fused kernel: unbalanced Sinkhorn OT + matches / row-sum + regression MLP.
# One batch pair per grid step; everything for a pair fits easily in VMEM.
# --------------------------------------------------------------------------
def _uot_kernel(eps_ref, gam_ref, f1_ref, f2_ref, c1_ref, c2_ref,
                w1_ref, b1_ref, w2_ref, b2_ref, w3_ref, b3_ref,
                t_ref, rs_ref, m_ref, rot_ref, *, n_iters, hidden1):
    eps = eps_ref[0, 0]
    gam = gam_ref[0, 0]
    power = gam / (gam + eps)
    neg_inv_eps = -1.0 / eps

    # Native (C, N)/(C, M) layout — no transpose anywhere; normalise over C.
    f1 = f1_ref[0]                                                  # (C, N)
    f2 = f2_ref[0]                                                  # (C, M)
    f1 = f1 * lax.rsqrt(jnp.sum(f1 * f1, axis=0, keepdims=True) + 1e-8)
    f2 = f2 * lax.rsqrt(jnp.sum(f2 * f2, axis=0, keepdims=True) + 1e-8)

    # cost[n, m] = 1 - <f1[:, n], f2[:, m]>  (TN contraction, no .T built).
    dn = (((0,), (0,)), ((), ()))
    cost = 1.0 - lax.dot_general(f1, f2, dimension_numbers=dn,
                                 preferred_element_type=jnp.float32)  # (N, M)
    K = jnp.exp(cost * neg_inv_eps)

    N, M = cost.shape
    log_p1 = float(math.log(1.0 / N))     # hoisted log(prob1), log(prob2)
    log_p2 = float(math.log(1.0 / M))
    a0 = jnp.full((N, 1), 1.0 / N, jnp.float32)
    b0 = jnp.ones((1, M), jnp.float32)

    def body(_, carry):
        a, b = carry
        # K^T @ a and K @ b as broadcast+reduce (avoids degenerate Nx1 matmuls)
        kta = jnp.sum(K * a, axis=0, keepdims=True)                 # (1, M)
        b = jnp.exp(power * (log_p2 - jnp.log(kta + 1e-8)))
        kb = jnp.sum(K * b, axis=1, keepdims=True)                  # (N, 1)
        a = jnp.exp(power * (log_p1 - jnp.log(kb + 1e-8)))
        return a, b

    a, b = lax.fori_loop(0, n_iters, body, (a0, b0), unroll=True)

    transport = a * K * b                                           # (N, M)
    row_sum = jnp.sum(transport, axis=-1, keepdims=True)            # (N, 1)

    c1 = c1_ref[0]                                                  # (N, 3)
    c2 = c2_ref[0]                                                  # (M, 3)
    matches = jnp.dot(transport, c2,
                      preferred_element_type=jnp.float32) / (row_sum + 1e-8)
    flow = matches - c1

    t_ref[0] = transport
    rs_ref[0] = row_sum
    m_ref[0] = matches

    # ---- fused regression head: FC1 -> ReLU -> FC2 -> ReLU -> FC3 --------
    # W1 arrives as the free view (N, 9*H) where row n holds the nine H-wide
    # weight blocks for x[n, 0..8] = [c1[n] | matches[n] | flow[n]].
    # FC1 = three TN contractions + static diagonal-block gather; this avoids
    # any in-kernel flatten of (N, 9) to (1, 9N).
    H = hidden1
    w1 = w1_ref[...].astype(jnp.float32)                            # (N, 9H)
    q_c = lax.dot_general(c1, w1, dimension_numbers=dn,
                          preferred_element_type=jnp.float32)       # (3, 9H)
    q_m = lax.dot_general(matches, w1, dimension_numbers=dn,
                          preferred_element_type=jnp.float32)       # (3, 9H)
    q_f = lax.dot_general(flow, w1, dimension_numbers=dn,
                          preferred_element_type=jnp.float32)       # (3, 9H)

    h = b1_ref[...]                                                 # (1, H)
    for j in range(3):
        h = h + q_c[j:j + 1, j * H:(j + 1) * H]
        h = h + q_m[j:j + 1, (j + 3) * H:(j + 4) * H]
        h = h + q_f[j:j + 1, (j + 6) * H:(j + 7) * H]
    h = jnp.maximum(h, 0.0)
    h = jnp.dot(h, w2_ref[...].astype(jnp.float32),
                preferred_element_type=jnp.float32) + b2_ref[...]
    h = jnp.maximum(h, 0.0)
    rot_ref[0] = (jnp.dot(h, w3_ref[...].astype(jnp.float32),
                          preferred_element_type=jnp.float32) + b3_ref[...])


def uot_pallas(feats, coords1, coords2, eps, gam,
               w1, b1, w2, b2, w3, b3, n_iters):
    """feats: (2B, C, NUM) channels-first (anchor rows then positives);
    coords1/coords2: (B, NUM, 3); w1 already viewed as (NUM, 9*H1) bf16."""
    twoB, C, NUM = feats.shape
    assert twoB % 2 == 0
    B = twoB // 2
    H1 = b1.shape[-1]
    H2 = b2.shape[-1]
    ROT = b3.shape[-1]
    eps_arr = jnp.asarray(eps, jnp.float32).reshape(1, 1)
    gam_arr = jnp.asarray(gam, jnp.float32).reshape(1, 1)

    smem = pl.BlockSpec(memory_space=pltpu.MemorySpace.SMEM)
    out_shape = (
        jax.ShapeDtypeStruct((B, NUM, NUM), jnp.float32),   # transport
        jax.ShapeDtypeStruct((B, NUM, 1), jnp.float32),     # row_sum / conf
        jax.ShapeDtypeStruct((B, NUM, 3), jnp.float32),     # sinkhorn_matches
        jax.ShapeDtypeStruct((B, 1, ROT), jnp.float32),     # out_rotation
    )
    return pl.pallas_call(
        functools.partial(_uot_kernel, n_iters=n_iters, hidden1=H1),
        out_shape=out_shape,
        grid=(B,),
        in_specs=[
            smem,                                                     # epsilon
            smem,                                                     # gamma
            pl.BlockSpec((1, C, NUM), lambda b: (b, 0, 0)),           # feat1
            pl.BlockSpec((1, C, NUM), lambda b, B=B: (b + B, 0, 0)),  # feat2
            pl.BlockSpec((1, NUM, 3), lambda b: (b, 0, 0)),           # coords1
            pl.BlockSpec((1, NUM, 3), lambda b: (b, 0, 0)),           # coords2
            # weights/biases: constant block index => fetched once, resident
            pl.BlockSpec((NUM, 9 * H1), lambda b: (0, 0)),            # W1 view
            pl.BlockSpec((1, H1), lambda b: (0, 0)),                  # b1
            pl.BlockSpec((H1, H2), lambda b: (0, 0)),                 # W2
            pl.BlockSpec((1, H2), lambda b: (0, 0)),                  # b2
            pl.BlockSpec((H2, ROT), lambda b: (0, 0)),                # W3
            pl.BlockSpec((1, ROT), lambda b: (0, 0)),                 # b3
        ],
        out_specs=[
            pl.BlockSpec((1, NUM, NUM), lambda b: (b, 0, 0)),
            pl.BlockSpec((1, NUM, 1), lambda b: (b, 0, 0)),
            pl.BlockSpec((1, NUM, 3), lambda b: (b, 0, 0)),
            pl.BlockSpec((1, 1, ROT), lambda b: (b, 0, 0)),
        ],
        compiler_params=pltpu.CompilerParams(
            dimension_semantics=("parallel",)),
    )(eps_arr, gam_arr, feats, feats, coords1, coords2,
      w1, b1, w2, b2, w3, b3)


# --------------------------------------------------------------------------
# UOTHead forward (pairs mode, unbalanced sinkhorn, use_svd=False).
# --------------------------------------------------------------------------
def uot_head_forward(params, batch_dict, nb_iter=5):
    # TODO(synk): only pairs-mode / unbalanced-Sinkhorn / use_svd=False is
    # implemented; the SVD branch (compute_rigid_transform), triplet mode,
    # sinkhorn_slack_variables and the semantic/supersem costs are not.
    feats = jnp.squeeze(batch_dict["point_features"], axis=-1)  # (2B, C, NUM)
    twoB, C, NUM = feats.shape
    assert twoB % 2 == 0
    B = twoB // 2
    coords = batch_dict["point_coords"].reshape(twoB, -1, 4)
    coords1 = coords[:B, :, 1:].astype(jnp.float32)
    coords2 = coords[B:, :, 1:].astype(jnp.float32)

    eps = jnp.exp(params["epsilon"]) + 0.03
    gam = jnp.exp(params["gamma"])

    # One-time param transforms (cached at parameter-load time in practice):
    # bf16 streaming halves the weight DMA; the (NUM*9, H) -> (NUM, 9*H) view
    # is a free contiguous reshape (no transpose, no gather).
    H1 = params["b1"].shape[-1]
    w1 = params["W1"].reshape(NUM, 9 * H1).astype(jnp.bfloat16)
    w2 = params["W2"].astype(jnp.bfloat16)
    w3 = params["W3"].astype(jnp.bfloat16)

    transport, row_sum, matches, rot = uot_pallas(
        feats.astype(jnp.float32), coords1, coords2, eps, gam,
        w1, params["b1"], w2, params["b2"], w3, params["b3"], nb_iter)

    batch_dict["sinkhorn_matches"] = matches
    batch_dict["transport"] = transport
    batch_dict["conf_weights"] = row_sum
    batch_dict["out_rotation"] = rot.reshape(B, -1)
    batch_dict["out_translation"] = None
    return batch_dict


# --------------------------------------------------------------------------
# Pure-JAX reference (mirrors the PyTorch code).  The MLP weights are
# quantised bf16->f32 exactly as the kernel streams them, so the check
# isolates kernel correctness under that (intentional) quantisation.
# --------------------------------------------------------------------------
def _reference(params, point_features, point_coords, nb_iter=5):
    feats = jnp.squeeze(point_features, -1)
    twoB = feats.shape[0]
    B = twoB // 2
    f1 = jnp.transpose(feats[:B], (0, 2, 1))
    f2 = jnp.transpose(feats[B:], (0, 2, 1))
    coords = point_coords.reshape(twoB, -1, 4)
    c1 = coords[:B, :, 1:]
    c2 = coords[B:, :, 1:]
    eps = jnp.exp(params["epsilon"]) + 0.03
    gam = jnp.exp(params["gamma"])
    f1 = f1 / jnp.sqrt(jnp.sum(f1 ** 2, -1, keepdims=True) + 1e-8)
    f2 = f2 / jnp.sqrt(jnp.sum(f2 ** 2, -1, keepdims=True) + 1e-8)
    Cmat = 1.0 - jnp.einsum("bnc,bmc->bnm", f1, f2)
    K = jnp.exp(-Cmat / eps)
    power = gam / (gam + eps)
    N, M = K.shape[1], K.shape[2]
    a = jnp.full((B, N, 1), 1.0 / N)
    p1 = jnp.full((B, N, 1), 1.0 / N)
    p2 = jnp.full((B, M, 1), 1.0 / M)
    b = jnp.ones((B, M, 1))
    for _ in range(nb_iter):
        KTa = jnp.einsum("bnm,bn1->bm1", K, a)
        b = (p2 / (KTa + 1e-8)) ** power
        Kb = jnp.einsum("bnm,bm1->bn1", K, b)
        a = (p1 / (Kb + 1e-8)) ** power
    T = a * K * jnp.swapaxes(b, 1, 2)
    rs = T.sum(-1, keepdims=True)
    matches = jnp.einsum("bnm,bmk->bnk", T, c2) / (rs + 1e-8)
    flow = matches - c1
    x = jnp.concatenate((c1, matches, flow), axis=2).reshape(B, -1)
    w1 = params["W1"].astype(jnp.bfloat16).astype(jnp.float32)
    w2 = params["W2"].astype(jnp.bfloat16).astype(jnp.float32)
    w3 = params["W3"].astype(jnp.bfloat16).astype(jnp.float32)
    h = jnp.maximum(x @ w1 + params["b1"], 0.0)
    h = jnp.maximum(h @ w2 + params["b2"], 0.0)
    out = h @ w3 + params["b3"]
    return T, rs, matches, out


def _linear_init(key, fan_in, fan_out):
    kw, kb = jax.random.split(key)
    bound = 1.0 / (fan_in ** 0.5)
    w = jax.random.uniform(kw, (fan_in, fan_out), jnp.float32, -bound, bound)
    b = jax.random.uniform(kb, (1, fan_out), jnp.float32, -bound, bound)
    return w, b


if __name__ == "__main__":
    key = jax.random.PRNGKey(0)
    B, C, NUM = 2, 32, 128          # B anchor + B positive => batch of 2B
    ROT_PARAMS = 2
    NB_ITER = 5

    k_feat, k_coord, k1, k2, k3 = jax.random.split(key, 5)
    point_features = jax.random.normal(k_feat, (2 * B, C, NUM, 1), jnp.float32)
    xyz = jax.random.uniform(k_coord, (2 * B, NUM, 3), jnp.float32,
                             minval=-10.0, maxval=10.0)
    batch_idx = jnp.broadcast_to(
        jnp.arange(2 * B, dtype=jnp.float32)[:, None, None], (2 * B, NUM, 1))
    point_coords = jnp.concatenate([batch_idx, xyz], axis=-1)  # (2B, NUM, 4)

    W1, b1 = _linear_init(k1, NUM * 9, 512)
    W2, b2 = _linear_init(k2, 512, 256)
    W3, b3 = _linear_init(k3, 256, ROT_PARAMS)
    params = dict(epsilon=jnp.zeros(()), gamma=jnp.zeros(()),
                  W1=W1, b1=b1, W2=W2, b2=b2, W3=W3, b3=b3)

    batch_dict = {"point_features": point_features,
                  "point_coords": point_coords}
    out = uot_head_forward(params, dict(batch_dict), nb_iter=NB_ITER)
    jax.block_until_ready(out["out_rotation"])

    # correctness check against a pure-JAX reference
    T_ref, rs_ref, m_ref, rot_ref = _reference(params, point_features,
                                               point_coords, NB_ITER)
    assert jnp.allclose(out["transport"], T_ref, rtol=1e-4, atol=1e-5)
    assert jnp.allclose(out["conf_weights"], rs_ref, rtol=1e-4, atol=1e-5)
    assert jnp.allclose(out["sinkhorn_matches"], m_ref, rtol=1e-4, atol=1e-4)
    assert jnp.allclose(out["out_rotation"], rot_ref, rtol=1e-3, atol=1e-3)

    print("KERNEL_OK")
</pallas_src>

<mosaic_0001>
module attributes {stable_mosaic.version = 11 : i64} {
  func.func @_uot_kernel(%arg0: i32, %arg1: memref<1x1xf32, #tpu.memory_space<smem>>, %arg2: memref<1x1xf32, #tpu.memory_space<smem>>, %arg3: memref<1x32x128xf32, #tpu.memory_space<vmem>>, %arg4: memref<1x32x128xf32, #tpu.memory_space<vmem>>, %arg5: memref<1x128x3xf32, #tpu.memory_space<vmem>>, %arg6: memref<1x128x3xf32, #tpu.memory_space<vmem>>, %arg7: memref<128x4608xbf16, #tpu.memory_space<vmem>>, %arg8: memref<1x512xf32, #tpu.memory_space<vmem>>, %arg9: memref<512x256xbf16, #tpu.memory_space<vmem>>, %arg10: memref<1x256xf32, #tpu.memory_space<vmem>>, %arg11: memref<256x2xbf16, #tpu.memory_space<vmem>>, %arg12: memref<1x2xf32, #tpu.memory_space<vmem>>, %arg13: memref<1x128x128xf32, #tpu.memory_space<vmem>>, %arg14: memref<1x128x1xf32, #tpu.memory_space<vmem>>, %arg15: memref<1x128x3xf32, #tpu.memory_space<vmem>>, %arg16: memref<1x1x2xf32, #tpu.memory_space<vmem>>) attributes {dimension_semantics = [#tpu.dimension_semantics<parallel>], iteration_bounds = array<i64: 2>, scalar_prefetch = 0 : i64, scratch_operands = 0 : i64, tpu.core_type = #tpu.core_type<tc>, window_params = [{transform_indices = @transform_0, window_bounds = array<i64: 1, 1>}, {transform_indices = @transform_1, window_bounds = array<i64: 1, 1>}, {transform_indices = @transform_2, window_bounds = array<i64: 1, 32, 128>}, {transform_indices = @transform_3, window_bounds = array<i64: 1, 32, 128>}, {transform_indices = @transform_4, window_bounds = array<i64: 1, 128, 3>}, {transform_indices = @transform_5, window_bounds = array<i64: 1, 128, 3>}, {pipeline_mode = #tpu.pipeline_mode<synchronous>, transform_indices = @transform_6, window_bounds = array<i64: 128, 4608>}, {pipeline_mode = #tpu.pipeline_mode<synchronous>, transform_indices = @transform_7, window_bounds = array<i64: 1, 512>}, {pipeline_mode = #tpu.pipeline_mode<synchronous>, transform_indices = @transform_8, window_bounds = array<i64: 512, 256>}, {pipeline_mode = #tpu.pipeline_mode<synchronous>, transform_indices = @transform_9, window_bounds = array<i64: 1, 256>}, {pipeline_mode = #tpu.pipeline_mode<synchronous>, transform_indices = @transform_10, window_bounds = array<i64: 256, 2>}, {pipeline_mode = #tpu.pipeline_mode<synchronous>, transform_indices = @transform_11, window_bounds = array<i64: 1, 2>}, {transform_indices = @transform_12, window_bounds = array<i64: 1, 128, 128>}, {transform_indices = @transform_13, window_bounds = array<i64: 1, 128, 1>}, {transform_indices = @transform_14, window_bounds = array<i64: 1, 128, 3>}, {transform_indices = @transform_15, window_bounds = array<i64: 1, 1, 2>}]} {
    %c0 = arith.constant 0 : index
    %c0_0 = arith.constant 0 : index
    %0 = memref.load %arg1[%c0, %c0_0] : memref<1x1xf32, #tpu.memory_space<smem>>
    %c0_1 = arith.constant 0 : index
    %c0_2 = arith.constant 0 : index
    %1 = memref.load %arg2[%c0_1, %c0_2] : memref<1x1xf32, #tpu.memory_space<smem>>
    %2 = arith.addf %1, %0 : f32
    %3 = arith.divf %1, %2 : f32
    %cst = arith.constant -1.000000e+00 : f32
    %4 = arith.divf %cst, %0 : f32
    %c0_3 = arith.constant 0 : index
    %c0_4 = arith.constant 0 : index
    %c0_5 = arith.constant 0 : index
    %5 = vector.load %arg3[%c0_3, %c0_4, %c0_5] : memref<1x32x128xf32, #tpu.memory_space<vmem>>, vector<1x32x128xf32>
    %6 = vector.shape_cast %5 : vector<1x32x128xf32> to vector<32x128xf32>
    %c0_6 = arith.constant 0 : index
    %c0_7 = arith.constant 0 : index
    %c0_8 = arith.constant 0 : index
    %7 = vector.load %arg4[%c0_6, %c0_7, %c0_8] : memref<1x32x128xf32, #tpu.memory_space<vmem>>, vector<1x32x128xf32>
    %8 = vector.shape_cast %7 : vector<1x32x128xf32> to vector<32x128xf32>
    %9 = arith.mulf %6, %6 : vector<32x128xf32>
    %cst_9 = arith.constant dense<0.000000e+00> : vector<128xf32>
    %10 = vector.multi_reduction <add>, %9, %cst_9 [0] : vector<32x128xf32> to vector<128xf32>
    %11 = vector.shape_cast %10 : vector<128xf32> to vector<1x128xf32>
    %cst_10 = arith.constant 9.99999993E-9 : f32
    %12 = vector.broadcast %cst_10 : f32 to vector<1x128xf32>
    %13 = arith.addf %11, %12 : vector<1x128xf32>
    %14 = math.rsqrt %13 : vector<1x128xf32>
    %15 = vector.broadcast %14 : vector<1x128xf32> to vector<32x128xf32>
    %16 = arith.mulf %6, %15 : vector<32x128xf32>
    %17 = arith.mulf %8, %8 : vector<32x128xf32>
    %cst_11 = arith.constant dense<0.000000e+00> : vector<128xf32>
    %18 = vector.multi_reduction <add>, %17, %cst_11 [0] : vector<32x128xf32> to vector<128xf32>
    %19 = vector.shape_cast %18 : vector<128xf32> to vector<1x128xf32>
    %cst_12 = arith.constant 9.99999993E-9 : f32
    %20 = vector.broadcast %cst_12 : f32 to vector<1x128xf32>
    %21 = arith.addf %19, %20 : vector<1x128xf32>
    %22 = math.rsqrt %21 : vector<1x128xf32>
    %23 = vector.broadcast %22 : vector<1x128xf32> to vector<32x128xf32>
    %24 = arith.mulf %8, %23 : vector<32x128xf32>
    %cst_13 = arith.constant dense<0.000000e+00> : vector<128x128xf32>
    %25 = tpu.matmul %16, %24, %cst_13 {dimension_numbers = #tpu.dot_dimension_numbers<[0], [0], [1], [1], [0, 1, 1, 1], [], []>} : vector<32x128xf32>, vector<32x128xf32>, vector<128x128xf32> -> vector<128x128xf32>
    %cst_14 = arith.constant 1.000000e+00 : f32
    %26 = vector.broadcast %cst_14 : f32 to vector<128x128xf32>
    %27 = arith.subf %26, %25 : vector<128x128xf32>
    %28 = vector.broadcast %4 : f32 to vector<128x128xf32>
    %29 = arith.mulf %27, %28 : vector<128x128xf32>
    %30 = math.exp %29 : vector<128x128xf32>
    %cst_15 = arith.constant 7.812500e-03 : f32
    %31 = vector.broadcast %cst_15 : f32 to vector<128x1xf32>
    %cst_16 = arith.constant 1.000000e+00 : f32
    %32 = vector.broadcast %cst_16 : f32 to vector<1x128xf32>
    %c0_i32 = arith.constant 0 : i32
    %33 = vector.broadcast %31 : vector<128x1xf32> to vector<128x128xf32>
    %34 = arith.mulf %30, %33 : vector<128x128xf32>
    %cst_17 = arith.constant dense<0.000000e+00> : vector<128xf32>
    %35 = vector.multi_reduction <add>, %34, %cst_17 [0] : vector<128x128xf32> to vector<128xf32>
    %36 = vector.shape_cast %35 : vector<128xf32> to vector<1x128xf32>
    %cst_18 = arith.constant 9.99999993E-9 : f32
    %37 = vector.broadcast %cst_18 : f32 to vector<1x128xf32>
    %38 = arith.addf %36, %37 : vector<1x128xf32>
    %39 = math.log %38 : vector<1x128xf32>
    %cst_19 = arith.constant -4.85203028 : f32
    %40 = vector.broadcast %cst_19 : f32 to vector<1x128xf32>
    %41 = arith.subf %40, %39 : vector<1x128xf32>
    %42 = vector.broadcast %3 : f32 to vector<1x128xf32>
    %43 = arith.mulf %42, %41 : vector<1x128xf32>
    %44 = math.exp %43 : vector<1x128xf32>
    %45 = vector.broadcast %44 : vector<1x128xf32> to vector<128x128xf32>
    %46 = arith.mulf %30, %45 : vector<128x128xf32>
    %cst_20 = arith.constant dense<0.000000e+00> : vector<128xf32>
    %47 = vector.multi_reduction <add>, %46, %cst_20 [1] : vector<128x128xf32> to vector<128xf32>
    %48 = vector.shape_cast %47 : vector<128xf32> to vector<128x1xf32>
    %cst_21 = arith.constant 9.99999993E-9 : f32
    %49 = vector.broadcast %cst_21 : f32 to vector<128x1xf32>
    %50 = arith.addf %48, %49 : vector<128x1xf32>
    %51 = math.log %50 : vector<128x1xf32>
    %cst_22 = arith.constant -4.85203028 : f32
    %52 = vector.broadcast %cst_22 : f32 to vector<128x1xf32>
    %53 = arith.subf %52, %51 : vector<128x1xf32>
    %54 = vector.broadcast %3 : f32 to vector<128x1xf32>
    %55 = arith.mulf %54, %53 : vector<128x1xf32>
    %56 = math.exp %55 : vector<128x1xf32>
    %c1_i32 = arith.constant 1 : i32
    %57 = vector.broadcast %56 : vector<128x1xf32> to vector<128x128xf32>
    %58 = arith.mulf %30, %57 : vector<128x128xf32>
    %cst_23 = arith.constant dense<0.000000e+00> : vector<128xf32>
    %59 = vector.multi_reduction <add>, %58, %cst_23 [0] : vector<128x128xf32> to vector<128xf32>
    %60 = vector.shape_cast %59 : vector<128xf32> to vector<1x128xf32>
    %cst_24 = arith.constant 9.99999993E-9 : f32
    %61 = vector.broadcast %cst_24 : f32 to vector<1x128xf32>
    %62 = arith.addf %60, %61 : vector<1x128xf32>
    %63 = math.log %62 : vector<1x128xf32>
    %cst_25 = arith.constant -4.85203028 : f32
    %64 = vector.broadcast %cst_25 : f32 to vector<1x128xf32>
    %65 = arith.subf %64, %63 : vector<1x128xf32>
    %66 = vector.broadcast %3 : f32 to vector<1x128xf32>
    %67 = arith.mulf %66, %65 : vector<1x128xf32>
    %68 = math.exp %67 : vector<1x128xf32>
    %69 = vector.broadcast %68 : vector<1x128xf32> to vector<128x128xf32>
    %70 = arith.mulf %30, %69 : vector<128x128xf32>
    %cst_26 = arith.constant dense<0.000000e+00> : vector<128xf32>
    %71 = vector.multi_reduction <add>, %70, %cst_26 [1] : vector<128x128xf32> to vector<128xf32>
    %72 = vector.shape_cast %71 : vector<128xf32> to vector<128x1xf32>
    %cst_27 = arith.constant 9.99999993E-9 : f32
    %73 = vector.broadcast %cst_27 : f32 to vector<128x1xf32>
    %74 = arith.addf %72, %73 : vector<128x1xf32>
    %75 = math.log %74 : vector<128x1xf32>
    %cst_28 = arith.constant -4.85203028 : f32
    %76 = vector.broadcast %cst_28 : f32 to vector<128x1xf32>
    %77 = arith.subf %76, %75 : vector<128x1xf32>
    %78 = vector.broadcast %3 : f32 to vector<128x1xf32>
    %79 = arith.mulf %78, %77 : vector<128x1xf32>
    %80 = math.exp %79 : vector<128x1xf32>
    %c2_i32 = arith.constant 2 : i32
    %81 = vector.broadcast %80 : vector<128x1xf32> to vector<128x128xf32>
    %82 = arith.mulf %30, %81 : vector<128x128xf32>
    %cst_29 = arith.constant dense<0.000000e+00> : vector<128xf32>
    %83 = vector.multi_reduction <add>, %82, %cst_29 [0] : vector<128x128xf32> to vector<128xf32>
    %84 = vector.shape_cast %83 : vector<128xf32> to vector<1x128xf32>
    %cst_30 = arith.constant 9.99999993E-9 : f32
    %85 = vector.broadcast %cst_30 : f32 to vector<1x128xf32>
    %86 = arith.addf %84, %85 : vector<1x128xf32>
    %87 = math.log %86 : vector<1x128xf32>
    %cst_31 = arith.constant -4.85203028 : f32
    %88 = vector.broadcast %cst_31 : f32 to vector<1x128xf32>
    %89 = arith.subf %88, %87 : vector<1x128xf32>
    %90 = vector.broadcast %3 : f32 to vector<1x128xf32>
    %91 = arith.mulf %90, %89 : vector<1x128xf32>
    %92 = math.exp %91 : vector<1x128xf32>
    %93 = vector.broadcast %92 : vector<1x128xf32> to vector<128x128xf32>
    %94 = arith.mulf %30, %93 : vector<128x128xf32>
    %cst_32 = arith.constant dense<0.000000e+00> : vector<128xf32>
    %95 = vector.multi_reduction <add>, %94, %cst_32 [1] : vector<128x128xf32> to vector<128xf32>
    %96 = vector.shape_cast %95 : vector<128xf32> to vector<128x1xf32>
    %cst_33 = arith.constant 9.99999993E-9 : f32
    %97 = vector.broadcast %cst_33 : f32 to vector<128x1xf32>
    %98 = arith.addf %96, %97 : vector<128x1xf32>
    %99 = math.log %98 : vector<128x1xf32>
    %cst_34 = arith.constant -4.85203028 : f32
    %100 = vector.broadcast %cst_34 : f32 to vector<128x1xf32>
    %101 = arith.subf %100, %99 : vector<128x1xf32>
    %102 = vector.broadcast %3 : f32 to vector<128x1xf32>
    %103 = arith.mulf %102, %101 : vector<128x1xf32>
    %104 = math.exp %103 : vector<128x1xf32>
    %c3_i32 = arith.constant 3 : i32
    %105 = vector.broadcast %104 : vector<128x1xf32> to vector<128x128xf32>
    %106 = arith.mulf %30, %105 : vector<128x128xf32>
    %cst_35 = arith.constant dense<0.000000e+00> : vector<128xf32>
    %107 = vector.multi_reduction <add>, %106, %cst_35 [0] : vector<128x128xf32> to vector<128xf32>
    %108 = vector.shape_cast %107 : vector<128xf32> to vector<1x128xf32>
    %cst_36 = arith.constant 9.99999993E-9 : f32
    %109 = vector.broadcast %cst_36 : f32 to vector<1x128xf32>
    %110 = arith.addf %108, %109 : vector<1x128xf32>
    %111 = math.log %110 : vector<1x128xf32>
    %cst_37 = arith.constant -4.85203028 : f32
    %112 = vector.broadcast %cst_37 : f32 to vector<1x128xf32>
    %113 = arith.subf %112, %111 : vector<1x128xf32>
    %114 = vector.broadcast %3 : f32 to vector<1x128xf32>
    %115 = arith.mulf %114, %113 : vector<1x128xf32>
    %116 = math.exp %115 : vector<1x128xf32>
    %117 = vector.broadcast %116 : vector<1x128xf32> to vector<128x128xf32>
    %118 = arith.mulf %30, %117 : vector<128x128xf32>
    %cst_38 = arith.constant dense<0.000000e+00> : vector<128xf32>
    %119 = vector.multi_reduction <add>, %118, %cst_38 [1] : vector<128x128xf32> to vector<128xf32>
    %120 = vector.shape_cast %119 : vector<128xf32> to vector<128x1xf32>
    %cst_39 = arith.constant 9.99999993E-9 : f32
    %121 = vector.broadcast %cst_39 : f32 to vector<128x1xf32>
    %122 = arith.addf %120, %121 : vector<128x1xf32>
    %123 = math.log %122 : vector<128x1xf32>
    %cst_40 = arith.constant -4.85203028 : f32
    %124 = vector.broadcast %cst_40 : f32 to vector<128x1xf32>
    %125 = arith.subf %124, %123 : vector<128x1xf32>
    %126 = vector.broadcast %3 : f32 to vector<128x1xf32>
    %127 = arith.mulf %126, %125 : vector<128x1xf32>
    %128 = math.exp %127 : vector<128x1xf32>
    %c4_i32 = arith.constant 4 : i32
    %129 = vector.broadcast %128 : vector<128x1xf32> to vector<128x128xf32>
    %130 = arith.mulf %30, %129 : vector<128x128xf32>
    %cst_41 = arith.constant dense<0.000000e+00> : vector<128xf32>
    %131 = vector.multi_reduction <add>, %130, %cst_41 [0] : vector<128x128xf32> to vector<128xf32>
    %132 = vector.shape_cast %131 : vector<128xf32> to vector<1x128xf32>
    %cst_42 = arith.constant 9.99999993E-9 : f32
    %133 = vector.broadcast %cst_42 : f32 to vector<1x128xf32>
    %134 = arith.addf %132, %133 : vector<1x128xf32>
    %135 = math.log %134 : vector<1x128xf32>
    %cst_43 = arith.constant -4.85203028 : f32
    %136 = vector.broadcast %cst_43 : f32 to vector<1x128xf32>
    %137 = arith.subf %136, %135 : vector<1x128xf32>
    %138 = vector.broadcast %3 : f32 to vector<1x128xf32>
    %139 = arith.mulf %138, %137 : vector<1x128xf32>
    %140 = math.exp %139 : vector<1x128xf32>
    %141 = vector.broadcast %140 : vector<1x128xf32> to vector<128x128xf32>
    %142 = arith.mulf %30, %141 : vector<128x128xf32>
    %cst_44 = arith.constant dense<0.000000e+00> : vector<128xf32>
    %143 = vector.multi_reduction <add>, %142, %cst_44 [1] : vector<128x128xf32> to vector<128xf32>
    %144 = vector.shape_cast %143 : vector<128xf32> to vector<128x1xf32>
    %cst_45 = arith.constant 9.99999993E-9 : f32
    %145 = vector.broadcast %cst_45 : f32 to vector<128x1xf32>
    %146 = arith.addf %144, %145 : vector<128x1xf32>
    %147 = math.log %146 : vector<128x1xf32>
    %cst_46 = arith.constant -4.85203028 : f32
    %148 = vector.broadcast %cst_46 : f32 to vector<128x1xf32>
    %149 = arith.subf %148, %147 : vector<128x1xf32>
    %150 = vector.broadcast %3 : f32 to vector<128x1xf32>
    %151 = arith.mulf %150, %149 : vector<128x1xf32>
    %152 = math.exp %151 : vector<128x1xf32>
    %153 = vector.broadcast %152 : vector<128x1xf32> to vector<128x128xf32>
    %154 = arith.mulf %153, %30 : vector<128x128xf32>
    %155 = vector.broadcast %140 : vector<1x128xf32> to vector<128x128xf32>
    %156 = arith.mulf %154, %155 : vector<128x128xf32>
    %cst_47 = arith.constant dense<0.000000e+00> : vector<128xf32>
    %157 = vector.multi_reduction <add>, %156, %cst_47 [1] : vector<128x128xf32> to vector<128xf32>
    %158 = vector.shape_cast %157 : vector<128xf32> to vector<128x1xf32>
    %c0_48 = arith.constant 0 : index
    %c0_49 = arith.constant 0 : index
    %c0_50 = arith.constant 0 : index
    %159 = vector.load %arg5[%c0_48, %c0_49, %c0_50] : memref<1x128x3xf32, #tpu.memory_space<vmem>>, vector<1x128x3xf32>
    %160 = vector.shape_cast %159 : vector<1x128x3xf32> to vector<128x3xf32>
    %c0_51 = arith.constant 0 : index
    %c0_52 = arith.constant 0 : index
    %c0_53 = arith.constant 0 : index
    %161 = vector.load %arg6[%c0_51, %c0_52, %c0_53] : memref<1x128x3xf32, #tpu.memory_space<vmem>>, vector<1x128x3xf32>
    %162 = vector.shape_cast %161 : vector<1x128x3xf32> to vector<128x3xf32>
    %cst_54 = arith.constant dense<0.000000e+00> : vector<128x3xf32>
    %163 = tpu.matmul %156, %162, %cst_54 {dimension_numbers = #tpu.dot_dimension_numbers<[1], [0], [0], [1], [0, 0, 1, 1], [], []>} : vector<128x128xf32>, vector<128x3xf32>, vector<128x3xf32> -> vector<128x3xf32>
    %cst_55 = arith.constant 9.99999993E-9 : f32
    %164 = vector.broadcast %cst_55 : f32 to vector<128x1xf32>
    %165 = arith.addf %158, %164 : vector<128x1xf32>
    %166 = vector.broadcast %165 : vector<128x1xf32> to vector<128x3xf32>
    %167 = arith.divf %163, %166 : vector<128x3xf32>
    %168 = arith.subf %167, %160 : vector<128x3xf32>
    %c0_56 = arith.constant 0 : index
    %c0_57 = arith.constant 0 : index
    %c0_58 = arith.constant 0 : index
    %169 = vector.load %arg13[%c0_56, %c0_57, %c0_58] : memref<1x128x128xf32, #tpu.memory_space<vmem>>, vector<1x128x128xf32>
    %170 = vector.shape_cast %169 : vector<1x128x128xf32> to vector<128x128xf32>
    %171 = vector.shape_cast %156 : vector<128x128xf32> to vector<1x128x128xf32>
    tpu.vector_store %arg13[%c0_56, %c0_57, %c0_58], %171 {strides = array<i32>} : memref<1x128x128xf32, #tpu.memory_space<vmem>>, vector<1x128x128xf32>,
    %c0_59 = arith.constant 0 : index
    %c0_60 = arith.constant 0 : index
    %c0_61 = arith.constant 0 : index
    %172 = vector.load %arg14[%c0_59, %c0_60, %c0_61] : memref<1x128x1xf32, #tpu.memory_space<vmem>>, vector<1x128x1xf32>
    %173 = vector.shape_cast %172 : vector<1x128x1xf32> to vector<128x1xf32>
    %174 = vector.shape_cast %158 : vector<128x1xf32> to vector<1x128x1xf32>
    tpu.vector_store %arg14[%c0_59, %c0_60, %c0_61], %174 {strides = array<i32>} : memref<1x128x1xf32, #tpu.memory_space<vmem>>, vector<1x128x1xf32>,
    %c0_62 = arith.constant 0 : index
    %c0_63 = arith.constant 0 : index
    %c0_64 = arith.constant 0 : index
    %175 = vector.load %arg15[%c0_62, %c0_63, %c0_64] : memref<1x128x3xf32, #tpu.memory_space<vmem>>, vector<1x128x3xf32>
    %176 = vector.shape_cast %175 : vector<1x128x3xf32> to vector<128x3xf32>
    %177 = vector.shape_cast %167 : vector<128x3xf32> to vector<1x128x3xf32>
    tpu.vector_store %arg15[%c0_62, %c0_63, %c0_64], %177 {strides = array<i32>} : memref<1x128x3xf32, #tpu.memory_space<vmem>>, vector<1x128x3xf32>,
    %c0_65 = arith.constant 0 : index
    %c0_66 = arith.constant 0 : index
    %178 = vector.load %arg7[%c0_65, %c0_66] : memref<128x4608xbf16, #tpu.memory_space<vmem>>, vector<128x4608xbf16>
    %179 = arith.extf %178 : vector<128x4608xbf16> to vector<128x4608xf32>
    %cst_67 = arith.constant dense<0.000000e+00> : vector<3x4608xf32>
    %180 = tpu.matmul %160, %179, %cst_67 {dimension_numbers = #tpu.dot_dimension_numbers<[0], [0], [1], [1], [0, 1, 1, 1], [], []>} : vector<128x3xf32>, vector<128x4608xf32>, vector<3x4608xf32> -> vector<3x4608xf32>
    %cst_68 = arith.constant dense<0.000000e+00> : vector<3x4608xf32>
    %181 = tpu.matmul %167, %179, %cst_68 {dimension_numbers = #tpu.dot_dimension_numbers<[0], [0], [1], [1], [0, 1, 1, 1], [], []>} : vector<128x3xf32>, vector<128x4608xf32>, vector<3x4608xf32> -> vector<3x4608xf32>
    %cst_69 = arith.constant dense<0.000000e+00> : vector<3x4608xf32>
    %182 = tpu.matmul %168, %179, %cst_69 {dimension_numbers = #tpu.dot_dimension_numbers<[0], [0], [1], [1], [0, 1, 1, 1], [], []>} : vector<128x3xf32>, vector<128x4608xf32>, vector<3x4608xf32> -> vector<3x4608xf32>
    %c0_70 = arith.constant 0 : index
    %c0_71 = arith.constant 0 : index
    %183 = vector.load %arg8[%c0_70, %c0_71] : memref<1x512xf32, #tpu.memory_space<vmem>>, vector<1x512xf32>
    %184 = vector.extract_strided_slice %180 {offsets = [0, 0], sizes = [1, 512], strides = [1, 1]} : vector<3x4608xf32> to vector<1x512xf32>
    %185 = arith.addf %183, %184 : vector<1x512xf32>
    %186 = vector.extract_strided_slice %181 {offsets = [0, 1536], sizes = [1, 512], strides = [1, 1]} : vector<3x4608xf32> to vector<1x512xf32>
    %187 = arith.addf %185, %186 : vector<1x512xf32>
    %188 = vector.extract_strided_slice %182 {offsets = [0, 3072], sizes = [1, 512], strides = [1, 1]} : vector<3x4608xf32> to vector<1x512xf32>
    %189 = arith.addf %187, %188 : vector<1x512xf32>
    %190 = vector.extract_strided_slice %180 {offsets = [1, 512], sizes = [1, 512], strides = [1, 1]} : vector<3x4608xf32> to vector<1x512xf32>
    %191 = arith.addf %189, %190 : vector<1x512xf32>
    %192 = vector.extract_strided_slice %181 {offsets = [1, 2048], sizes = [1, 512], strides = [1, 1]} : vector<3x4608xf32> to vector<1x512xf32>
    %193 = arith.addf %191, %192 : vector<1x512xf32>
    %194 = vector.extract_strided_slice %182 {offsets = [1, 3584], sizes = [1, 512], strides = [1, 1]} : vector<3x4608xf32> to vector<1x512xf32>
    %195 = arith.addf %193, %194 : vector<1x512xf32>
    %196 = vector.extract_strided_slice %180 {offsets = [2, 1024], sizes = [1, 512], strides = [1, 1]} : vector<3x4608xf32> to vector<1x512xf32>
    %197 = arith.addf %195, %196 : vector<1x512xf32>
    %198 = vector.extract_strided_slice %181 {offsets = [2, 2560], sizes = [1, 512], strides = [1, 1]} : vector<3x4608xf32> to vector<1x512xf32>
    %199 = arith.addf %197, %198 : vector<1x512xf32>
    %200 = vector.extract_strided_slice %182 {offsets = [2, 4096], sizes = [1, 512], strides = [1, 1]} : vector<3x4608xf32> to vector<1x512xf32>
    %201 = arith.addf %199, %200 : vector<1x512xf32>
    %cst_72 = arith.constant 0.000000e+00 : f32
    %202 = vector.broadcast %cst_72 : f32 to vector<1x512xf32>
    %203 = arith.maximumf %201, %202 : vector<1x512xf32>
    %c0_73 = arith.constant 0 : index
    %c0_74 = arith.constant 0 : index
    %204 = vector.load %arg9[%c0_73, %c0_74] : memref<512x256xbf16, #tpu.memory_space<vmem>>, vector<512x256xbf16>
    %205 = arith.extf %204 : vector<512x256xbf16> to vector<512x256xf32>
    %cst_75 = arith.constant dense<0.000000e+00> : vector<1x256xf32>
    %206 = tpu.matmul %203, %205, %cst_75 {dimension_numbers = #tpu.dot_dimension_numbers<[1], [0], [0], [1], [0, 0, 1, 1], [], []>} : vector<1x512xf32>, vector<512x256xf32>, vector<1x256xf32> -> vector<1x256xf32>
    %c0_76 = arith.constant 0 : index
    %c0_77 = arith.constant 0 : index
    %207 = vector.load %arg10[%c0_76, %c0_77] : memref<1x256xf32, #tpu.memory_space<vmem>>, vector<1x256xf32>
    %208 = arith.addf %206, %207 : vector<1x256xf32>
    %cst_78 = arith.constant 0.000000e+00 : f32
    %209 = vector.broadcast %cst_78 : f32 to vector<1x256xf32>
    %210 = arith.maximumf %208, %209 : vector<1x256xf32>
    %c0_79 = arith.constant 0 : index
    %c0_80 = arith.constant 0 : index
    %211 = vector.load %arg11[%c0_79, %c0_80] : memref<256x2xbf16, #tpu.memory_space<vmem>>, vector<256x2xbf16>
    %212 = arith.extf %211 : vector<256x2xbf16> to vector<256x2xf32>
    %cst_81 = arith.constant dense<0.000000e+00> : vector<1x2xf32>
    %213 = tpu.matmul %210, %212, %cst_81 {dimension_numbers = #tpu.dot_dimension_numbers<[1], [0], [0], [1], [0, 0, 1, 1], [], []>} : vector<1x256xf32>, vector<256x2xf32>, vector<1x2xf32> -> vector<1x2xf32>
    %c0_82 = arith.constant 0 : index
    %c0_83 = arith.constant 0 : index
    %214 = vector.load %arg12[%c0_82, %c0_83] : memref<1x2xf32, #tpu.memory_space<vmem>>, vector<1x2xf32>
    %215 = arith.addf %213, %214 : vector<1x2xf32>
    %c0_84 = arith.constant 0 : index
    %c0_85 = arith.constant 0 : index
    %c0_86 = arith.constant 0 : index
    %216 = vector.load %arg16[%c0_84, %c0_85, %c0_86] : memref<1x1x2xf32, #tpu.memory_space<vmem>>, vector<1x1x2xf32>
    %217 = vector.shape_cast %216 : vector<1x1x2xf32> to vector<1x2xf32>
    %218 = vector.shape_cast %215 : vector<1x2xf32> to vector<1x1x2xf32>
    tpu.vector_store %arg16[%c0_84, %c0_85, %c0_86], %218 {strides = array<i32>} : memref<1x1x2xf32, #tpu.memory_space<vmem>>, vector<1x1x2xf32>,
    return
  }
  func.func @transform_0(%arg0: i32) -> (i32, i32) {
    %c0_i32 = arith.constant 0 : i32
    %c0_i32_0 = arith.constant 0 : i32
    %c0_i32_1 = arith.constant 0 : i32
    return %c0_i32, %c0_i32_0 : i32, i32
  }
  func.func @transform_1(%arg0: i32) -> (i32, i32) {
    %c0_i32 = arith.constant 0 : i32
    %c0_i32_0 = arith.constant 0 : i32
    %c0_i32_1 = arith.constant 0 : i32
    return %c0_i32, %c0_i32_0 : i32, i32
  }
  func.func @transform_2(%arg0: i32) -> (i32, i32, i32) {
    %c0_i32 = arith.constant 0 : i32
    %c0_i32_0 = arith.constant 0 : i32
    %c0_i32_1 = arith.constant 0 : i32
    return %arg0, %c0_i32, %c0_i32_0 : i32, i32, i32
  }
  func.func @transform_3(%arg0: i32) -> (i32, i32, i32) {
    %c2_i32 = arith.constant 2 : i32
    %0 = arith.addi %arg0, %c2_i32 : i32
    %c0_i32 = arith.constant 0 : i32
    %c0_i32_0 = arith.constant 0 : i32
    %c0_i32_1 = arith.constant 0 : i32
    return %0, %c0_i32, %c0_i32_0 : i32, i32, i32
  }
  func.func @transform_4(%arg0: i32) -> (i32, i32, i32) {
    %c0_i32 = arith.constant 0 : i32
    %c0_i32_0 = arith.constant 0 : i32
    %c0_i32_1 = arith.constant 0 : i32
    return %arg0, %c0_i32, %c0_i32_0 : i32, i32, i32
  }
  func.func @transform_5(%arg0: i32) -> (i32, i32, i32) {
    %c0_i32 = arith.constant 0 : i32
    %c0_i32_0 = arith.constant 0 : i32
    %c0_i32_1 = arith.constant 0 : i32
    return %arg0, %c0_i32, %c0_i32_0 : i32, i32, i32
  }
  func.func @transform_6(%arg0: i32) -> (i32, i32) {
    %c0_i32 = arith.constant 0 : i32
    %c0_i32_0 = arith.constant 0 : i32
    %c0_i32_1 = arith.constant 0 : i32
    return %c0_i32, %c0_i32_0 : i32, i32
  }
  func.func @transform_7(%arg0: i32) -> (i32, i32) {
    %c0_i32 = arith.constant 0 : i32
    %c0_i32_0 = arith.constant 0 : i32
    %c0_i32_1 = arith.constant 0 : i32
    return %c0_i32, %c0_i32_0 : i32, i32
  }
  func.func @transform_8(%arg0: i32) -> (i32, i32) {
    %c0_i32 = arith.constant 0 : i32
    %c0_i32_0 = arith.constant 0 : i32
    %c0_i32_1 = arith.constant 0 : i32
    return %c0_i32, %c0_i32_0 : i32, i32
  }
  func.func @transform_9(%arg0: i32) -> (i32, i32) {
    %c0_i32 = arith.constant 0 : i32
    %c0_i32_0 = arith.constant 0 : i32
    %c0_i32_1 = arith.constant 0 : i32
    return %c0_i32, %c0_i32_0 : i32, i32
  }
  func.func @transform_10(%arg0: i32) -> (i32, i32) {
    %c0_i32 = arith.constant 0 : i32
    %c0_i32_0 = arith.constant 0 : i32
    %c0_i32_1 = arith.constant 0 : i32
    return %c0_i32, %c0_i32_0 : i32, i32
  }
  func.func @transform_11(%arg0: i32) -> (i32, i32) {
    %c0_i32 = arith.constant 0 : i32
    %c0_i32_0 = arith.constant 0 : i32
    %c0_i32_1 = arith.constant 0 : i32
    return %c0_i32, %c0_i32_0 : i32, i32
  }
  func.func @transform_12(%arg0: i32) -> (i32, i32, i32) {
    %c0_i32 = arith.constant 0 : i32
    %c0_i32_0 = arith.constant 0 : i32
    %c0_i32_1 = arith.constant 0 : i32
    return %arg0, %c0_i32, %c0_i32_0 : i32, i32, i32
  }
  func.func @transform_13(%arg0: i32) -> (i32, i32, i32) {
    %c0_i32 = arith.constant 0 : i32
    %c0_i32_0 = arith.constant 0 : i32
    %c0_i32_1 = arith.constant 0 : i32
    return %arg0, %c0_i32, %c0_i32_0 : i32, i32, i32
  }
  func.func @transform_14(%arg0: i32) -> (i32, i32, i32) {
    %c0_i32 = arith.constant 0 : i32
    %c0_i32_0 = arith.constant 0 : i32
    %c0_i32_1 = arith.constant 0 : i32
    return %arg0, %c0_i32, %c0_i32_0 : i32, i32, i32
  }
  func.func @transform_15(%arg0: i32) -> (i32, i32, i32) {
    %c0_i32 = arith.constant 0 : i32
    %c0_i32_0 = arith.constant 0 : i32
    %c0_i32_1 = arith.constant 0 : i32
    return %arg0, %c0_i32, %c0_i32_0 : i32, i32, i32
  }
}

</mosaic_0001>

<llo_original>
// kernel: tpu_custom_call.1
$region0: #{tpu_custom_call.1}
  #allocation0 [shape = 'u32[]', space=smem, size = 0x4, offset = 0x4, fixed_abs, tag = 'smem constant byte address 0x4 - core index']
  #allocation1 [shape = 'u32[144,128]{1,0:T(1,128)}', space=vmem, size = 0x12000, scoped, tag = 'internal scratch']
  #allocation2 [shape = 'f32[1,1]{1,0:T(1,128)S(6)}', space=smem, size = 0x200, scoped, tag = 'scoped memory for tpu_custom_call.1']
  #allocation3 [shape = 'f32[1,1]{1,0:T(1,128)S(6)}', space=smem, size = 0x200, scoped, tag = 'scoped memory for tpu_custom_call.1']
  %s0 = inlined_call_operand.<no memory space> [shape: f32[1,1], index: 0, kind: input, shape index: {}]
  %s1 = inlined_call_operand.<no memory space> [shape: f32[1,1], index: 1, kind: input, shape index: {}]
  %s2 = inlined_call_operand.hbm [shape: f32[4,32,128], index: 2, kind: input, shape index: {}]
  %s3 = inlined_call_operand.hbm [shape: f32[4,32,128], index: 3, kind: input, shape index: {}]
  %s4 = inlined_call_operand.vmem [shape: f32[2,128,3], index: 4, kind: input, shape index: {}]
  %s5 = inlined_call_operand.vmem [shape: f32[2,128,3], index: 5, kind: input, shape index: {}]
  %s6 = inlined_call_operand.hbm [shape: bf16[128,4608], index: 6, kind: input, shape index: {}]
  %s7 = inlined_call_operand.hbm [shape: f32[1,512], index: 7, kind: input, shape index: {}]
  %s8 = inlined_call_operand.hbm [shape: bf16[512,256], index: 8, kind: input, shape index: {}]
  %s9 = inlined_call_operand.hbm [shape: f32[1,256], index: 9, kind: input, shape index: {}]
  %s10 = inlined_call_operand.vmem [shape: bf16[256,2], index: 10, kind: input, shape index: {}]
  %s11 = inlined_call_operand.hbm [shape: f32[1,2], index: 11, kind: input, shape index: {}]
  %s12 = inlined_call_operand.hbm [shape: f32[2,128,128], index: 12, kind: output, shape index: {0}]
  %s13 = inlined_call_operand.vmem [shape: f32[2,128,1], index: 13, kind: output, shape index: {1}]
  %s14 = inlined_call_operand.vmem [shape: f32[2,128,3], index: 14, kind: output, shape index: {2}]
  %s15 = inlined_call_operand.hbm [shape: f32[2,1,2], index: 15, kind: output, shape index: {3}]
  %16 = xla_tuple %s12, %s13, %s14, %s15
  %s17 = sld [smem:[#allocation0]]
  $region133: #{tpu_custom_call.1} parent=0
    _
  %s19 = ssub.s32 1, %s17
  %s20 = scalar_select 0, %s19, %s17
  %21 = sst [smem:[#allocation2]] %s0
  %22 = sst [smem:[#allocation3]] %s1
  $region1: #{tpu_custom_call.1} parent=0
    #allocation4 [shape = 'u8[32768]{0}', space=vmem, size = 0x8000, scoped, tag = 'input window, operand 2']
    #allocation5 [shape = 's32[2]{0}', space=sflag, size = 0x8, scoped, tag = 'scoped memory for tpu_custom_call.1']
    #allocation6 [shape = 's32[2]{0}', space=sflag, size = 0x8, scoped, tag = 'scoped memory for tpu_custom_call.1']
    #allocation7 [shape = 'u8[32768]{0}', space=vmem, size = 0x8000, scoped, tag = 'input window, operand 3']
    #allocation8 [shape = 's32[2]{0}', space=sflag, size = 0x8, scoped, tag = 'scoped memory for tpu_custom_call.1']
    #allocation9 [shape = 'u8[1179648]{0}', space=vmem, size = 0x120000, scoped, tag = 'input window, operand 6, single buffered']
    #allocation10 [shape = 'u8[2048]{0}', space=vmem, size = 0x800, scoped, tag = 'input window, operand 7, single buffered']
    #allocation11 [shape = 's32[1]{0}', space=sflag, size = 0x4, scoped, tag = 'scoped memory for tpu_custom_call.1']
    #allocation12 [shape = 'u8[262144]{0}', space=vmem, size = 0x40000, scoped, tag = 'input window, operand 8, single buffered']
    #allocation13 [shape = 'u8[1024]{0}', space=vmem, size = 0x400, scoped, tag = 'input window, operand 9, single buffered']
    #allocation14 [shape = 's32[1]{0}', space=sflag, size = 0x4, scoped, tag = 'scoped memory for tpu_custom_call.1']
    #allocation15 [shape = 'u8[512]{0}', space=vmem, size = 0x400, scoped, tag = 'input window, operand 11, single buffered']
    #allocation16 [shape = 'u8[131072]{0}', space=vmem, size = 0x20000, scoped, tag = 'output window, operand 0']
    #allocation17 [shape = 'u8[1024]{0}', space=vmem, size = 0x400, scoped, tag = 'output window, operand 3']
    #allocation18 [shape = 's32[2]{0}', space=sflag, size = 0x8, scoped, tag = 'scoped memory for tpu_custom_call.1']
    %23 = vsyncpa [#allocation5], 0
    %s24 = scalar_lea.sflag [#allocation5], 1
    %25 = vsyncpa %s24, 0
    %26 = vsyncpa [#allocation8], 0
    %s27 = scalar_lea.sflag [#allocation8], 1
    %28 = vsyncpa %s27, 0
    %29 = vsyncpa [#allocation11], 0
    %30 = vsyncpa [#allocation14], 0
    %31 = vsyncpa [#allocation6], 0
    %s32 = scalar_lea.sflag [#allocation6], 1
    %33 = vsyncpa %s32, 0
    %34 = vsyncpa [#allocation18], 0
    %s35 = scalar_lea.sflag [#allocation18], 1
    %36 = vsyncpa %s35, 0
    loop: start=0, step=1, limit=4
    $region2: #{tpu_custom_call.1} parent=1 // loop_pre_header
      _
    $region3: #{tpu_custom_call.1} parent=1 // loop_header
      %s38 = sphi 0, %s42
      %p39 = scmp.ge.s32.totalorder %s38, 4
      %s46 = sphi 0, %s46
      %s48 = sphi 0, %s46
      %s49 = sphi 0, %s48
      %s63 = sphi 0, %s49
      %s67 = sphi 0, %s67
      %s69 = sphi 0, %s67
      %s70 = sphi 0, %s69
      %s84 = sphi 0, %s70
      %s90 = sphi 0, %s92
      %s93 = sphi 0, %s90
      %s94 = sphi 0, %s93
      %s110 = sphi 0, %s94
      %s118 = sphi 0, %s120
      %s121 = sphi 0, %s118
      %s122 = sphi 0, %s121
      %s138 = sphi 0, %s122
      %s144 = sphi 0, %s146
      %s147 = sphi 0, %s144
      %s148 = sphi 0, %s147
      %s164 = sphi 0, %s148
      %s170 = sphi 0, %s172
      %s173 = sphi 0, %s170
      %s174 = sphi 0, %s173
      %s190 = sphi 0, %s174
      %s194 = sphi 0, %s194
      %s196 = sphi 0, %s194
      %s197 = sphi 0, %s196
      %s211 = sphi 0, %s197
      %s215 = sphi 0, %s215
      %s217 = sphi 0, %s215
      %s218 = sphi 0, %s217
      %s232 = sphi 0, %s218
      %s236 = sphi 0, %s236
      %s238 = sphi 0, %s236
      %s239 = sphi 0, %s238
      %s253 = sphi 0, %s239
      %s257 = sphi 0, %s257
      %s259 = sphi 0, %s257
      %s260 = sphi 0, %s259
      %s274 = sphi 0, %s260
      %s278 = sphi 0, %s278
      %s280 = sphi 0, %s278
      %s281 = sphi 0, %s280
      %s295 = sphi 0, %s281
      %s299 = sphi 0, %s299
      %s301 = sphi 0, %s299
      %s302 = sphi 0, %s301
      %s316 = sphi 0, %s302
      %s322 = sphi 0, %s324
      %s325 = sphi 0, %s322
      %s326 = sphi 0, %s325
      %s342 = sphi 0, %s326
      %s348 = sphi 0, %s350
      %s351 = sphi 0, %s348
      %s352 = sphi 0, %s351
      %s368 = sphi 0, %s352
      %s374 = sphi 0, %s376
      %s377 = sphi 0, %s374
      %s378 = sphi 0, %s377
      %s394 = sphi 0, %s378
      %s400 = sphi 0, %s402
      %s403 = sphi 0, %s400
      %s404 = sphi 0, %s403
      %s420 = sphi 0, %s404
    $region4: #{tpu_custom_call.1} parent=1 // loop_header_branch
      %41 = sbr.rel (%p39) target = $region8
    $region5: #{tpu_custom_call.1} parent=1 // loop_body
      %s43 = ssub.s32 %s38, 1
      %s44 = ssub.s32 %s38, 2
      %s45 = sadd.s32 %s38, 1
      %s47 = sadd.s32 %s46, 1
      %p50 = scmp.eq.s32.totalorder %s38, 1
      %p51 = scmp.ne.s32.totalorder %s46, %s48
      %p52 = scmp.eq.s32.totalorder %s38, 0
      %p53 = por %p51, %p52
      %p54 = scmp.ne.s32.totalorder %s46, %s48
      %p55 = scmp.eq.s32.totalorder %s43, 1
      %p56 = por %p54, %p55
      %p57 = scmp.ne.s32.totalorder %s48, %s49
      %p58 = scmp.eq.s32.totalorder %s43, 0
      %p59 = por %p57, %p58
      %p60 = scmp.ne.s32.totalorder %s48, %s49
      %p61 = scmp.eq.s32.totalorder %s44, 1
      %p62 = por %p60, %p61
      %p64 = scmp.ne.s32.totalorder %s49, %s63
      %p65 = scmp.eq.s32.totalorder %s44, 0
      %p66 = por %p64, %p65
      %s68 = sadd.s32 %s67, 1
      %p71 = scmp.eq.s32.totalorder %s38, 1
      %p72 = scmp.ne.s32.totalorder %s67, %s69
      %p73 = scmp.eq.s32.totalorder %s38, 0
      %p74 = por %p72, %p73
      %p75 = scmp.ne.s32.totalorder %s67, %s69
      %p76 = scmp.eq.s32.totalorder %s43, 1
      %p77 = por %p75, %p76
      %p78 = scmp.ne.s32.totalorder %s69, %s70
      %p79 = scmp.eq.s32.totalorder %s43, 0
      %p80 = por %p78, %p79
      %p81 = scmp.ne.s32.totalorder %s69, %s70
      %p82 = scmp.eq.s32.totalorder %s44, 1
      %p83 = por %p81, %p82
      %p85 = scmp.ne.s32.totalorder %s70, %s84
      %p86 = scmp.eq.s32.totalorder %s44, 0
      %p87 = por %p85, %p86
      %s88 = ssub.s32 %s38, %s45
      %p89 = scmp.eq.s32.totalorder %s88, 0
      %s91 = sadd.s32 %s90, 1
      %s92 = scalar_select %p89, %s90, %s91
      %p95 = pneg %p89
      %p96 = scmp.eq.s32.totalorder %s38, 1
      %p97 = por %p95, %p96
      %p98 = scmp.ne.s32.totalorder %s90, %s93
      %p99 = scmp.eq.s32.totalorder %s38, 0
      %p100 = por %p98, %p99
      %p101 = scmp.ne.s32.totalorder %s90, %s93
      %p102 = scmp.eq.s32.totalorder %s43, 1
      %p103 = por %p101, %p102
      %p104 = scmp.ne.s32.totalorder %s93, %s94
      %p105 = scmp.eq.s32.totalorder %s43, 0
      %p106 = por %p104, %p105
      %p107 = scmp.ne.s32.totalorder %s93, %s94
      %p108 = scmp.eq.s32.totalorder %s44, 1
      %p109 = por %p107, %p108
      %p111 = scmp.ne.s32.totalorder %s94, %s110
      %p112 = scmp.eq.s32.totalorder %s44, 0
      %p113 = por %p111, %p112
      %s114 = sadd.s32 %s38, 2
      %s115 = sadd.s32 %s45, 2
      %s116 = ssub.s32 %s114, %s115
      %p117 = scmp.eq.s32.totalorder %s116, 0
      %s119 = sadd.s32 %s118, 1
      %s120 = scalar_select %p117, %s118, %s119
      %p123 = pneg %p117
      %p124 = scmp.eq.s32.totalorder %s38, 1
      %p125 = por %p123, %p124
      %p126 = scmp.ne.s32.totalorder %s118, %s121
      %p127 = scmp.eq.s32.totalorder %s38, 0
      %p128 = por %p126, %p127
      %p129 = scmp.ne.s32.totalorder %s118, %s121
      %p130 = scmp.eq.s32.totalorder %s43, 1
      %p131 = por %p129, %p130
      %p132 = scmp.ne.s32.totalorder %s121, %s122
      %p133 = scmp.eq.s32.totalorder %s43, 0
      %p134 = por %p132, %p133
      %p135 = scmp.ne.s32.totalorder %s121, %s122
      %p136 = scmp.eq.s32.totalorder %s44, 1
      %p137 = por %p135, %p136
      %p139 = scmp.ne.s32.totalorder %s122, %s138
      %p140 = scmp.eq.s32.totalorder %s44, 0
      %p141 = por %p139, %p140
      %s142 = ssub.s32 %s38, %s45
      %p143 = scmp.eq.s32.totalorder %s142, 0
      %s145 = sadd.s32 %s144, 1
      %s146 = scalar_select %p143, %s144, %s145
      %p149 = pneg %p143
      %p150 = scmp.eq.s32.totalorder %s38, 1
      %p151 = por %p149, %p150
      %p152 = scmp.ne.s32.totalorder %s144, %s147
      %p153 = scmp.eq.s32.totalorder %s38, 0
      %p154 = por %p152, %p153
      %p155 = scmp.ne.s32.totalorder %s144, %s147
      %p156 = scmp.eq.s32.totalorder %s43, 1
      %p157 = por %p155, %p156
      %p158 = scmp.ne.s32.totalorder %s147, %s148
      %p159 = scmp.eq.s32.totalorder %s43, 0
      %p160 = por %p158, %p159
      %p161 = scmp.ne.s32.totalorder %s147, %s148
      %p162 = scmp.eq.s32.totalorder %s44, 1
      %p163 = por %p161, %p162
      %p165 = scmp.ne.s32.totalorder %s148, %s164
      %p166 = scmp.eq.s32.totalorder %s44, 0
      %p167 = por %p165, %p166
      %s168 = ssub.s32 %s38, %s45
      %p169 = scmp.eq.s32.totalorder %s168, 0
      %s171 = sadd.s32 %s170, 1
      %s172 = scalar_select %p169, %s170, %s171
      %p175 = pneg %p169
      %p176 = scmp.eq.s32.totalorder %s38, 1
      %p177 = por %p175, %p176
      %p178 = scmp.ne.s32.totalorder %s170, %s173
      %p179 = scmp.eq.s32.totalorder %s38, 0
      %p180 = por %p178, %p179
      %p181 = scmp.ne.s32.totalorder %s170, %s173
      %p182 = scmp.eq.s32.totalorder %s43, 1
      %p183 = por %p181, %p182
      %p184 = scmp.ne.s32.totalorder %s173, %s174
      %p185 = scmp.eq.s32.totalorder %s43, 0
      %p186 = por %p184, %p185
      %p187 = scmp.ne.s32.totalorder %s173, %s174
      %p188 = scmp.eq.s32.totalorder %s44, 1
      %p189 = por %p187, %p188
      %p191 = scmp.ne.s32.totalorder %s174, %s190
      %p192 = scmp.eq.s32.totalorder %s44, 0
      %p193 = por %p191, %p192
      %s195 = sadd.s32 %s194, 1
      %p198 = scmp.eq.s32.totalorder %s38, 1
      %p199 = scmp.ne.s32.totalorder %s194, %s196
      %p200 = scmp.eq.s32.totalorder %s38, 0
      %p201 = por %p199, %p200
      %p202 = scmp.ne.s32.totalorder %s194, %s196
      %p203 = scmp.eq.s32.totalorder %s43, 1
      %p204 = por %p202, %p203
      %p205 = scmp.ne.s32.totalorder %s196, %s197
      %p206 = scmp.eq.s32.totalorder %s43, 0
      %p207 = por %p205, %p206
      %p208 = scmp.ne.s32.totalorder %s196, %s197
      %p209 = scmp.eq.s32.totalorder %s44, 1
      %p210 = por %p208, %p209
      %p212 = scmp.ne.s32.totalorder %s197, %s211
      %p213 = scmp.eq.s32.totalorder %s44, 0
      %p214 = por %p212, %p213
      %s216 = sadd.s32 %s215, 1
      %p219 = scmp.eq.s32.totalorder %s38, 1
      %p220 = scmp.ne.s32.totalorder %s215, %s217
      %p221 = scmp.eq.s32.totalorder %s38, 0
      %p222 = por %p220, %p221
      %p223 = scmp.ne.s32.totalorder %s215, %s217
      %p224 = scmp.eq.s32.totalorder %s43, 1
      %p225 = por %p223, %p224
      %p226 = scmp.ne.s32.totalorder %s217, %s218
      %p227 = scmp.eq.s32.totalorder %s43, 0
      %p228 = por %p226, %p227
      %p229 = scmp.ne.s32.totalorder %s217, %s218
      %p230 = scmp.eq.s32.totalorder %s44, 1
      %p231 = por %p229, %p230
      %p233 = scmp.ne.s32.totalorder %s218, %s232
      %p234 = scmp.eq.s32.totalorder %s44, 0
      %p235 = por %p233, %p234
      %s237 = sadd.s32 %s236, 1
      %p240 = scmp.eq.s32.totalorder %s38, 1
      %p241 = scmp.ne.s32.totalorder %s236, %s238
      %p242 = scmp.eq.s32.totalorder %s38, 0
      %p243 = por %p241, %p242
      %p244 = scmp.ne.s32.totalorder %s236, %s238
      %p245 = scmp.eq.s32.totalorder %s43, 1
      %p246 = por %p244, %p245
      %p247 = scmp.ne.s32.totalorder %s238, %s239
      %p248 = scmp.eq.s32.totalorder %s43, 0
      %p249 = por %p247, %p248
      %p250 = scmp.ne.s32.totalorder %s238, %s239
      %p251 = scmp.eq.s32.totalorder %s44, 1
      %p252 = por %p250, %p251
      %p254 = scmp.ne.s32.totalorder %s239, %s253
      %p255 = scmp.eq.s32.totalorder %s44, 0
      %p256 = por %p254, %p255
      %s258 = sadd.s32 %s257, 1
      %p261 = scmp.eq.s32.totalorder %s38, 1
      %p262 = scmp.ne.s32.totalorder %s257, %s259
      %p263 = scmp.eq.s32.totalorder %s38, 0
      %p264 = por %p262, %p263
      %p265 = scmp.ne.s32.totalorder %s257, %s259
      %p266 = scmp.eq.s32.totalorder %s43, 1
      %p267 = por %p265, %p266
      %p268 = scmp.ne.s32.totalorder %s259, %s260
      %p269 = scmp.eq.s32.totalorder %s43, 0
      %p270 = por %p268, %p269
      %p271 = scmp.ne.s32.totalorder %s259, %s260
      %p272 = scmp.eq.s32.totalorder %s44, 1
      %p273 = por %p271, %p272
      %p275 = scmp.ne.s32.totalorder %s260, %s274
      %p276 = scmp.eq.s32.totalorder %s44, 0
      %p277 = por %p275, %p276
      %s279 = sadd.s32 %s278, 1
      %p282 = scmp.eq.s32.totalorder %s38, 1
      %p283 = scmp.ne.s32.totalorder %s278, %s280
      %p284 = scmp.eq.s32.totalorder %s38, 0
      %p285 = por %p283, %p284
      %p286 = scmp.ne.s32.totalorder %s278, %s280
      %p287 = scmp.eq.s32.totalorder %s43, 1
      %p288 = por %p286, %p287
      %p289 = scmp.ne.s32.totalorder %s280, %s281
      %p290 = scmp.eq.s32.totalorder %s43, 0
      %p291 = por %p289, %p290
      %p292 = scmp.ne.s32.totalorder %s280, %s281
      %p293 = scmp.eq.s32.totalorder %s44, 1
      %p294 = por %p292, %p293
      %p296 = scmp.ne.s32.totalorder %s281, %s295
      %p297 = scmp.eq.s32.totalorder %s44, 0
      %p298 = por %p296, %p297
      %s300 = sadd.s32 %s299, 1
      %p303 = scmp.eq.s32.totalorder %s38, 1
      %p304 = scmp.ne.s32.totalorder %s299, %s301
      %p305 = scmp.eq.s32.totalorder %s38, 0
      %p306 = por %p304, %p305
      %p307 = scmp.ne.s32.totalorder %s299, %s301
      %p308 = scmp.eq.s32.totalorder %s43, 1
      %p309 = por %p307, %p308
      %p310 = scmp.ne.s32.totalorder %s301, %s302
      %p311 = scmp.eq.s32.totalorder %s43, 0
      %p312 = por %p310, %p311
      %p313 = scmp.ne.s32.totalorder %s301, %s302
      %p314 = scmp.eq.s32.totalorder %s44, 1
      %p315 = por %p313, %p314
      %p317 = scmp.ne.s32.totalorder %s302, %s316
      %p318 = scmp.eq.s32.totalorder %s44, 0
      %p319 = por %p317, %p318
      %s320 = ssub.s32 %s38, %s45
      %p321 = scmp.eq.s32.totalorder %s320, 0
      %s323 = sadd.s32 %s322, 1
      %s324 = scalar_select %p321, %s322, %s323
      %p327 = pneg %p321
      %p328 = scmp.eq.s32.totalorder %s38, 1
      %p329 = por %p327, %p328
      %p330 = scmp.ne.s32.totalorder %s322, %s325
      %p331 = scmp.eq.s32.totalorder %s38, 0
      %p332 = por %p330, %p331
      %p333 = scmp.ne.s32.totalorder %s322, %s325
      %p334 = scmp.eq.s32.totalorder %s43, 1
      %p335 = por %p333, %p334
      %p336 = scmp.ne.s32.totalorder %s325, %s326
      %p337 = scmp.eq.s32.totalorder %s43, 0
      %p338 = por %p336, %p337
      %p339 = scmp.ne.s32.totalorder %s325, %s326
      %p340 = scmp.eq.s32.totalorder %s44, 1
      %p341 = por %p339, %p340
      %p343 = scmp.ne.s32.totalorder %s326, %s342
      %p344 = scmp.eq.s32.totalorder %s44, 0
      %p345 = por %p343, %p344
      %s346 = ssub.s32 %s38, %s45
      %p347 = scmp.eq.s32.totalorder %s346, 0
      %s349 = sadd.s32 %s348, 1
      %s350 = scalar_select %p347, %s348, %s349
      %p353 = pneg %p347
      %p354 = scmp.eq.s32.totalorder %s38, 1
      %p355 = por %p353, %p354
      %p356 = scmp.ne.s32.totalorder %s348, %s351
      %p357 = scmp.eq.s32.totalorder %s38, 0
      %p358 = por %p356, %p357
      %p359 = scmp.ne.s32.totalorder %s348, %s351
      %p360 = scmp.eq.s32.totalorder %s43, 1
      %p361 = por %p359, %p360
      %p362 = scmp.ne.s32.totalorder %s351, %s352
      %p363 = scmp.eq.s32.totalorder %s43, 0
      %p364 = por %p362, %p363
      %p365 = scmp.ne.s32.totalorder %s351, %s352
      %p366 = scmp.eq.s32.totalorder %s44, 1
      %p367 = por %p365, %p366
      %p369 = scmp.ne.s32.totalorder %s352, %s368
      %p370 = scmp.eq.s32.totalorder %s44, 0
      %p371 = por %p369, %p370
      %s372 = ssub.s32 %s38, %s45
      %p373 = scmp.eq.s32.totalorder %s372, 0
      %s375 = sadd.s32 %s374, 1
      %s376 = scalar_select %p373, %s374, %s375
      %p379 = pneg %p373
      %p380 = scmp.eq.s32.totalorder %s38, 1
      %p381 = por %p379, %p380
      %p382 = scmp.ne.s32.totalorder %s374, %s377
      %p383 = scmp.eq.s32.totalorder %s38, 0
      %p384 = por %p382, %p383
      %p385 = scmp.ne.s32.totalorder %s374, %s377
      %p386 = scmp.eq.s32.totalorder %s43, 1
      %p387 = por %p385, %p386
      %p388 = scmp.ne.s32.totalorder %s377, %s378
      %p389 = scmp.eq.s32.totalorder %s43, 0
      %p390 = por %p388, %p389
      %p391 = scmp.ne.s32.totalorder %s377, %s378
      %p392 = scmp.eq.s32.totalorder %s44, 1
      %p393 = por %p391, %p392
      %p395 = scmp.ne.s32.totalorder %s378, %s394
      %p396 = scmp.eq.s32.totalorder %s44, 0
      %p397 = por %p395, %p396
      %s398 = ssub.s32 %s38, %s45
      %p399 = scmp.eq.s32.totalorder %s398, 0
      %s401 = sadd.s32 %s400, 1
      %s402 = scalar_select %p399, %s400, %s401
      %p405 = pneg %p399
      %p406 = scmp.eq.s32.totalorder %s38, 1
      %p407 = por %p405, %p406
      %p408 = scmp.ne.s32.totalorder %s400, %s403
      %p409 = scmp.eq.s32.totalorder %s38, 0
      %p410 = por %p408, %p409
      %p411 = scmp.ne.s32.totalorder %s400, %s403
      %p412 = scmp.eq.s32.totalorder %s43, 1
      %p413 = por %p411, %p412
      %p414 = scmp.ne.s32.totalorder %s403, %s404
      %p415 = scmp.eq.s32.totalorder %s43, 0
      %p416 = por %p414, %p415
      %p417 = scmp.ne.s32.totalorder %s403, %s404
      %p418 = scmp.eq.s32.totalorder %s44, 1
      %p419 = por %p417, %p418
      %p421 = scmp.ne.s32.totalorder %s404, %s420
      %p422 = scmp.eq.s32.totalorder %s44, 0
      %p423 = por %p421, %p422
      %p424 = scmp.le.s32.totalorder 1, %s38
      %p425 = scmp.lt.s32.totalorder %s38, 3
      %p426 = pnand %p424, %p425
      %p427 = pneg %p426
      // Predicated region
      $region9: #{tpu_custom_call.1} parent=5 // pred_check
        _
      $region10: #{tpu_custom_call.1} parent=5 // pred_check_branch
        %429 = sbr.rel (%p426) target = $region12
      $region11: #{tpu_custom_call.1} parent=5 // pred_region
        %s430 = ssub.s32 %s38, 1
        // Predicated region
        $region13: #{tpu_custom_call.1} parent=11 // pred_check
          %p431 = pneg %p59
        $region14: #{tpu_custom_call.1} parent=11 // pred_check_branch
          %433 = sbr.rel (%p431) target = $region16
        $region15: #{tpu_custom_call.1} parent=11 // pred_region
          _
        $region16: #{tpu_custom_call.1} parent=11 // pred_fallthru
          _
        // Predicated region
        $region17: #{tpu_custom_call.1} parent=11 // pred_check
          %p434 = pneg %p80
        $region18: #{tpu_custom_call.1} parent=11 // pred_check_branch
          %436 = sbr.rel (%p434) target = $region20
        $region19: #{tpu_custom_call.1} parent=11 // pred_region
          _
        $region20: #{tpu_custom_call.1} parent=11 // pred_fallthru
          _
        // Predicated region
        $region21: #{tpu_custom_call.1} parent=11 // pred_check
          %p437 = pneg %p207
        $region22: #{tpu_custom_call.1} parent=11 // pred_check_branch
          %439 = sbr.rel (%p437) target = $region24
        $region23: #{tpu_custom_call.1} parent=11 // pred_region
          %s441 = ssub.s32 36864, 36864
          %442 = vsyncadd [#allocation8], %s441
          %s443 = sshll.u32 [#allocation9], 4
          %s444 = int_to_ptr.vmem [resolvable:$true] %s443
          %449 = dma.hbm_to_vmem [thread:$0]  %s6, 36864, %s444, [#allocation8], 2304, 2304, 144
        $region24: #{tpu_custom_call.1} parent=11 // pred_fallthru
          _
        // Predicated region
        $region25: #{tpu_custom_call.1} parent=11 // pred_check
          %p450 = pneg %p228
        $region26: #{tpu_custom_call.1} parent=11 // pred_check_branch
          %452 = sbr.rel (%p450) target = $region28
        $region27: #{tpu_custom_call.1} parent=11 // pred_region
          %s454 = ssub.s32 64, 64
          %455 = vsyncadd [#allocation11], %s454
          %s457 = sshll.u32 [#allocation10], 4
          %s458 = int_to_ptr.vmem [resolvable:$true] %s457
          %460 = dma.hbm_to_vmem [thread:$0]  %s7, 64, %s458, [#allocation11]
        $region28: #{tpu_custom_call.1} parent=11 // pred_fallthru
          _
        // Predicated region
        $region29: #{tpu_custom_call.1} parent=11 // pred_check
          %p461 = pneg %p249
        $region30: #{tpu_custom_call.1} parent=11 // pred_check_branch
          %463 = sbr.rel (%p461) target = $region32
        $region31: #{tpu_custom_call.1} parent=11 // pred_region
          %s465 = ssub.s32 8192, 8192
          %466 = vsyncadd [#allocation11], %s465
          %s467 = sshll.u32 [#allocation12], 4
          %s468 = int_to_ptr.vmem [resolvable:$true] %s467
          %473 = dma.hbm_to_vmem [thread:$0]  %s8, 8192, %s468, [#allocation11], 128, 128, 8
        $region32: #{tpu_custom_call.1} parent=11 // pred_fallthru
          _
        // Predicated region
        $region33: #{tpu_custom_call.1} parent=11 // pred_check
          %p474 = pneg %p270
        $region34: #{tpu_custom_call.1} parent=11 // pred_check_branch
          %476 = sbr.rel (%p474) target = $region36
        $region35: #{tpu_custom_call.1} parent=11 // pred_region
          %s478 = ssub.s32 32, 32
          %479 = vsyncadd [#allocation14], %s478
          %s481 = sshll.u32 [#allocation13], 4
          %s482 = int_to_ptr.vmem [resolvable:$true] %s481
          %484 = dma.hbm_to_vmem [thread:$0]  %s9, 32, %s482, [#allocation14]
        $region36: #{tpu_custom_call.1} parent=11 // pred_fallthru
          _
        // Predicated region
        $region37: #{tpu_custom_call.1} parent=11 // pred_check
          %p485 = pneg %p291
        $region38: #{tpu_custom_call.1} parent=11 // pred_check_branch
          %487 = sbr.rel (%p485) target = $region40
        $region39: #{tpu_custom_call.1} parent=11 // pred_region
          _
        $region40: #{tpu_custom_call.1} parent=11 // pred_fallthru
          _
        // Predicated region
        $region41: #{tpu_custom_call.1} parent=11 // pred_check
          %p488 = pneg %p312
        $region42: #{tpu_custom_call.1} parent=11 // pred_check_branch
          %490 = sbr.rel (%p488) target = $region44
        $region43: #{tpu_custom_call.1} parent=11 // pred_region
          %s492 = ssub.s32 16, 16
          %493 = vsyncadd [#allocation14], %s492
          %s495 = sshll.u32 [#allocation15], 4
          %s496 = int_to_ptr.vmem [resolvable:$true] %s495
          %498 = dma.hbm_to_vmem [thread:$0]  %s11, 16, %s496, [#allocation14]
        $region44: #{tpu_custom_call.1} parent=11 // pred_fallthru
          _
      $region12: #{tpu_custom_call.1} parent=5 // pred_fallthru
        _
      %p499 = scmp.lt.s32.totalorder %s38, 2
      // Predicated region
      $region45: #{tpu_custom_call.1} parent=5 // pred_check
        %p500 = pneg %p499
      $region46: #{tpu_custom_call.1} parent=5 // pred_check_branch
        %502 = sbr.rel (%p500) target = $region48
      $region47: #{tpu_custom_call.1} parent=5 // pred_region
        // Predicated region
        $region49: #{tpu_custom_call.1} parent=47 // pred_check
          %p503 = pneg %p100
        $region50: #{tpu_custom_call.1} parent=47 // pred_check_branch
          %505 = sbr.rel (%p503) target = $region52
        $region51: #{tpu_custom_call.1} parent=47 // pred_region
          %s506 = sand.u32 %s90, 1
          %s507 = scalar_lea.sflag [#allocation5], %s506
          %s508 = sand.u32 %s90, 1
          %s509 = smul.addr %s508, 32
          %s510 = scalar_lea.vmem [#allocation4], %s509
          %s512 = ssub.s32 512, 512
          %513 = vsyncadd %s507, %s512
          %s514 = smul.addr %s38, 4
          %s515 = smul.addr %s514, 128
          %s516 = scalar_lea.hbm %s2, %s515
          %s517 = sshll.u32 %s510, 4
          %s518 = int_to_ptr.vmem [resolvable:$true] %s517
          %523 = dma.hbm_to_vmem [thread:$0]  %s516, 512, %s518, %s507, 128, 128, 8
        $region52: #{tpu_custom_call.1} parent=47 // pred_fallthru
          _
        // Predicated region
        $region53: #{tpu_custom_call.1} parent=47 // pred_check
          %p524 = pneg %p128
        $region54: #{tpu_custom_call.1} parent=47 // pred_check_branch
          %526 = sbr.rel (%p524) target = $region56
        $region55: #{tpu_custom_call.1} parent=47 // pred_region
          %s527 = sand.u32 %s38, 1
          %s528 = scalar_lea.sflag [#allocation8], %s527
          %s529 = sand.u32 %s118, 1
          %s530 = smul.addr %s529, 32
          %s531 = scalar_lea.vmem [#allocation7], %s530
          %s532 = sadd.s32 %s38, 2
          %s534 = ssub.s32 512, 512
          %535 = vsyncadd %s528, %s534
          %s536 = smul.addr %s532, 4
          %s537 = smul.addr %s536, 128
          %s538 = scalar_lea.hbm %s3, %s537
          %s539 = sshll.u32 %s531, 4
          %s540 = int_to_ptr.vmem [resolvable:$true] %s539
          %545 = dma.hbm_to_vmem [thread:$0]  %s538, 512, %s540, %s528, 128, 128, 8
        $region56: #{tpu_custom_call.1} parent=47 // pred_fallthru
          _
        // Predicated region
        $region57: #{tpu_custom_call.1} parent=47 // pred_check
          %p546 = pneg %p154
        $region58: #{tpu_custom_call.1} parent=47 // pred_check_branch
          %548 = sbr.rel (%p546) target = $region60
        $region59: #{tpu_custom_call.1} parent=47 // pred_region
          %p549 = scmp.lt.s32.totalorder %s38, 1
          %s550 = scalar_select %p549, %s38, 1
          %s551 = smul.addr %s550, 16
          %s552 = smul.addr %s551, 8
          %s553 = scalar_lea.vmem %s4, %s552
        $region60: #{tpu_custom_call.1} parent=47 // pred_fallthru
          _
        // Predicated region
        $region61: #{tpu_custom_call.1} parent=47 // pred_check
          %p554 = pneg %p180
        $region62: #{tpu_custom_call.1} parent=47 // pred_check_branch
          %556 = sbr.rel (%p554) target = $region64
        $region63: #{tpu_custom_call.1} parent=47 // pred_region
          %p557 = scmp.lt.s32.totalorder %s38, 1
          %s558 = scalar_select %p557, %s38, 1
          %s559 = smul.addr %s558, 16
          %s560 = smul.addr %s559, 8
          %s561 = scalar_lea.vmem %s5, %s560
        $region64: #{tpu_custom_call.1} parent=47 // pred_fallthru
          _
      $region48: #{tpu_custom_call.1} parent=5 // pred_fallthru
        _
      %p562 = scmp.le.s32.totalorder 1, %s38
      %p563 = scmp.lt.s32.totalorder %s38, 3
      %p564 = pnand %p562, %p563
      %p565 = pneg %p564
      // Predicated region
      $region65: #{tpu_custom_call.1} parent=5 // pred_check
        _
      $region66: #{tpu_custom_call.1} parent=5 // pred_check_branch
        %567 = sbr.rel (%p564) target = $region68
      $region67: #{tpu_custom_call.1} parent=5 // pred_region
        %s568 = ssub.s32 %s38, 1
        %s569 = sand.u32 %s93, 1
        %s570 = scalar_lea.sflag [#allocation5], %s569
        %s571 = sand.u32 %s93, 1
        %s572 = smul.addr %s571, 32
        %s573 = scalar_lea.vmem [#allocation4], %s572
        // Predicated region
        $region69: #{tpu_custom_call.1} parent=67 // pred_check
          %p574 = pneg %p106
        $region70: #{tpu_custom_call.1} parent=67 // pred_check_branch
          %576 = sbr.rel (%p574) target = $region72
        $region71: #{tpu_custom_call.1} parent=67 // pred_region
          %577 = dma.done %s570, 512
        $region72: #{tpu_custom_call.1} parent=67 // pred_fallthru
          _
        %s578 = sand.u32 %s43, 1
        %s579 = scalar_lea.sflag [#allocation8], %s578
        %s580 = sand.u32 %s121, 1
        %s581 = smul.addr %s580, 32
        %s582 = scalar_lea.vmem [#allocation7], %s581
        // Predicated region
        $region73: #{tpu_custom_call.1} parent=67 // pred_check
          %p583 = pneg %p134
        $region74: #{tpu_custom_call.1} parent=67 // pred_check_branch
          %585 = sbr.rel (%p583) target = $region76
        $region75: #{tpu_custom_call.1} parent=67 // pred_region
          %586 = dma.done %s579, 512
        $region76: #{tpu_custom_call.1} parent=67 // pred_fallthru
          _
        // Predicated region
        $region77: #{tpu_custom_call.1} parent=67 // pred_check
          %p587 = pneg %p207
        $region78: #{tpu_custom_call.1} parent=67 // pred_check_branch
          %589 = sbr.rel (%p587) target = $region80
        $region79: #{tpu_custom_call.1} parent=67 // pred_region
          %590 = dma.done [#allocation8], 36864
        $region80: #{tpu_custom_call.1} parent=67 // pred_fallthru
          _
        // Predicated region
        $region81: #{tpu_custom_call.1} parent=67 // pred_check
          %p591 = pneg %p228
        $region82: #{tpu_custom_call.1} parent=67 // pred_check_branch
          %593 = sbr.rel (%p591) target = $region84
        $region83: #{tpu_custom_call.1} parent=67 // pred_region
          %594 = dma.done [#allocation11], 64
        $region84: #{tpu_custom_call.1} parent=67 // pred_fallthru
          _
        // Predicated region
        $region85: #{tpu_custom_call.1} parent=67 // pred_check
          %p595 = pneg %p249
        $region86: #{tpu_custom_call.1} parent=67 // pred_check_branch
          %597 = sbr.rel (%p595) target = $region88
        $region87: #{tpu_custom_call.1} parent=67 // pred_region
          %598 = dma.done [#allocation11], 8192
        $region88: #{tpu_custom_call.1} parent=67 // pred_fallthru
          _
        // Predicated region
        $region89: #{tpu_custom_call.1} parent=67 // pred_check
          %p599 = pneg %p270
        $region90: #{tpu_custom_call.1} parent=67 // pred_check_branch
          %601 = sbr.rel (%p599) target = $region92
        $region91: #{tpu_custom_call.1} parent=67 // pred_region
          %602 = dma.done [#allocation14], 32
        $region92: #{tpu_custom_call.1} parent=67 // pred_fallthru
          _
        // Predicated region
        $region93: #{tpu_custom_call.1} parent=67 // pred_check
          %p603 = pneg %p312
        $region94: #{tpu_custom_call.1} parent=67 // pred_check_branch
          %605 = sbr.rel (%p603) target = $region96
        $region95: #{tpu_custom_call.1} parent=67 // pred_region
          %606 = dma.done [#allocation14], 16
        $region96: #{tpu_custom_call.1} parent=67 // pred_fallthru
          _
        %p607 = pneg %p59
        %p608 = pneg %p56
        %p609 = pneg %p80
        %p610 = pneg %p77
        %s611 = sand.u32 %s93, 1
        %s612 = scalar_lea.sflag [#allocation5], %s611
        %s613 = sand.u32 %s93, 1
        %s614 = smul.addr %s613, 32
        %s615 = scalar_lea.vmem [#allocation4], %s614
        %p616 = pneg %p106
        %p617 = pneg %p103
        %s618 = sand.u32 %s43, 1
        %s619 = scalar_lea.sflag [#allocation8], %s618
        %s620 = sand.u32 %s121, 1
        %s621 = smul.addr %s620, 32
        %s622 = scalar_lea.vmem [#allocation7], %s621
        %p623 = pneg %p134
        %p624 = pneg %p131
        %p625 = scmp.lt.s32.totalorder %s43, 1
        %s626 = scalar_select %p625, %s43, 1
        %s627 = smul.addr %s626, 16
        %s628 = smul.addr %s627, 8
        %s629 = scalar_lea.vmem %s4, %s628
        %p630 = pneg %p160
        %p631 = pneg %p157
        %p632 = scmp.lt.s32.totalorder %s43, 1
        %s633 = scalar_select %p632, %s43, 1
        %s634 = smul.addr %s633, 16
        %s635 = smul.addr %s634, 8
        %s636 = scalar_lea.vmem %s5, %s635
        %p637 = pneg %p186
        %p638 = pneg %p183
        %p639 = pneg %p207
        %p640 = pneg %p204
        %p641 = pneg %p228
        %p642 = pneg %p225
        %p643 = pneg %p249
        %p644 = pneg %p246
        %p645 = pneg %p270
        %p646 = pneg %p267
        %p647 = pneg %p291
        %p648 = pneg %p288
        %p649 = pneg %p312
        %p650 = pneg %p309
        %p651 = pneg %p338
        %p652 = pneg %p335
        %s653 = sand.u32 %s325, 1
        %s654 = scalar_lea.sflag [#allocation6], %s653
        %s655 = sand.u32 %s325, 1
        %s656 = smul.addr %s655, 128
        %s657 = scalar_lea.vmem [#allocation16], %s656
        %p658 = pneg %p364
        %p659 = pneg %p361
        %p660 = scmp.lt.s32.totalorder %s43, 1
        %s661 = scalar_select %p660, %s43, 1
        %s662 = smul.addr %s661, 16
        %s663 = smul.addr %s662, 8
        %s664 = scalar_lea.vmem %s13, %s663
        %p665 = pneg %p390
        %p666 = pneg %p387
        %p667 = scmp.lt.s32.totalorder %s43, 1
        %s668 = scalar_select %p667, %s43, 1
        %s669 = smul.addr %s668, 16
        %s670 = smul.addr %s669, 8
        %s671 = scalar_lea.vmem %s14, %s670
        %p672 = pneg %p416
        %p673 = pneg %p413
        %s674 = sand.u32 %s403, 1
        %s675 = scalar_lea.sflag [#allocation18], %s674
        %s676 = sand.u32 %s403, 1
        %s677 = scalar_lea.vmem [#allocation17], %s676
        %s678 = sadd.s32 %s43, 2
        %p679 = scmp.lt.s32.totalorder %s43, 1
        %s680 = scalar_select %p679, %s43, 1
        %s681 = smul.addr %s680, 16
        %s682 = smul.addr %s681, 8
        %s683 = scalar_lea.vmem %s4, %s682
        %p684 = scmp.lt.s32.totalorder %s43, 1
        %s685 = scalar_select %p684, %s43, 1
        %s686 = smul.addr %s685, 16
        %s687 = smul.addr %s686, 8
        %s688 = scalar_lea.vmem %s5, %s687
        %p689 = scmp.lt.s32.totalorder %s43, 1
        %s690 = scalar_select %p689, %s43, 1
        %s691 = smul.addr %s690, 16
        %s692 = smul.addr %s691, 8
        %s693 = scalar_lea.vmem %s13, %s692
        %p694 = scmp.lt.s32.totalorder %s43, 1
        %s695 = scalar_select %p694, %s43, 1
        %s696 = smul.addr %s695, 16
        %s697 = smul.addr %s696, 8
        %s698 = scalar_lea.vmem %s14, %s697
        %s699 = sld [smem:[#allocation2]]
        %s700 = sld [smem:[#allocation3]]
        %s701 = sadd.f32 %s700, %s699
        %v702 = vstv %s701
        %v703 = vrcp.pop %v702
        %s704 = vtos %v703
        %s705 = smul.f32 %s700, %s704
        %v706 = vstv %s699
        %v707 = vrcp.pop %v706
        %s708 = vtos %v707
        %s709 = smul.f32 -1.0, %s708
        %v710 = vld [vmem:[%s573] sm:$0xff]
        %v711 = vld [vmem:[%s573 + $0x8] sm:$0xff]
        %v712 = vld [vmem:[%s573 + $0x10] sm:$0xff]
        %v713 = vld [vmem:[%s573 + $0x18] sm:$0xff]
        %v714 = vld [vmem:[%s582] sm:$0xff]
        %v715 = vld [vmem:[%s582 + $0x8] sm:$0xff]
        %v716 = vld [vmem:[%s582 + $0x10] sm:$0xff]
        %v717 = vld [vmem:[%s582 + $0x18] sm:$0xff]
        %v718 = vmul.f32 %v710, %v710
        %v719 = vmul.f32 %v711, %v711
        %v720 = vmul.f32 %v712, %v712
        %v721 = vmul.f32 %v713, %v713
        %v722 = vadd.f32 %v718, %v719
        %v723 = vadd.f32 %v722, %v720
        %v724 = vadd.f32 %v723, %v721
        %v725 = vrot.slane %v724, 4
        %v726 = vadd.f32 %v724, %v725
        %v727 = vrot.slane %v726, 2
        %v728 = vadd.f32 %v726, %v727
        %v729 = vrot.slane %v728, 1
        %v730 = vadd.f32 %v728, %v729
        %v731 = vadd.f32 %v730, 1e-08
        %v732 = vrsqrt.pop %v731
        %v733 = vmul.f32 %v710, %v732
        %v734 = vmul.f32 %v711, %v732
        %v735 = vmul.f32 %v712, %v732
        %v736 = vmul.f32 %v713, %v732
        %v737 = vmul.f32 %v714, %v714
        %v738 = vmul.f32 %v715, %v715
        %v739 = vmul.f32 %v716, %v716
        %v740 = vmul.f32 %v717, %v717
        %v741 = vadd.f32 %v737, %v738
        %v742 = vadd.f32 %v741, %v739
        %v743 = vadd.f32 %v742, %v740
        %v744 = vrot.slane %v743, 4
        %v745 = vadd.f32 %v743, %v744
        %v746 = vrot.slane %v745, 2
        %v747 = vadd.f32 %v745, %v746
        %v748 = vrot.slane %v747, 1
        %v749 = vadd.f32 %v747, %v748
        %v750 = vadd.f32 %v749, 1e-08
        %v751 = vrsqrt.pop %v750
        %v752 = vmul.f32 %v714, %v751
        %v753 = vmul.f32 %v715, %v751
        %v754 = vmul.f32 %v716, %v751
        %v755 = vmul.f32 %v717, %v751
        %756 = vxpose.xlu0.b32.start [1/16] %v733, 128
        %757 = vxpose.xlu0.b32.cont [2/16] %v734, 128
        %758 = vxpose.xlu0.b32.cont [3/16] %v735, 128
        %759 = vxpose.xlu0.b32.cont [4/16] %v736, 128
        %760 = vxpose.xlu0.b32.cont [5/16] 0.0, 128
        %761 = vxpose.xlu0.b32.cont [6/16] 0.0, 128
        %762 = vxpose.xlu0.b32.cont [7/16] 0.0, 128
        %763 = vxpose.xlu0.b32.cont [8/16] 0.0, 128
        %764 = vxpose.xlu0.b32.cont [9/16] 0.0, 128
        %765 = vxpose.xlu0.b32.cont [10/16] 0.0, 128
        %766 = vxpose.xlu0.b32.cont [11/16] 0.0, 128
        %767 = vxpose.xlu0.b32.cont [12/16] 0.0, 128
        %768 = vxpose.xlu0.b32.cont [13/16] 0.0, 128
        %769 = vxpose.xlu0.b32.cont [14/16] 0.0, 128
        %770 = vxpose.xlu0.b32.cont [15/16] 0.0, 128
        %771 = vxpose.xlu0.b32.end [16/16] 0.0, 128
        %v772 = vpop.trf.xlu0
        %v773 = vpop.trf.xlu0
        %v774 = vpop.trf.xlu0
        %v775 = vpop.trf.xlu0
        %v776 = vpop.trf.xlu0
        %v777 = vpop.trf.xlu0
        %v778 = vpop.trf.xlu0
        %v779 = vpop.trf.xlu0
        %v780 = vpop.trf.xlu0
        %v781 = vpop.trf.xlu0
        %v782 = vpop.trf.xlu0
        %v783 = vpop.trf.xlu0
        %v784 = vpop.trf.xlu0
        %v785 = vpop.trf.xlu0
        %v786 = vpop.trf.xlu0
        %v787 = vpop.trf.xlu0
        %vm788 = vcmask 261120
        %v790 = vsel %vm788, %v772, 0
        %v793 = vsel %vm788, %v773, 0
        %v796 = vsel %vm788, %v774, 0
        %v799 = vsel %vm788, %v775, 0
        %v802 = vsel %vm788, %v776, 0
        %v805 = vsel %vm788, %v777, 0
        %v808 = vsel %vm788, %v778, 0
        %v811 = vsel %vm788, %v779, 0
        %v814 = vsel %vm788, %v780, 0
        %v817 = vsel %vm788, %v781, 0
        %v820 = vsel %vm788, %v782, 0
        %v823 = vsel %vm788, %v783, 0
        %v826 = vsel %vm788, %v784, 0
        %v829 = vsel %vm788, %v785, 0
        %v832 = vsel %vm788, %v786, 0
        %v835 = vsel %vm788, %v787, 0
        %837 = vmatprep.subr.mxu0 0.0
        %838 = vmatpush1.msra.mxu0 %v752
        %839 = vmatprep.subr.mxu0 0.0
        %840 = vmatpush1.msra.mxu0 %v753
        %841 = vmatprep.subr.mxu0 0.0
        %842 = vmatpush1.msra.mxu0 %v754
        %843 = vmatprep.subr.mxu0 0.0
        %844 = vmatpush1.msra.mxu0 %v755
        %845 = vmatprep.subr.mxu0 0.0
        %846 = vmatpush1.msra.mxu0 0.0
        %847 = vmatprep.subr.mxu0 0.0
        %848 = vmatpush1.msra.mxu0 0.0
        %849 = vmatprep.subr.mxu0 0.0
        %850 = vmatpush1.msra.mxu0 0.0
        %851 = vmatprep.subr.mxu0 0.0
        %852 = vmatpush1.msra.mxu0 0.0
        %853 = vmatprep.subr.mxu0 0.0
        %854 = vmatpush1.msra.mxu0 0.0
        %855 = vmatprep.subr.mxu0 0.0
        %856 = vmatpush1.msra.mxu0 0.0
        %857 = vmatprep.subr.mxu0 0.0
        %858 = vmatpush1.msra.mxu0 0.0
        %859 = vmatprep.subr.mxu0 0.0
        %860 = vmatpush1.msra.mxu0 0.0
        %861 = vmatprep.subr.mxu0 0.0
        %862 = vmatpush1.msra.mxu0 0.0
        %863 = vmatprep.subr.mxu0 0.0
        %864 = vmatpush1.msra.mxu0 0.0
        %865 = vmatprep.subr.mxu0 0.0
        %866 = vmatpush1.msra.mxu0 0.0
        %867 = vmatprep.subr.mxu0 0.0
        %868 = vmatpush1.msra.mxu0 0.0
        %869 = vmatprep.subr.mxu0 0.0
        %870 = vmatpush1.msra.mxu0 0.0
        %871 = vmatprep.subr.mxu0 0.0
        %872 = vmatpush1.msra.mxu0 0.0
        %873 = vmatprep.subr.mxu0 0.0
        %874 = vmatpush1.msra.mxu0 0.0
        %875 = vmatprep.subr.mxu0 0.0
        %876 = vmatpush1.msra.mxu0 0.0
        %877 = vmatprep.subr.mxu0 0.0
        %878 = vmatpush1.msra.mxu0 0.0
        %879 = vmatprep.subr.mxu0 0.0
        %880 = vmatpush1.msra.mxu0 0.0
        %881 = vmatprep.subr.mxu0 0.0
        %882 = vmatpush1.msra.mxu0 0.0
        %883 = vmatprep.subr.mxu0 0.0
        %884 = vmatpush1.msra.mxu0 0.0
        %885 = vmatprep.subr.mxu0 0.0
        %886 = vmatpush1.msra.mxu0 0.0
        %887 = vmatprep.subr.mxu0 0.0
        %888 = vmatpush1.msra.mxu0 0.0
        %889 = vmatprep.subr.mxu0 0.0
        %890 = vmatpush1.msra.mxu0 0.0
        %891 = vmatprep.subr.mxu0 0.0
        %892 = vmatpush1.msra.mxu0 0.0
        %893 = vmatprep.subr.mxu0 0.0
        %894 = vmatpush1.msra.mxu0 0.0
        %895 = vmatprep.subr.mxu0 0.0
        %896 = vmatpush1.msra.mxu0 0.0
        %897 = vmatprep.subr.mxu0 0.0
        %898 = vmatpush1.msra.mxu0 0.0
        %899 = vmatprep.subr.mxu0 0.0
        %900 = vmatpush1.msra.mxu0 0.0
        %901 = vmatprep.mubr.f32.mxu0 0.0
        %902 = vmatmul.mubr.f32.gmra.mrb[0].mxu0 %v790
        %v903 = vpop.f32.mrb[0].mxu0
        %v904 = vadd.f32 0.0, %v903
        %v905 = vpop.f32.mrb[0].mxu0
        %906 = vmatprep.mubr.f32.mxu0 0.0
        %907 = vmatmul.mubr.f32.gmra.mrb[0].mxu0 %v793
        %v908 = vpop.f32.mrb[0].mxu0
        %v909 = vadd.f32 0.0, %v908
        %v910 = vpop.f32.mrb[0].mxu0
        %911 = vmatprep.mubr.f32.mxu0 0.0
        %912 = vmatmul.mubr.f32.gmra.mrb[0].mxu0 %v796
        %v913 = vpop.f32.mrb[0].mxu0
        %v914 = vadd.f32 0.0, %v913
        %v915 = vpop.f32.mrb[0].mxu0
        %916 = vmatprep.mubr.f32.mxu0 0.0
        %917 = vmatmul.mubr.f32.gmra.mrb[0].mxu0 %v799
        %v918 = vpop.f32.mrb[0].mxu0
        %v919 = vadd.f32 0.0, %v918
        %v920 = vpop.f32.mrb[0].mxu0
        %921 = vmatprep.mubr.f32.mxu0 0.0
        %922 = vmatmul.mubr.f32.gmra.mrb[0].mxu0 %v802
        %v923 = vpop.f32.mrb[0].mxu0
        %v924 = vadd.f32 0.0, %v923
        %v925 = vpop.f32.mrb[0].mxu0
        %926 = vmatprep.mubr.f32.mxu0 0.0
        %927 = vmatmul.mubr.f32.gmra.mrb[0].mxu0 %v805
        %v928 = vpop.f32.mrb[0].mxu0
        %v929 = vadd.f32 0.0, %v928
        %v930 = vpop.f32.mrb[0].mxu0
        %931 = vmatprep.mubr.f32.mxu0 0.0
        %932 = vmatmul.mubr.f32.gmra.mrb[0].mxu0 %v808
        %v933 = vpop.f32.mrb[0].mxu0
        %v934 = vadd.f32 0.0, %v933
        %v935 = vpop.f32.mrb[0].mxu0
        %936 = vmatprep.mubr.f32.mxu0 0.0
        %937 = vmatmul.mubr.f32.gmra.mrb[0].mxu0 %v811
        %v938 = vpop.f32.mrb[0].mxu0
        %v939 = vadd.f32 0.0, %v938
        %v940 = vpop.f32.mrb[0].mxu0
        %941 = vmatprep.mubr.f32.mxu0 0.0
        %942 = vmatmul.mubr.f32.gmra.mrb[0].mxu0 %v814
        %v943 = vpop.f32.mrb[0].mxu0
        %v944 = vadd.f32 0.0, %v943
        %v945 = vpop.f32.mrb[0].mxu0
        %946 = vmatprep.mubr.f32.mxu0 0.0
        %947 = vmatmul.mubr.f32.gmra.mrb[0].mxu0 %v817
        %v948 = vpop.f32.mrb[0].mxu0
        %v949 = vadd.f32 0.0, %v948
        %v950 = vpop.f32.mrb[0].mxu0
        %951 = vmatprep.mubr.f32.mxu0 0.0
        %952 = vmatmul.mubr.f32.gmra.mrb[0].mxu0 %v820
        %v953 = vpop.f32.mrb[0].mxu0
        %v954 = vadd.f32 0.0, %v953
        %v955 = vpop.f32.mrb[0].mxu0
        %956 = vmatprep.mubr.f32.mxu0 0.0
        %957 = vmatmul.mubr.f32.gmra.mrb[0].mxu0 %v823
        %v958 = vpop.f32.mrb[0].mxu0
        %v959 = vadd.f32 0.0, %v958
        %v960 = vpop.f32.mrb[0].mxu0
        %961 = vmatprep.mubr.f32.mxu0 0.0
        %962 = vmatmul.mubr.f32.gmra.mrb[0].mxu0 %v826
        %v963 = vpop.f32.mrb[0].mxu0
        %v964 = vadd.f32 0.0, %v963
        %v965 = vpop.f32.mrb[0].mxu0
        %966 = vmatprep.mubr.f32.mxu0 0.0
        %967 = vmatmul.mubr.f32.gmra.mrb[0].mxu0 %v829
        %v968 = vpop.f32.mrb[0].mxu0
        %v969 = vadd.f32 0.0, %v968
        %v970 = vpop.f32.mrb[0].mxu0
        %971 = vmatprep.mubr.f32.mxu0 0.0
        %972 = vmatmul.mubr.f32.gmra.mrb[0].mxu0 %v832
        %v973 = vpop.f32.mrb[0].mxu0
        %v974 = vadd.f32 0.0, %v973
        %v975 = vpop.f32.mrb[0].mxu0
        %976 = vmatprep.mubr.f32.mxu0 0.0
        %977 = vmatmul.mubr.f32.gmra.mrb[0].mxu0 %v835
        %v978 = vpop.f32.mrb[0].mxu0
        %v979 = vadd.f32 0.0, %v978
        %v980 = vpop.f32.mrb[0].mxu0
        %981 = vdwg.mxu0
        %v982 = vsub.f32 1.0, %v904
        %v983 = vsub.f32 1.0, %v909
        %v984 = vsub.f32 1.0, %v914
        %v985 = vsub.f32 1.0, %v919
        %v986 = vsub.f32 1.0, %v924
        %v987 = vsub.f32 1.0, %v929
        %v988 = vsub.f32 1.0, %v934
        %v989 = vsub.f32 1.0, %v939
        %v990 = vsub.f32 1.0, %v944
        %v991 = vsub.f32 1.0, %v949
        %v992 = vsub.f32 1.0, %v954
        %v993 = vsub.f32 1.0, %v959
        %v994 = vsub.f32 1.0, %v964
        %v995 = vsub.f32 1.0, %v969
        %v996 = vsub.f32 1.0, %v974
        %v997 = vsub.f32 1.0, %v979
        %v998 = vstv %s709
        %v999 = vmul.f32 %v982, %v998
        %v1000 = vmul.f32 %v983, %v998
        %v1001 = vmul.f32 %v984, %v998
        %v1002 = vmul.f32 %v985, %v998
        %v1003 = vmul.f32 %v986, %v998
        %v1004 = vmul.f32 %v987, %v998
        %v1005 = vmul.f32 %v988, %v998
        %v1006 = vmul.f32 %v989, %v998
        %v1007 = vmul.f32 %v990, %v998
        %v1008 = vmul.f32 %v991, %v998
        %v1009 = vmul.f32 %v992, %v998
        %v1010 = vmul.f32 %v993, %v998
        %v1011 = vmul.f32 %v994, %v998
        %v1012 = vmul.f32 %v995, %v998
        %v1013 = vmul.f32 %v996, %v998
        %v1014 = vmul.f32 %v997, %v998
        %v1015 = vmul.f32 %v999, 1.442695
        %v1016 = vpow.pop %v1015
        %v1017 = vmul.f32 %v1000, 1.442695
        %v1018 = vpow.pop %v1017
        %v1019 = vmul.f32 %v1001, 1.442695
        %v1020 = vpow.pop %v1019
        %v1021 = vmul.f32 %v1002, 1.442695
        %v1022 = vpow.pop %v1021
        %v1023 = vmul.f32 %v1003, 1.442695
        %v1024 = vpow.pop %v1023
        %v1025 = vmul.f32 %v1004, 1.442695
        %v1026 = vpow.pop %v1025
        %v1027 = vmul.f32 %v1005, 1.442695
        %v1028 = vpow.pop %v1027
        %v1029 = vmul.f32 %v1006, 1.442695
        %v1030 = vpow.pop %v1029
        %v1031 = vmul.f32 %v1007, 1.442695
        %v1032 = vpow.pop %v1031
        %v1033 = vmul.f32 %v1008, 1.442695
        %v1034 = vpow.pop %v1033
        %v1035 = vmul.f32 %v1009, 1.442695
        %v1036 = vpow.pop %v1035
        %v1037 = vmul.f32 %v1010, 1.442695
        %v1038 = vpow.pop %v1037
        %v1039 = vmul.f32 %v1011, 1.442695
        %v1040 = vpow.pop %v1039
        %v1041 = vmul.f32 %v1012, 1.442695
        %v1042 = vpow.pop %v1041
        %v1043 = vmul.f32 %v1013, 1.442695
        %v1044 = vpow.pop %v1043
        %v1045 = vmul.f32 %v1014, 1.442695
        %v1046 = vpow.pop %v1045
        %v1047 = vmul.f32 %v1016, 0.0078125
        %v1048 = vmul.f32 %v1018, 0.0078125
        %v1049 = vmul.f32 %v1020, 0.0078125
        %v1050 = vmul.f32 %v1022, 0.0078125
        %v1051 = vmul.f32 %v1024, 0.0078125
        %v1052 = vmul.f32 %v1026, 0.0078125
        %v1053 = vmul.f32 %v1028, 0.0078125
        %v1054 = vmul.f32 %v1030, 0.0078125
        %v1055 = vmul.f32 %v1032, 0.0078125
        %v1056 = vmul.f32 %v1034, 0.0078125
        %v1057 = vmul.f32 %v1036, 0.0078125
        %v1058 = vmul.f32 %v1038, 0.0078125
        %v1059 = vmul.f32 %v1040, 0.0078125
        %v1060 = vmul.f32 %v1042, 0.0078125
        %v1061 = vmul.f32 %v1044, 0.0078125
        %v1062 = vmul.f32 %v1046, 0.0078125
        %v1063 = vadd.f32 %v1047, %v1048
        %v1064 = vadd.f32 %v1063, %v1049
        %v1065 = vadd.f32 %v1064, %v1050
        %v1066 = vadd.f32 %v1065, %v1051
        %v1067 = vadd.f32 %v1066, %v1052
        %v1068 = vadd.f32 %v1067, %v1053
        %v1069 = vadd.f32 %v1068, %v1054
        %v1070 = vadd.f32 %v1069, %v1055
        %v1071 = vadd.f32 %v1070, %v1056
        %v1072 = vadd.f32 %v1071, %v1057
        %v1073 = vadd.f32 %v1072, %v1058
        %v1074 = vadd.f32 %v1073, %v1059
        %v1075 = vadd.f32 %v1074, %v1060
        %v1076 = vadd.f32 %v1075, %v1061
        %v1077 = vadd.f32 %v1076, %v1062
        %v1078 = vrot.slane %v1077, 4
        %v1079 = vadd.f32 %v1077, %v1078
        %v1080 = vrot.slane %v1079, 2
        %v1081 = vadd.f32 %v1079, %v1080
        %v1082 = vrot.slane %v1081, 1
        %v1083 = vadd.f32 %v1081, %v1082
        %v1084 = vadd.f32 %v1083, 1e-08
        %v1085 = vlog2.pop %v1084
        %v1086 = vmul.f32 %v1085, 0.6931472
        %v1087 = vsub.f32 -4.8520303, %v1086
        %v1088 = vstv %s705
        %v1089 = vmul.f32 %v1088, %v1087
        %v1090 = vmul.f32 %v1089, 1.442695
        %v1091 = vpow.pop %v1090
        %v1092 = vmul.f32 %v1016, %v1091
        %v1093 = vmul.f32 %v1018, %v1091
        %v1094 = vmul.f32 %v1020, %v1091
        %v1095 = vmul.f32 %v1022, %v1091
        %v1096 = vmul.f32 %v1024, %v1091
        %v1097 = vmul.f32 %v1026, %v1091
        %v1098 = vmul.f32 %v1028, %v1091
        %v1099 = vmul.f32 %v1030, %v1091
        %v1100 = vmul.f32 %v1032, %v1091
        %v1101 = vmul.f32 %v1034, %v1091
        %v1102 = vmul.f32 %v1036, %v1091
        %v1103 = vmul.f32 %v1038, %v1091
        %v1104 = vmul.f32 %v1040, %v1091
        %v1105 = vmul.f32 %v1042, %v1091
        %v1106 = vmul.f32 %v1044, %v1091
        %v1107 = vmul.f32 %v1046, %v1091
        %1108 = vadd.xlane.f32.xlu0 %v1092
        %v1109 = vpop.xlane.xlu0 %1108
        %1110 = vadd.xlane.f32.xlu0 %v1093
        %v1111 = vpop.xlane.xlu0 %1110
        %1112 = vadd.xlane.f32.xlu0 %v1094
        %v1113 = vpop.xlane.xlu0 %1112
        %1114 = vadd.xlane.f32.xlu0 %v1095
        %v1115 = vpop.xlane.xlu0 %1114
        %1116 = vadd.xlane.f32.xlu0 %v1096
        %v1117 = vpop.xlane.xlu0 %1116
        %1118 = vadd.xlane.f32.xlu0 %v1097
        %v1119 = vpop.xlane.xlu0 %1118
        %1120 = vadd.xlane.f32.xlu0 %v1098
        %v1121 = vpop.xlane.xlu0 %1120
        %1122 = vadd.xlane.f32.xlu0 %v1099
        %v1123 = vpop.xlane.xlu0 %1122
        %1124 = vadd.xlane.f32.xlu0 %v1100
        %v1125 = vpop.xlane.xlu0 %1124
        %1126 = vadd.xlane.f32.xlu0 %v1101
        %v1127 = vpop.xlane.xlu0 %1126
        %1128 = vadd.xlane.f32.xlu0 %v1102
        %v1129 = vpop.xlane.xlu0 %1128
        %1130 = vadd.xlane.f32.xlu0 %v1103
        %v1131 = vpop.xlane.xlu0 %1130
        %1132 = vadd.xlane.f32.xlu0 %v1104
        %v1133 = vpop.xlane.xlu0 %1132
        %1134 = vadd.xlane.f32.xlu0 %v1105
        %v1135 = vpop.xlane.xlu0 %1134
        %1136 = vadd.xlane.f32.xlu0 %v1106
        %v1137 = vpop.xlane.xlu0 %1136
        %1138 = vadd.xlane.f32.xlu0 %v1107
        %v1139 = vpop.xlane.xlu0 %1138
        %v1140 = vadd.f32 %v1109, 1e-08
        %v1141 = vadd.f32 %v1111, 1e-08
        %v1142 = vadd.f32 %v1113, 1e-08
        %v1143 = vadd.f32 %v1115, 1e-08
        %v1144 = vadd.f32 %v1117, 1e-08
        %v1145 = vadd.f32 %v1119, 1e-08
        %v1146 = vadd.f32 %v1121, 1e-08
        %v1147 = vadd.f32 %v1123, 1e-08
        %v1148 = vadd.f32 %v1125, 1e-08
        %v1149 = vadd.f32 %v1127, 1e-08
        %v1150 = vadd.f32 %v1129, 1e-08
        %v1151 = vadd.f32 %v1131, 1e-08
        %v1152 = vadd.f32 %v1133, 1e-08
        %v1153 = vadd.f32 %v1135, 1e-08
        %v1154 = vadd.f32 %v1137, 1e-08
        %v1155 = vadd.f32 %v1139, 1e-08
        %v1156 = vlog2.pop %v1140
        %v1157 = vmul.f32 %v1156, 0.6931472
        %v1158 = vlog2.pop %v1141
        %v1159 = vmul.f32 %v1158, 0.6931472
        %v1160 = vlog2.pop %v1142
        %v1161 = vmul.f32 %v1160, 0.6931472
        %v1162 = vlog2.pop %v1143
        %v1163 = vmul.f32 %v1162, 0.6931472
        %v1164 = vlog2.pop %v1144
        %v1165 = vmul.f32 %v1164, 0.6931472
        %v1166 = vlog2.pop %v1145
        %v1167 = vmul.f32 %v1166, 0.6931472
        %v1168 = vlog2.pop %v1146
        %v1169 = vmul.f32 %v1168, 0.6931472
        %v1170 = vlog2.pop %v1147
        %v1171 = vmul.f32 %v1170, 0.6931472
        %v1172 = vlog2.pop %v1148
        %v1173 = vmul.f32 %v1172, 0.6931472
        %v1174 = vlog2.pop %v1149
        %v1175 = vmul.f32 %v1174, 0.6931472
        %v1176 = vlog2.pop %v1150
        %v1177 = vmul.f32 %v1176, 0.6931472
        %v1178 = vlog2.pop %v1151
        %v1179 = vmul.f32 %v1178, 0.6931472
        %v1180 = vlog2.pop %v1152
        %v1181 = vmul.f32 %v1180, 0.6931472
        %v1182 = vlog2.pop %v1153
        %v1183 = vmul.f32 %v1182, 0.6931472
        %v1184 = vlog2.pop %v1154
        %v1185 = vmul.f32 %v1184, 0.6931472
        %v1186 = vlog2.pop %v1155
        %v1187 = vmul.f32 %v1186, 0.6931472
        %v1188 = vsub.f32 -4.8520303, %v1157
        %v1189 = vsub.f32 -4.8520303, %v1159
        %v1190 = vsub.f32 -4.8520303, %v1161
        %v1191 = vsub.f32 -4.8520303, %v1163
        %v1192 = vsub.f32 -4.8520303, %v1165
        %v1193 = vsub.f32 -4.8520303, %v1167
        %v1194 = vsub.f32 -4.8520303, %v1169
        %v1195 = vsub.f32 -4.8520303, %v1171
        %v1196 = vsub.f32 -4.8520303, %v1173
        %v1197 = vsub.f32 -4.8520303, %v1175
        %v1198 = vsub.f32 -4.8520303, %v1177
        %v1199 = vsub.f32 -4.8520303, %v1179
        %v1200 = vsub.f32 -4.8520303, %v1181
        %v1201 = vsub.f32 -4.8520303, %v1183
        %v1202 = vsub.f32 -4.8520303, %v1185
        %v1203 = vsub.f32 -4.8520303, %v1187
        %v1204 = vmul.f32 %v1088, %v1188
        %v1205 = vmul.f32 %v1088, %v1189
        %v1206 = vmul.f32 %v1088, %v1190
        %v1207 = vmul.f32 %v1088, %v1191
        %v1208 = vmul.f32 %v1088, %v1192
        %v1209 = vmul.f32 %v1088, %v1193
        %v1210 = vmul.f32 %v1088, %v1194
        %v1211 = vmul.f32 %v1088, %v1195
        %v1212 = vmul.f32 %v1088, %v1196
        %v1213 = vmul.f32 %v1088, %v1197
        %v1214 = vmul.f32 %v1088, %v1198
        %v1215 = vmul.f32 %v1088, %v1199
        %v1216 = vmul.f32 %v1088, %v1200
        %v1217 = vmul.f32 %v1088, %v1201
        %v1218 = vmul.f32 %v1088, %v1202
        %v1219 = vmul.f32 %v1088, %v1203
        %v1220 = vmul.f32 %v1204, 1.442695
        %v1221 = vpow.pop %v1220
        %v1222 = vmul.f32 %v1205, 1.442695
        %v1223 = vpow.pop %v1222
        %v1224 = vmul.f32 %v1206, 1.442695
        %v1225 = vpow.pop %v1224
        %v1226 = vmul.f32 %v1207, 1.442695
        %v1227 = vpow.pop %v1226
        %v1228 = vmul.f32 %v1208, 1.442695
        %v1229 = vpow.pop %v1228
        %v1230 = vmul.f32 %v1209, 1.442695
        %v1231 = vpow.pop %v1230
        %v1232 = vmul.f32 %v1210, 1.442695
        %v1233 = vpow.pop %v1232
        %v1234 = vmul.f32 %v1211, 1.442695
        %v1235 = vpow.pop %v1234
        %v1236 = vmul.f32 %v1212, 1.442695
        %v1237 = vpow.pop %v1236
        %v1238 = vmul.f32 %v1213, 1.442695
        %v1239 = vpow.pop %v1238
        %v1240 = vmul.f32 %v1214, 1.442695
        %v1241 = vpow.pop %v1240
        %v1242 = vmul.f32 %v1215, 1.442695
        %v1243 = vpow.pop %v1242
        %v1244 = vmul.f32 %v1216, 1.442695
        %v1245 = vpow.pop %v1244
        %v1246 = vmul.f32 %v1217, 1.442695
        %v1247 = vpow.pop %v1246
        %v1248 = vmul.f32 %v1218, 1.442695
        %v1249 = vpow.pop %v1248
        %v1250 = vmul.f32 %v1219, 1.442695
        %v1251 = vpow.pop %v1250
        %v1252 = vmul.f32 %v1016, %v1221
        %v1253 = vmul.f32 %v1018, %v1223
        %v1254 = vmul.f32 %v1020, %v1225
        %v1255 = vmul.f32 %v1022, %v1227
        %v1256 = vmul.f32 %v1024, %v1229
        %v1257 = vmul.f32 %v1026, %v1231
        %v1258 = vmul.f32 %v1028, %v1233
        %v1259 = vmul.f32 %v1030, %v1235
        %v1260 = vmul.f32 %v1032, %v1237
        %v1261 = vmul.f32 %v1034, %v1239
        %v1262 = vmul.f32 %v1036, %v1241
        %v1263 = vmul.f32 %v1038, %v1243
        %v1264 = vmul.f32 %v1040, %v1245
        %v1265 = vmul.f32 %v1042, %v1247
        %v1266 = vmul.f32 %v1044, %v1249
        %v1267 = vmul.f32 %v1046, %v1251
        %v1268 = vadd.f32 %v1252, %v1253
        %v1269 = vadd.f32 %v1268, %v1254
        %v1270 = vadd.f32 %v1269, %v1255
        %v1271 = vadd.f32 %v1270, %v1256
        %v1272 = vadd.f32 %v1271, %v1257
        %v1273 = vadd.f32 %v1272, %v1258
        %v1274 = vadd.f32 %v1273, %v1259
        %v1275 = vadd.f32 %v1274, %v1260
        %v1276 = vadd.f32 %v1275, %v1261
        %v1277 = vadd.f32 %v1276, %v1262
        %v1278 = vadd.f32 %v1277, %v1263
        %v1279 = vadd.f32 %v1278, %v1264
        %v1280 = vadd.f32 %v1279, %v1265
        %v1281 = vadd.f32 %v1280, %v1266
        %v1282 = vadd.f32 %v1281, %v1267
        %v1283 = vrot.slane %v1282, 4
        %v1284 = vadd.f32 %v1282, %v1283
        %v1285 = vrot.slane %v1284, 2
        %v1286 = vadd.f32 %v1284, %v1285
        %v1287 = vrot.slane %v1286, 1
        %v1288 = vadd.f32 %v1286, %v1287
        %v1289 = vadd.f32 %v1288, 1e-08
        %v1290 = vlog2.pop %v1289
        %v1291 = vmul.f32 %v1290, 0.6931472
        %v1292 = vsub.f32 -4.8520303, %v1291
        %v1293 = vmul.f32 %v1088, %v1292
        %v1294 = vmul.f32 %v1293, 1.442695
        %v1295 = vpow.pop %v1294
        %v1296 = vmul.f32 %v1016, %v1295
        %v1297 = vmul.f32 %v1018, %v1295
        %v1298 = vmul.f32 %v1020, %v1295
        %v1299 = vmul.f32 %v1022, %v1295
        %v1300 = vmul.f32 %v1024, %v1295
        %v1301 = vmul.f32 %v1026, %v1295
        %v1302 = vmul.f32 %v1028, %v1295
        %v1303 = vmul.f32 %v1030, %v1295
        %v1304 = vmul.f32 %v1032, %v1295
        %v1305 = vmul.f32 %v1034, %v1295
        %v1306 = vmul.f32 %v1036, %v1295
        %v1307 = vmul.f32 %v1038, %v1295
        %v1308 = vmul.f32 %v1040, %v1295
        %v1309 = vmul.f32 %v1042, %v1295
        %v1310 = vmul.f32 %v1044, %v1295
        %v1311 = vmul.f32 %v1046, %v1295
        %1312 = vadd.xlane.f32.xlu0 %v1296
        %v1313 = vpop.xlane.xlu0 %1312
        %1314 = vadd.xlane.f32.xlu0 %v1297
        %v1315 = vpop.xlane.xlu0 %1314
        %1316 = vadd.xlane.f32.xlu0 %v1298
        %v1317 = vpop.xlane.xlu0 %1316
        %1318 = vadd.xlane.f32.xlu0 %v1299
        %v1319 = vpop.xlane.xlu0 %1318
        %1320 = vadd.xlane.f32.xlu0 %v1300
        %v1321 = vpop.xlane.xlu0 %1320
        %1322 = vadd.xlane.f32.xlu0 %v1301
        %v1323 = vpop.xlane.xlu0 %1322
        %1324 = vadd.xlane.f32.xlu0 %v1302
        %v1325 = vpop.xlane.xlu0 %1324
        %1326 = vadd.xlane.f32.xlu0 %v1303
        %v1327 = vpop.xlane.xlu0 %1326
        %1328 = vadd.xlane.f32.xlu0 %v1304
        %v1329 = vpop.xlane.xlu0 %1328
        %1330 = vadd.xlane.f32.xlu0 %v1305
        %v1331 = vpop.xlane.xlu0 %1330
        %1332 = vadd.xlane.f32.xlu0 %v1306
        %v1333 = vpop.xlane.xlu0 %1332
        %1334 = vadd.xlane.f32.xlu0 %v1307
        %v1335 = vpop.xlane.xlu0 %1334
        %1336 = vadd.xlane.f32.xlu0 %v1308
        %v1337 = vpop.xlane.xlu0 %1336
        %1338 = vadd.xlane.f32.xlu0 %v1309
        %v1339 = vpop.xlane.xlu0 %1338
        %1340 = vadd.xlane.f32.xlu0 %v1310
        %v1341 = vpop.xlane.xlu0 %1340
        %1342 = vadd.xlane.f32.xlu0 %v1311
        %v1343 = vpop.xlane.xlu0 %1342
        %v1344 = vadd.f32 %v1313, 1e-08
        %v1345 = vadd.f32 %v1315, 1e-08
        %v1346 = vadd.f32 %v1317, 1e-08
        %v1347 = vadd.f32 %v1319, 1e-08
        %v1348 = vadd.f32 %v1321, 1e-08
        %v1349 = vadd.f32 %v1323, 1e-08
        %v1350 = vadd.f32 %v1325, 1e-08
        %v1351 = vadd.f32 %v1327, 1e-08
        %v1352 = vadd.f32 %v1329, 1e-08
        %v1353 = vadd.f32 %v1331, 1e-08
        %v1354 = vadd.f32 %v1333, 1e-08
        %v1355 = vadd.f32 %v1335, 1e-08
        %v1356 = vadd.f32 %v1337, 1e-08
        %v1357 = vadd.f32 %v1339, 1e-08
        %v1358 = vadd.f32 %v1341, 1e-08
        %v1359 = vadd.f32 %v1343, 1e-08
        %v1360 = vlog2.pop %v1344
        %v1361 = vmul.f32 %v1360, 0.6931472
        %v1362 = vlog2.pop %v1345
        %v1363 = vmul.f32 %v1362, 0.6931472
        %v1364 = vlog2.pop %v1346
        %v1365 = vmul.f32 %v1364, 0.6931472
        %v1366 = vlog2.pop %v1347
        %v1367 = vmul.f32 %v1366, 0.6931472
        %v1368 = vlog2.pop %v1348
        %v1369 = vmul.f32 %v1368, 0.6931472
        %v1370 = vlog2.pop %v1349
        %v1371 = vmul.f32 %v1370, 0.6931472
        %v1372 = vlog2.pop %v1350
        %v1373 = vmul.f32 %v1372, 0.6931472
        %v1374 = vlog2.pop %v1351
        %v1375 = vmul.f32 %v1374, 0.6931472
        %v1376 = vlog2.pop %v1352
        %v1377 = vmul.f32 %v1376, 0.6931472
        %v1378 = vlog2.pop %v1353
        %v1379 = vmul.f32 %v1378, 0.6931472
        %v1380 = vlog2.pop %v1354
        %v1381 = vmul.f32 %v1380, 0.6931472
        %v1382 = vlog2.pop %v1355
        %v1383 = vmul.f32 %v1382, 0.6931472
        %v1384 = vlog2.pop %v1356
        %v1385 = vmul.f32 %v1384, 0.6931472
        %v1386 = vlog2.pop %v1357
        %v1387 = vmul.f32 %v1386, 0.6931472
        %v1388 = vlog2.pop %v1358
        %v1389 = vmul.f32 %v1388, 0.6931472
        %v1390 = vlog2.pop %v1359
        %v1391 = vmul.f32 %v1390, 0.6931472
        %v1392 = vsub.f32 -4.8520303, %v1361
        %v1393 = vsub.f32 -4.8520303, %v1363
        %v1394 = vsub.f32 -4.8520303, %v1365
        %v1395 = vsub.f32 -4.8520303, %v1367
        %v1396 = vsub.f32 -4.8520303, %v1369
        %v1397 = vsub.f32 -4.8520303, %v1371
        %v1398 = vsub.f32 -4.8520303, %v1373
        %v1399 = vsub.f32 -4.8520303, %v1375
        %v1400 = vsub.f32 -4.8520303, %v1377
        %v1401 = vsub.f32 -4.8520303, %v1379
        %v1402 = vsub.f32 -4.8520303, %v1381
        %v1403 = vsub.f32 -4.8520303, %v1383
        %v1404 = vsub.f32 -4.8520303, %v1385
        %v1405 = vsub.f32 -4.8520303, %v1387
        %v1406 = vsub.f32 -4.8520303, %v1389
        %v1407 = vsub.f32 -4.8520303, %v1391
        %v1408 = vmul.f32 %v1088, %v1392
        %v1409 = vmul.f32 %v1088, %v1393
        %v1410 = vmul.f32 %v1088, %v1394
        %v1411 = vmul.f32 %v1088, %v1395
        %v1412 = vmul.f32 %v1088, %v1396
        %v1413 = vmul.f32 %v1088, %v1397
        %v1414 = vmul.f32 %v1088, %v1398
        %v1415 = vmul.f32 %v1088, %v1399
        %v1416 = vmul.f32 %v1088, %v1400
        %v1417 = vmul.f32 %v1088, %v1401
        %v1418 = vmul.f32 %v1088, %v1402
        %v1419 = vmul.f32 %v1088, %v1403
        %v1420 = vmul.f32 %v1088, %v1404
        %v1421 = vmul.f32 %v1088, %v1405
        %v1422 = vmul.f32 %v1088, %v1406
        %v1423 = vmul.f32 %v1088, %v1407
        %v1424 = vmul.f32 %v1408, 1.442695
        %v1425 = vpow.pop %v1424
        %v1426 = vmul.f32 %v1409, 1.442695
        %v1427 = vpow.pop %v1426
        %v1428 = vmul.f32 %v1410, 1.442695
        %v1429 = vpow.pop %v1428
        %v1430 = vmul.f32 %v1411, 1.442695
        %v1431 = vpow.pop %v1430
        %v1432 = vmul.f32 %v1412, 1.442695
        %v1433 = vpow.pop %v1432
        %v1434 = vmul.f32 %v1413, 1.442695
        %v1435 = vpow.pop %v1434
        %v1436 = vmul.f32 %v1414, 1.442695
        %v1437 = vpow.pop %v1436
        %v1438 = vmul.f32 %v1415, 1.442695
        %v1439 = vpow.pop %v1438
        %v1440 = vmul.f32 %v1416, 1.442695
        %v1441 = vpow.pop %v1440
        %v1442 = vmul.f32 %v1417, 1.442695
        %v1443 = vpow.pop %v1442
        %v1444 = vmul.f32 %v1418, 1.442695
        %v1445 = vpow.pop %v1444
        %v1446 = vmul.f32 %v1419, 1.442695
        %v1447 = vpow.pop %v1446
        %v1448 = vmul.f32 %v1420, 1.442695
        %v1449 = vpow.pop %v1448
        %v1450 = vmul.f32 %v1421, 1.442695
        %v1451 = vpow.pop %v1450
        %v1452 = vmul.f32 %v1422, 1.442695
        %v1453 = vpow.pop %v1452
        %v1454 = vmul.f32 %v1423, 1.442695
        %v1455 = vpow.pop %v1454
        %v1456 = vmul.f32 %v1016, %v1425
        %v1457 = vmul.f32 %v1018, %v1427
        %v1458 = vmul.f32 %v1020, %v1429
        %v1459 = vmul.f32 %v1022, %v1431
        %v1460 = vmul.f32 %v1024, %v1433
        %v1461 = vmul.f32 %v1026, %v1435
        %v1462 = vmul.f32 %v1028, %v1437
        %v1463 = vmul.f32 %v1030, %v1439
        %v1464 = vmul.f32 %v1032, %v1441
        %v1465 = vmul.f32 %v1034, %v1443
        %v1466 = vmul.f32 %v1036, %v1445
        %v1467 = vmul.f32 %v1038, %v1447
        %v1468 = vmul.f32 %v1040, %v1449
        %v1469 = vmul.f32 %v1042, %v1451
        %v1470 = vmul.f32 %v1044, %v1453
        %v1471 = vmul.f32 %v1046, %v1455
        %v1472 = vadd.f32 %v1456, %v1457
        %v1473 = vadd.f32 %v1472, %v1458
        %v1474 = vadd.f32 %v1473, %v1459
        %v1475 = vadd.f32 %v1474, %v1460
        %v1476 = vadd.f32 %v1475, %v1461
        %v1477 = vadd.f32 %v1476, %v1462
        %v1478 = vadd.f32 %v1477, %v1463
        %v1479 = vadd.f32 %v1478, %v1464
        %v1480 = vadd.f32 %v1479, %v1465
        %v1481 = vadd.f32 %v1480, %v1466
        %v1482 = vadd.f32 %v1481, %v1467
        %v1483 = vadd.f32 %v1482, %v1468
        %v1484 = vadd.f32 %v1483, %v1469
        %v1485 = vadd.f32 %v1484, %v1470
        %v1486 = vadd.f32 %v1485, %v1471
        %v1487 = vrot.slane %v1486, 4
        %v1488 = vadd.f32 %v1486, %v1487
        %v1489 = vrot.slane %v1488, 2
        %v1490 = vadd.f32 %v1488, %v1489
        %v1491 = vrot.slane %v1490, 1
        %v1492 = vadd.f32 %v1490, %v1491
        %v1493 = vadd.f32 %v1492, 1e-08
        %v1494 = vlog2.pop %v1493
        %v1495 = vmul.f32 %v1494, 0.6931472
        %v1496 = vsub.f32 -4.8520303, %v1495
        %v1497 = vmul.f32 %v1088, %v1496
        %v1498 = vmul.f32 %v1497, 1.442695
        %v1499 = vpow.pop %v1498
        %v1500 = vmul.f32 %v1016, %v1499
        %v1501 = vmul.f32 %v1018, %v1499
        %v1502 = vmul.f32 %v1020, %v1499
        %v1503 = vmul.f32 %v1022, %v1499
        %v1504 = vmul.f32 %v1024, %v1499
        %v1505 = vmul.f32 %v1026, %v1499
        %v1506 = vmul.f32 %v1028, %v1499
        %v1507 = vmul.f32 %v1030, %v1499
        %v1508 = vmul.f32 %v1032, %v1499
        %v1509 = vmul.f32 %v1034, %v1499
        %v1510 = vmul.f32 %v1036, %v1499
        %v1511 = vmul.f32 %v1038, %v1499
        %v1512 = vmul.f32 %v1040, %v1499
        %v1513 = vmul.f32 %v1042, %v1499
        %v1514 = vmul.f32 %v1044, %v1499
        %v1515 = vmul.f32 %v1046, %v1499
        %1516 = vadd.xlane.f32.xlu0 %v1500
        %v1517 = vpop.xlane.xlu0 %1516
        %1518 = vadd.xlane.f32.xlu0 %v1501
        %v1519 = vpop.xlane.xlu0 %1518
        %1520 = vadd.xlane.f32.xlu0 %v1502
        %v1521 = vpop.xlane.xlu0 %1520
        %1522 = vadd.xlane.f32.xlu0 %v1503
        %v1523 = vpop.xlane.xlu0 %1522
        %1524 = vadd.xlane.f32.xlu0 %v1504
        %v1525 = vpop.xlane.xlu0 %1524
        %1526 = vadd.xlane.f32.xlu0 %v1505
        %v1527 = vpop.xlane.xlu0 %1526
        %1528 = vadd.xlane.f32.xlu0 %v1506
        %v1529 = vpop.xlane.xlu0 %1528
        %1530 = vadd.xlane.f32.xlu0 %v1507
        %v1531 = vpop.xlane.xlu0 %1530
        %1532 = vadd.xlane.f32.xlu0 %v1508
        %v1533 = vpop.xlane.xlu0 %1532
        %1534 = vadd.xlane.f32.xlu0 %v1509
        %v1535 = vpop.xlane.xlu0 %1534
        %1536 = vadd.xlane.f32.xlu0 %v1510
        %v1537 = vpop.xlane.xlu0 %1536
        %1538 = vadd.xlane.f32.xlu0 %v1511
        %v1539 = vpop.xlane.xlu0 %1538
        %1540 = vadd.xlane.f32.xlu0 %v1512
        %v1541 = vpop.xlane.xlu0 %1540
        %1542 = vadd.xlane.f32.xlu0 %v1513
        %v1543 = vpop.xlane.xlu0 %1542
        %1544 = vadd.xlane.f32.xlu0 %v1514
        %v1545 = vpop.xlane.xlu0 %1544
        %1546 = vadd.xlane.f32.xlu0 %v1515
        %v1547 = vpop.xlane.xlu0 %1546
        %v1548 = vadd.f32 %v1517, 1e-08
        %v1549 = vadd.f32 %v1519, 1e-08
        %v1550 = vadd.f32 %v1521, 1e-08
        %v1551 = vadd.f32 %v1523, 1e-08
        %v1552 = vadd.f32 %v1525, 1e-08
        %v1553 = vadd.f32 %v1527, 1e-08
        %v1554 = vadd.f32 %v1529, 1e-08
        %v1555 = vadd.f32 %v1531, 1e-08
        %v1556 = vadd.f32 %v1533, 1e-08
        %v1557 = vadd.f32 %v1535, 1e-08
        %v1558 = vadd.f32 %v1537, 1e-08
        %v1559 = vadd.f32 %v1539, 1e-08
        %v1560 = vadd.f32 %v1541, 1e-08
        %v1561 = vadd.f32 %v1543, 1e-08
        %v1562 = vadd.f32 %v1545, 1e-08
        %v1563 = vadd.f32 %v1547, 1e-08
        %v1564 = vlog2.pop %v1548
        %v1565 = vmul.f32 %v1564, 0.6931472
        %v1566 = vlog2.pop %v1549
        %v1567 = vmul.f32 %v1566, 0.6931472
        %v1568 = vlog2.pop %v1550
        %v1569 = vmul.f32 %v1568, 0.6931472
        %v1570 = vlog2.pop %v1551
        %v1571 = vmul.f32 %v1570, 0.6931472
        %v1572 = vlog2.pop %v1552
        %v1573 = vmul.f32 %v1572, 0.6931472
        %v1574 = vlog2.pop %v1553
        %v1575 = vmul.f32 %v1574, 0.6931472
        %v1576 = vlog2.pop %v1554
        %v1577 = vmul.f32 %v1576, 0.6931472
        %v1578 = vlog2.pop %v1555
        %v1579 = vmul.f32 %v1578, 0.6931472
        %v1580 = vlog2.pop %v1556
        %v1581 = vmul.f32 %v1580, 0.6931472
        %v1582 = vlog2.pop %v1557
        %v1583 = vmul.f32 %v1582, 0.6931472
        %v1584 = vlog2.pop %v1558
        %v1585 = vmul.f32 %v1584, 0.6931472
        %v1586 = vlog2.pop %v1559
        %v1587 = vmul.f32 %v1586, 0.6931472
        %v1588 = vlog2.pop %v1560
        %v1589 = vmul.f32 %v1588, 0.6931472
        %v1590 = vlog2.pop %v1561
        %v1591 = vmul.f32 %v1590, 0.6931472
        %v1592 = vlog2.pop %v1562
        %v1593 = vmul.f32 %v1592, 0.6931472
        %v1594 = vlog2.pop %v1563
        %v1595 = vmul.f32 %v1594, 0.6931472
        %v1596 = vsub.f32 -4.8520303, %v1565
        %v1597 = vsub.f32 -4.8520303, %v1567
        %v1598 = vsub.f32 -4.8520303, %v1569
        %v1599 = vsub.f32 -4.8520303, %v1571
        %v1600 = vsub.f32 -4.8520303, %v1573
        %v1601 = vsub.f32 -4.8520303, %v1575
        %v1602 = vsub.f32 -4.8520303, %v1577
        %v1603 = vsub.f32 -4.8520303, %v1579
        %v1604 = vsub.f32 -4.8520303, %v1581
        %v1605 = vsub.f32 -4.8520303, %v1583
        %v1606 = vsub.f32 -4.8520303, %v1585
        %v1607 = vsub.f32 -4.8520303, %v1587
        %v1608 = vsub.f32 -4.8520303, %v1589
        %v1609 = vsub.f32 -4.8520303, %v1591
        %v1610 = vsub.f32 -4.8520303, %v1593
        %v1611 = vsub.f32 -4.8520303, %v1595
        %v1612 = vmul.f32 %v1088, %v1596
        %v1613 = vmul.f32 %v1088, %v1597
        %v1614 = vmul.f32 %v1088, %v1598
        %v1615 = vmul.f32 %v1088, %v1599
        %v1616 = vmul.f32 %v1088, %v1600
        %v1617 = vmul.f32 %v1088, %v1601
        %v1618 = vmul.f32 %v1088, %v1602
        %v1619 = vmul.f32 %v1088, %v1603
        %v1620 = vmul.f32 %v1088, %v1604
        %v1621 = vmul.f32 %v1088, %v1605
        %v1622 = vmul.f32 %v1088, %v1606
        %v1623 = vmul.f32 %v1088, %v1607
        %v1624 = vmul.f32 %v1088, %v1608
        %v1625 = vmul.f32 %v1088, %v1609
        %v1626 = vmul.f32 %v1088, %v1610
        %v1627 = vmul.f32 %v1088, %v1611
        %v1628 = vmul.f32 %v1612, 1.442695
        %v1629 = vpow.pop %v1628
        %v1630 = vmul.f32 %v1613, 1.442695
        %v1631 = vpow.pop %v1630
        %v1632 = vmul.f32 %v1614, 1.442695
        %v1633 = vpow.pop %v1632
        %v1634 = vmul.f32 %v1615, 1.442695
        %v1635 = vpow.pop %v1634
        %v1636 = vmul.f32 %v1616, 1.442695
        %v1637 = vpow.pop %v1636
        %v1638 = vmul.f32 %v1617, 1.442695
        %v1639 = vpow.pop %v1638
        %v1640 = vmul.f32 %v1618, 1.442695
        %v1641 = vpow.pop %v1640
        %v1642 = vmul.f32 %v1619, 1.442695
        %v1643 = vpow.pop %v1642
        %v1644 = vmul.f32 %v1620, 1.442695
        %v1645 = vpow.pop %v1644
        %v1646 = vmul.f32 %v1621, 1.442695
        %v1647 = vpow.pop %v1646
        %v1648 = vmul.f32 %v1622, 1.442695
        %v1649 = vpow.pop %v1648
        %v1650 = vmul.f32 %v1623, 1.442695
        %v1651 = vpow.pop %v1650
        %v1652 = vmul.f32 %v1624, 1.442695
        %v1653 = vpow.pop %v1652
        %v1654 = vmul.f32 %v1625, 1.442695
        %v1655 = vpow.pop %v1654
        %v1656 = vmul.f32 %v1626, 1.442695
        %v1657 = vpow.pop %v1656
        %v1658 = vmul.f32 %v1627, 1.442695
        %v1659 = vpow.pop %v1658
        %v1660 = vmul.f32 %v1016, %v1629
        %v1661 = vmul.f32 %v1018, %v1631
        %v1662 = vmul.f32 %v1020, %v1633
        %v1663 = vmul.f32 %v1022, %v1635
        %v1664 = vmul.f32 %v1024, %v1637
        %v1665 = vmul.f32 %v1026, %v1639
        %v1666 = vmul.f32 %v1028, %v1641
        %v1667 = vmul.f32 %v1030, %v1643
        %v1668 = vmul.f32 %v1032, %v1645
        %v1669 = vmul.f32 %v1034, %v1647
        %v1670 = vmul.f32 %v1036, %v1649
        %v1671 = vmul.f32 %v1038, %v1651
        %v1672 = vmul.f32 %v1040, %v1653
        %v1673 = vmul.f32 %v1042, %v1655
        %v1674 = vmul.f32 %v1044, %v1657
        %v1675 = vmul.f32 %v1046, %v1659
        %v1676 = vadd.f32 %v1660, %v1661
        %v1677 = vadd.f32 %v1676, %v1662
        %v1678 = vadd.f32 %v1677, %v1663
        %v1679 = vadd.f32 %v1678, %v1664
        %v1680 = vadd.f32 %v1679, %v1665
        %v1681 = vadd.f32 %v1680, %v1666
        %v1682 = vadd.f32 %v1681, %v1667
        %v1683 = vadd.f32 %v1682, %v1668
        %v1684 = vadd.f32 %v1683, %v1669
        %v1685 = vadd.f32 %v1684, %v1670
        %v1686 = vadd.f32 %v1685, %v1671
        %v1687 = vadd.f32 %v1686, %v1672
        %v1688 = vadd.f32 %v1687, %v1673
        %v1689 = vadd.f32 %v1688, %v1674
        %v1690 = vadd.f32 %v1689, %v1675
        %v1691 = vrot.slane %v1690, 4
        %v1692 = vadd.f32 %v1690, %v1691
        %v1693 = vrot.slane %v1692, 2
        %v1694 = vadd.f32 %v1692, %v1693
        %v1695 = vrot.slane %v1694, 1
        %v1696 = vadd.f32 %v1694, %v1695
        %v1697 = vadd.f32 %v1696, 1e-08
        %v1698 = vlog2.pop %v1697
        %v1699 = vmul.f32 %v1698, 0.6931472
        %v1700 = vsub.f32 -4.8520303, %v1699
        %v1701 = vmul.f32 %v1088, %v1700
        %v1702 = vmul.f32 %v1701, 1.442695
        %v1703 = vpow.pop %v1702
        %v1704 = vmul.f32 %v1016, %v1703
        %v1705 = vmul.f32 %v1018, %v1703
        %v1706 = vmul.f32 %v1020, %v1703
        %v1707 = vmul.f32 %v1022, %v1703
        %v1708 = vmul.f32 %v1024, %v1703
        %v1709 = vmul.f32 %v1026, %v1703
        %v1710 = vmul.f32 %v1028, %v1703
        %v1711 = vmul.f32 %v1030, %v1703
        %v1712 = vmul.f32 %v1032, %v1703
        %v1713 = vmul.f32 %v1034, %v1703
        %v1714 = vmul.f32 %v1036, %v1703
        %v1715 = vmul.f32 %v1038, %v1703
        %v1716 = vmul.f32 %v1040, %v1703
        %v1717 = vmul.f32 %v1042, %v1703
        %v1718 = vmul.f32 %v1044, %v1703
        %v1719 = vmul.f32 %v1046, %v1703
        %1720 = vadd.xlane.f32.xlu0 %v1704
        %v1721 = vpop.xlane.xlu0 %1720
        %1722 = vadd.xlane.f32.xlu0 %v1705
        %v1723 = vpop.xlane.xlu0 %1722
        %1724 = vadd.xlane.f32.xlu0 %v1706
        %v1725 = vpop.xlane.xlu0 %1724
        %1726 = vadd.xlane.f32.xlu0 %v1707
        %v1727 = vpop.xlane.xlu0 %1726
        %1728 = vadd.xlane.f32.xlu0 %v1708
        %v1729 = vpop.xlane.xlu0 %1728
        %1730 = vadd.xlane.f32.xlu0 %v1709
        %v1731 = vpop.xlane.xlu0 %1730
        %1732 = vadd.xlane.f32.xlu0 %v1710
        %v1733 = vpop.xlane.xlu0 %1732
        %1734 = vadd.xlane.f32.xlu0 %v1711
        %v1735 = vpop.xlane.xlu0 %1734
        %1736 = vadd.xlane.f32.xlu0 %v1712
        %v1737 = vpop.xlane.xlu0 %1736
        %1738 = vadd.xlane.f32.xlu0 %v1713
        %v1739 = vpop.xlane.xlu0 %1738
        %1740 = vadd.xlane.f32.xlu0 %v1714
        %v1741 = vpop.xlane.xlu0 %1740
        %1742 = vadd.xlane.f32.xlu0 %v1715
        %v1743 = vpop.xlane.xlu0 %1742
        %1744 = vadd.xlane.f32.xlu0 %v1716
        %v1745 = vpop.xlane.xlu0 %1744
        %1746 = vadd.xlane.f32.xlu0 %v1717
        %v1747 = vpop.xlane.xlu0 %1746
        %1748 = vadd.xlane.f32.xlu0 %v1718
        %v1749 = vpop.xlane.xlu0 %1748
        %1750 = vadd.xlane.f32.xlu0 %v1719
        %v1751 = vpop.xlane.xlu0 %1750
        %v1752 = vadd.f32 %v1721, 1e-08
        %v1753 = vadd.f32 %v1723, 1e-08
        %v1754 = vadd.f32 %v1725, 1e-08
        %v1755 = vadd.f32 %v1727, 1e-08
        %v1756 = vadd.f32 %v1729, 1e-08
        %v1757 = vadd.f32 %v1731, 1e-08
        %v1758 = vadd.f32 %v1733, 1e-08
        %v1759 = vadd.f32 %v1735, 1e-08
        %v1760 = vadd.f32 %v1737, 1e-08
        %v1761 = vadd.f32 %v1739, 1e-08
        %v1762 = vadd.f32 %v1741, 1e-08
        %v1763 = vadd.f32 %v1743, 1e-08
        %v1764 = vadd.f32 %v1745, 1e-08
        %v1765 = vadd.f32 %v1747, 1e-08
        %v1766 = vadd.f32 %v1749, 1e-08
        %v1767 = vadd.f32 %v1751, 1e-08
        %v1768 = vlog2.pop %v1752
        %v1769 = vmul.f32 %v1768, 0.6931472
        %v1770 = vlog2.pop %v1753
        %v1771 = vmul.f32 %v1770, 0.6931472
        %v1772 = vlog2.pop %v1754
        %v1773 = vmul.f32 %v1772, 0.6931472
        %v1774 = vlog2.pop %v1755
        %v1775 = vmul.f32 %v1774, 0.6931472
        %v1776 = vlog2.pop %v1756
        %v1777 = vmul.f32 %v1776, 0.6931472
        %v1778 = vlog2.pop %v1757
        %v1779 = vmul.f32 %v1778, 0.6931472
        %v1780 = vlog2.pop %v1758
        %v1781 = vmul.f32 %v1780, 0.6931472
        %v1782 = vlog2.pop %v1759
        %v1783 = vmul.f32 %v1782, 0.6931472
        %v1784 = vlog2.pop %v1760
        %v1785 = vmul.f32 %v1784, 0.6931472
        %v1786 = vlog2.pop %v1761
        %v1787 = vmul.f32 %v1786, 0.6931472
        %v1788 = vlog2.pop %v1762
        %v1789 = vmul.f32 %v1788, 0.6931472
        %v1790 = vlog2.pop %v1763
        %v1791 = vmul.f32 %v1790, 0.6931472
        %v1792 = vlog2.pop %v1764
        %v1793 = vmul.f32 %v1792, 0.6931472
        %v1794 = vlog2.pop %v1765
        %v1795 = vmul.f32 %v1794, 0.6931472
        %v1796 = vlog2.pop %v1766
        %v1797 = vmul.f32 %v1796, 0.6931472
        %v1798 = vlog2.pop %v1767
        %v1799 = vmul.f32 %v1798, 0.6931472
        %v1800 = vsub.f32 -4.8520303, %v1769
        %v1801 = vsub.f32 -4.8520303, %v1771
        %v1802 = vsub.f32 -4.8520303, %v1773
        %v1803 = vsub.f32 -4.8520303, %v1775
        %v1804 = vsub.f32 -4.8520303, %v1777
        %v1805 = vsub.f32 -4.8520303, %v1779
        %v1806 = vsub.f32 -4.8520303, %v1781
        %v1807 = vsub.f32 -4.8520303, %v1783
        %v1808 = vsub.f32 -4.8520303, %v1785
        %v1809 = vsub.f32 -4.8520303, %v1787
        %v1810 = vsub.f32 -4.8520303, %v1789
        %v1811 = vsub.f32 -4.8520303, %v1791
        %v1812 = vsub.f32 -4.8520303, %v1793
        %v1813 = vsub.f32 -4.8520303, %v1795
        %v1814 = vsub.f32 -4.8520303, %v1797
        %v1815 = vsub.f32 -4.8520303, %v1799
        %v1816 = vmul.f32 %v1088, %v1800
        %v1817 = vmul.f32 %v1088, %v1801
        %v1818 = vmul.f32 %v1088, %v1802
        %v1819 = vmul.f32 %v1088, %v1803
        %v1820 = vmul.f32 %v1088, %v1804
        %v1821 = vmul.f32 %v1088, %v1805
        %v1822 = vmul.f32 %v1088, %v1806
        %v1823 = vmul.f32 %v1088, %v1807
        %v1824 = vmul.f32 %v1088, %v1808
        %v1825 = vmul.f32 %v1088, %v1809
        %v1826 = vmul.f32 %v1088, %v1810
        %v1827 = vmul.f32 %v1088, %v1811
        %v1828 = vmul.f32 %v1088, %v1812
        %v1829 = vmul.f32 %v1088, %v1813
        %v1830 = vmul.f32 %v1088, %v1814
        %v1831 = vmul.f32 %v1088, %v1815
        %v1832 = vmul.f32 %v1816, 1.442695
        %v1833 = vpow.pop %v1832
        %v1834 = vmul.f32 %v1817, 1.442695
        %v1835 = vpow.pop %v1834
        %v1836 = vmul.f32 %v1818, 1.442695
        %v1837 = vpow.pop %v1836
        %v1838 = vmul.f32 %v1819, 1.442695
        %v1839 = vpow.pop %v1838
        %v1840 = vmul.f32 %v1820, 1.442695
        %v1841 = vpow.pop %v1840
        %v1842 = vmul.f32 %v1821, 1.442695
        %v1843 = vpow.pop %v1842
        %v1844 = vmul.f32 %v1822, 1.442695
        %v1845 = vpow.pop %v1844
        %v1846 = vmul.f32 %v1823, 1.442695
        %v1847 = vpow.pop %v1846
        %v1848 = vmul.f32 %v1824, 1.442695
        %v1849 = vpow.pop %v1848
        %v1850 = vmul.f32 %v1825, 1.442695
        %v1851 = vpow.pop %v1850
        %v1852 = vmul.f32 %v1826, 1.442695
        %v1853 = vpow.pop %v1852
        %v1854 = vmul.f32 %v1827, 1.442695
        %v1855 = vpow.pop %v1854
        %v1856 = vmul.f32 %v1828, 1.442695
        %v1857 = vpow.pop %v1856
        %v1858 = vmul.f32 %v1829, 1.442695
        %v1859 = vpow.pop %v1858
        %v1860 = vmul.f32 %v1830, 1.442695
        %v1861 = vpow.pop %v1860
        %v1862 = vmul.f32 %v1831, 1.442695
        %v1863 = vpow.pop %v1862
        %v1864 = vmul.f32 %v1016, %v1833
        %v1865 = vmul.f32 %v1018, %v1835
        %v1866 = vmul.f32 %v1020, %v1837
        %v1867 = vmul.f32 %v1022, %v1839
        %v1868 = vmul.f32 %v1024, %v1841
        %v1869 = vmul.f32 %v1026, %v1843
        %v1870 = vmul.f32 %v1028, %v1845
        %v1871 = vmul.f32 %v1030, %v1847
        %v1872 = vmul.f32 %v1032, %v1849
        %v1873 = vmul.f32 %v1034, %v1851
        %v1874 = vmul.f32 %v1036, %v1853
        %v1875 = vmul.f32 %v1038, %v1855
        %v1876 = vmul.f32 %v1040, %v1857
        %v1877 = vmul.f32 %v1042, %v1859
        %v1878 = vmul.f32 %v1044, %v1861
        %v1879 = vmul.f32 %v1046, %v1863
        %v1880 = vadd.f32 %v1864, %v1865
        %v1881 = vadd.f32 %v1880, %v1866
        %v1882 = vadd.f32 %v1881, %v1867
        %v1883 = vadd.f32 %v1882, %v1868
        %v1884 = vadd.f32 %v1883, %v1869
        %v1885 = vadd.f32 %v1884, %v1870
        %v1886 = vadd.f32 %v1885, %v1871
        %v1887 = vadd.f32 %v1886, %v1872
        %v1888 = vadd.f32 %v1887, %v1873
        %v1889 = vadd.f32 %v1888, %v1874
        %v1890 = vadd.f32 %v1889, %v1875
        %v1891 = vadd.f32 %v1890, %v1876
        %v1892 = vadd.f32 %v1891, %v1877
        %v1893 = vadd.f32 %v1892, %v1878
        %v1894 = vadd.f32 %v1893, %v1879
        %v1895 = vrot.slane %v1894, 4
        %v1896 = vadd.f32 %v1894, %v1895
        %v1897 = vrot.slane %v1896, 2
        %v1898 = vadd.f32 %v1896, %v1897
        %v1899 = vrot.slane %v1898, 1
        %v1900 = vadd.f32 %v1898, %v1899
        %v1901 = vadd.f32 %v1900, 1e-08
        %v1902 = vlog2.pop %v1901
        %v1903 = vmul.f32 %v1902, 0.6931472
        %v1904 = vsub.f32 -4.8520303, %v1903
        %v1905 = vmul.f32 %v1088, %v1904
        %v1906 = vmul.f32 %v1905, 1.442695
        %v1907 = vpow.pop %v1906
        %v1908 = vmul.f32 %v1016, %v1907
        %v1909 = vmul.f32 %v1018, %v1907
        %v1910 = vmul.f32 %v1020, %v1907
        %v1911 = vmul.f32 %v1022, %v1907
        %v1912 = vmul.f32 %v1024, %v1907
        %v1913 = vmul.f32 %v1026, %v1907
        %v1914 = vmul.f32 %v1028, %v1907
        %v1915 = vmul.f32 %v1030, %v1907
        %v1916 = vmul.f32 %v1032, %v1907
        %v1917 = vmul.f32 %v1034, %v1907
        %v1918 = vmul.f32 %v1036, %v1907
        %v1919 = vmul.f32 %v1038, %v1907
        %v1920 = vmul.f32 %v1040, %v1907
        %v1921 = vmul.f32 %v1042, %v1907
        %v1922 = vmul.f32 %v1044, %v1907
        %v1923 = vmul.f32 %v1046, %v1907
        %1924 = vadd.xlane.f32.xlu0 %v1908
        %v1925 = vpop.xlane.xlu0 %1924
        %1926 = vadd.xlane.f32.xlu0 %v1909
        %v1927 = vpop.xlane.xlu0 %1926
        %1928 = vadd.xlane.f32.xlu0 %v1910
        %v1929 = vpop.xlane.xlu0 %1928
        %1930 = vadd.xlane.f32.xlu0 %v1911
        %v1931 = vpop.xlane.xlu0 %1930
        %1932 = vadd.xlane.f32.xlu0 %v1912
        %v1933 = vpop.xlane.xlu0 %1932
        %1934 = vadd.xlane.f32.xlu0 %v1913
        %v1935 = vpop.xlane.xlu0 %1934
        %1936 = vadd.xlane.f32.xlu0 %v1914
        %v1937 = vpop.xlane.xlu0 %1936
        %1938 = vadd.xlane.f32.xlu0 %v1915
        %v1939 = vpop.xlane.xlu0 %1938
        %1940 = vadd.xlane.f32.xlu0 %v1916
        %v1941 = vpop.xlane.xlu0 %1940
        %1942 = vadd.xlane.f32.xlu0 %v1917
        %v1943 = vpop.xlane.xlu0 %1942
        %1944 = vadd.xlane.f32.xlu0 %v1918
        %v1945 = vpop.xlane.xlu0 %1944
        %1946 = vadd.xlane.f32.xlu0 %v1919
        %v1947 = vpop.xlane.xlu0 %1946
        %1948 = vadd.xlane.f32.xlu0 %v1920
        %v1949 = vpop.xlane.xlu0 %1948
        %1950 = vadd.xlane.f32.xlu0 %v1921
        %v1951 = vpop.xlane.xlu0 %1950
        %1952 = vadd.xlane.f32.xlu0 %v1922
        %v1953 = vpop.xlane.xlu0 %1952
        %1954 = vadd.xlane.f32.xlu0 %v1923
        %v1955 = vpop.xlane.xlu0 %1954
        %v1956 = vadd.f32 %v1925, 1e-08
        %v1957 = vadd.f32 %v1927, 1e-08
        %v1958 = vadd.f32 %v1929, 1e-08
        %v1959 = vadd.f32 %v1931, 1e-08
        %v1960 = vadd.f32 %v1933, 1e-08
        %v1961 = vadd.f32 %v1935, 1e-08
        %v1962 = vadd.f32 %v1937, 1e-08
        %v1963 = vadd.f32 %v1939, 1e-08
        %v1964 = vadd.f32 %v1941, 1e-08
        %v1965 = vadd.f32 %v1943, 1e-08
        %v1966 = vadd.f32 %v1945, 1e-08
        %v1967 = vadd.f32 %v1947, 1e-08
        %v1968 = vadd.f32 %v1949, 1e-08
        %v1969 = vadd.f32 %v1951, 1e-08
        %v1970 = vadd.f32 %v1953, 1e-08
        %v1971 = vadd.f32 %v1955, 1e-08
        %v1972 = vlog2.pop %v1956
        %v1973 = vmul.f32 %v1972, 0.6931472
        %v1974 = vlog2.pop %v1957
        %v1975 = vmul.f32 %v1974, 0.6931472
        %v1976 = vlog2.pop %v1958
        %v1977 = vmul.f32 %v1976, 0.6931472
        %v1978 = vlog2.pop %v1959
        %v1979 = vmul.f32 %v1978, 0.6931472
        %v1980 = vlog2.pop %v1960
        %v1981 = vmul.f32 %v1980, 0.6931472
        %v1982 = vlog2.pop %v1961
        %v1983 = vmul.f32 %v1982, 0.6931472
        %v1984 = vlog2.pop %v1962
        %v1985 = vmul.f32 %v1984, 0.6931472
        %v1986 = vlog2.pop %v1963
        %v1987 = vmul.f32 %v1986, 0.6931472
        %v1988 = vlog2.pop %v1964
        %v1989 = vmul.f32 %v1988, 0.6931472
        %v1990 = vlog2.pop %v1965
        %v1991 = vmul.f32 %v1990, 0.6931472
        %v1992 = vlog2.pop %v1966
        %v1993 = vmul.f32 %v1992, 0.6931472
        %v1994 = vlog2.pop %v1967
        %v1995 = vmul.f32 %v1994, 0.6931472
        %v1996 = vlog2.pop %v1968
        %v1997 = vmul.f32 %v1996, 0.6931472
        %v1998 = vlog2.pop %v1969
        %v1999 = vmul.f32 %v1998, 0.6931472
        %v2000 = vlog2.pop %v1970
        %v2001 = vmul.f32 %v2000, 0.6931472
        %v2002 = vlog2.pop %v1971
        %v2003 = vmul.f32 %v2002, 0.6931472
        %v2004 = vsub.f32 -4.8520303, %v1973
        %v2005 = vsub.f32 -4.8520303, %v1975
        %v2006 = vsub.f32 -4.8520303, %v1977
        %v2007 = vsub.f32 -4.8520303, %v1979
        %v2008 = vsub.f32 -4.8520303, %v1981
        %v2009 = vsub.f32 -4.8520303, %v1983
        %v2010 = vsub.f32 -4.8520303, %v1985
        %v2011 = vsub.f32 -4.8520303, %v1987
        %v2012 = vsub.f32 -4.8520303, %v1989
        %v2013 = vsub.f32 -4.8520303, %v1991
        %v2014 = vsub.f32 -4.8520303, %v1993
        %v2015 = vsub.f32 -4.8520303, %v1995
        %v2016 = vsub.f32 -4.8520303, %v1997
        %v2017 = vsub.f32 -4.8520303, %v1999
        %v2018 = vsub.f32 -4.8520303, %v2001
        %v2019 = vsub.f32 -4.8520303, %v2003
        %v2020 = vmul.f32 %v1088, %v2004
        %v2021 = vmul.f32 %v1088, %v2005
        %v2022 = vmul.f32 %v1088, %v2006
        %v2023 = vmul.f32 %v1088, %v2007
        %v2024 = vmul.f32 %v1088, %v2008
        %v2025 = vmul.f32 %v1088, %v2009
        %v2026 = vmul.f32 %v1088, %v2010
        %v2027 = vmul.f32 %v1088, %v2011
        %v2028 = vmul.f32 %v1088, %v2012
        %v2029 = vmul.f32 %v1088, %v2013
        %v2030 = vmul.f32 %v1088, %v2014
        %v2031 = vmul.f32 %v1088, %v2015
        %v2032 = vmul.f32 %v1088, %v2016
        %v2033 = vmul.f32 %v1088, %v2017
        %v2034 = vmul.f32 %v1088, %v2018
        %v2035 = vmul.f32 %v1088, %v2019
        %v2036 = vmul.f32 %v2020, 1.442695
        %v2037 = vpow.pop %v2036
        %v2038 = vmul.f32 %v2021, 1.442695
        %v2039 = vpow.pop %v2038
        %v2040 = vmul.f32 %v2022, 1.442695
        %v2041 = vpow.pop %v2040
        %v2042 = vmul.f32 %v2023, 1.442695
        %v2043 = vpow.pop %v2042
        %v2044 = vmul.f32 %v2024, 1.442695
        %v2045 = vpow.pop %v2044
        %v2046 = vmul.f32 %v2025, 1.442695
        %v2047 = vpow.pop %v2046
        %v2048 = vmul.f32 %v2026, 1.442695
        %v2049 = vpow.pop %v2048
        %v2050 = vmul.f32 %v2027, 1.442695
        %v2051 = vpow.pop %v2050
        %v2052 = vmul.f32 %v2028, 1.442695
        %v2053 = vpow.pop %v2052
        %v2054 = vmul.f32 %v2029, 1.442695
        %v2055 = vpow.pop %v2054
        %v2056 = vmul.f32 %v2030, 1.442695
        %v2057 = vpow.pop %v2056
        %v2058 = vmul.f32 %v2031, 1.442695
        %v2059 = vpow.pop %v2058
        %v2060 = vmul.f32 %v2032, 1.442695
        %v2061 = vpow.pop %v2060
        %v2062 = vmul.f32 %v2033, 1.442695
        %v2063 = vpow.pop %v2062
        %v2064 = vmul.f32 %v2034, 1.442695
        %v2065 = vpow.pop %v2064
        %v2066 = vmul.f32 %v2035, 1.442695
        %v2067 = vpow.pop %v2066
        %v2068 = vmul.f32 %v2037, %v1016
        %v2069 = vmul.f32 %v2039, %v1018
        %v2070 = vmul.f32 %v2041, %v1020
        %v2071 = vmul.f32 %v2043, %v1022
        %v2072 = vmul.f32 %v2045, %v1024
        %v2073 = vmul.f32 %v2047, %v1026
        %v2074 = vmul.f32 %v2049, %v1028
        %v2075 = vmul.f32 %v2051, %v1030
        %v2076 = vmul.f32 %v2053, %v1032
        %v2077 = vmul.f32 %v2055, %v1034
        %v2078 = vmul.f32 %v2057, %v1036
        %v2079 = vmul.f32 %v2059, %v1038
        %v2080 = vmul.f32 %v2061, %v1040
        %v2081 = vmul.f32 %v2063, %v1042
        %v2082 = vmul.f32 %v2065, %v1044
        %v2083 = vmul.f32 %v2067, %v1046
        %v2084 = vmul.f32 %v2068, %v1907
        %v2085 = vmul.f32 %v2069, %v1907
        %v2086 = vmul.f32 %v2070, %v1907
        %v2087 = vmul.f32 %v2071, %v1907
        %v2088 = vmul.f32 %v2072, %v1907
        %v2089 = vmul.f32 %v2073, %v1907
        %v2090 = vmul.f32 %v2074, %v1907
        %v2091 = vmul.f32 %v2075, %v1907
        %v2092 = vmul.f32 %v2076, %v1907
        %v2093 = vmul.f32 %v2077, %v1907
        %v2094 = vmul.f32 %v2078, %v1907
        %v2095 = vmul.f32 %v2079, %v1907
        %v2096 = vmul.f32 %v2080, %v1907
        %v2097 = vmul.f32 %v2081, %v1907
        %v2098 = vmul.f32 %v2082, %v1907
        %v2099 = vmul.f32 %v2083, %v1907
        %2100 = vadd.xlane.f32.xlu0 %v2084
        %v2101 = vpop.xlane.xlu0 %2100
        %2102 = vadd.xlane.f32.xlu0 %v2085
        %v2103 = vpop.xlane.xlu0 %2102
        %2104 = vadd.xlane.f32.xlu0 %v2086
        %v2105 = vpop.xlane.xlu0 %2104
        %2106 = vadd.xlane.f32.xlu0 %v2087
        %v2107 = vpop.xlane.xlu0 %2106
        %2108 = vadd.xlane.f32.xlu0 %v2088
        %v2109 = vpop.xlane.xlu0 %2108
        %2110 = vadd.xlane.f32.xlu0 %v2089
        %v2111 = vpop.xlane.xlu0 %2110
        %2112 = vadd.xlane.f32.xlu0 %v2090
        %v2113 = vpop.xlane.xlu0 %2112
        %2114 = vadd.xlane.f32.xlu0 %v2091
        %v2115 = vpop.xlane.xlu0 %2114
        %2116 = vadd.xlane.f32.xlu0 %v2092
        %v2117 = vpop.xlane.xlu0 %2116
        %2118 = vadd.xlane.f32.xlu0 %v2093
        %v2119 = vpop.xlane.xlu0 %2118
        %2120 = vadd.xlane.f32.xlu0 %v2094
        %v2121 = vpop.xlane.xlu0 %2120
        %2122 = vadd.xlane.f32.xlu0 %v2095
        %v2123 = vpop.xlane.xlu0 %2122
        %2124 = vadd.xlane.f32.xlu0 %v2096
        %v2125 = vpop.xlane.xlu0 %2124
        %2126 = vadd.xlane.f32.xlu0 %v2097
        %v2127 = vpop.xlane.xlu0 %2126
        %2128 = vadd.xlane.f32.xlu0 %v2098
        %v2129 = vpop.xlane.xlu0 %2128
        %2130 = vadd.xlane.f32.xlu0 %v2099
        %v2131 = vpop.xlane.xlu0 %2130
        %v2132 = vld [vmem:[%s683] sm:$0xff]
        %v2133 = vld [vmem:[%s683 + $0x8] sm:$0xff]
        %v2134 = vld [vmem:[%s683 + $0x10] sm:$0xff]
        %v2135 = vld [vmem:[%s683 + $0x18] sm:$0xff]
        %v2136 = vld [vmem:[%s683 + $0x20] sm:$0xff]
        %v2137 = vld [vmem:[%s683 + $0x28] sm:$0xff]
        %v2138 = vld [vmem:[%s683 + $0x30] sm:$0xff]
        %v2139 = vld [vmem:[%s683 + $0x38] sm:$0xff]
        %v2140 = vld [vmem:[%s683 + $0x40] sm:$0xff]
        %v2141 = vld [vmem:[%s683 + $0x48] sm:$0xff]
        %v2142 = vld [vmem:[%s683 + $0x50] sm:$0xff]
        %v2143 = vld [vmem:[%s683 + $0x58] sm:$0xff]
        %v2144 = vld [vmem:[%s683 + $0x60] sm:$0xff]
        %v2145 = vld [vmem:[%s683 + $0x68] sm:$0xff]
        %v2146 = vld [vmem:[%s683 + $0x70] sm:$0xff]
        %v2147 = vld [vmem:[%s683 + $0x78] sm:$0xff]
        %v2148 = vld [vmem:[%s688] sm:$0xff]
        %v2149 = vld [vmem:[%s688 + $0x8] sm:$0xff]
        %v2150 = vld [vmem:[%s688 + $0x10] sm:$0xff]
        %v2151 = vld [vmem:[%s688 + $0x18] sm:$0xff]
        %v2152 = vld [vmem:[%s688 + $0x20] sm:$0xff]
        %v2153 = vld [vmem:[%s688 + $0x28] sm:$0xff]
        %v2154 = vld [vmem:[%s688 + $0x30] sm:$0xff]
        %v2155 = vld [vmem:[%s688 + $0x38] sm:$0xff]
        %v2156 = vld [vmem:[%s688 + $0x40] sm:$0xff]
        %v2157 = vld [vmem:[%s688 + $0x48] sm:$0xff]
        %v2158 = vld [vmem:[%s688 + $0x50] sm:$0xff]
        %v2159 = vld [vmem:[%s688 + $0x58] sm:$0xff]
        %v2160 = vld [vmem:[%s688 + $0x60] sm:$0xff]
        %v2161 = vld [vmem:[%s688 + $0x68] sm:$0xff]
        %v2162 = vld [vmem:[%s688 + $0x70] sm:$0xff]
        %v2163 = vld [vmem:[%s688 + $0x78] sm:$0xff]
        %2164 = vmatprep.subr.mxu0 0.0
        %2165 = vmatpush1.msra.mxu0 %v2148
        %2166 = vmatprep.subr.mxu0 0.0
        %2167 = vmatpush1.msra.mxu0 %v2149
        %2168 = vmatprep.subr.mxu0 0.0
        %2169 = vmatpush1.msra.mxu0 %v2150
        %2170 = vmatprep.subr.mxu0 0.0
        %2171 = vmatpush1.msra.mxu0 %v2151
        %2172 = vmatprep.subr.mxu0 0.0
        %2173 = vmatpush1.msra.mxu0 %v2152
        %2174 = vmatprep.subr.mxu0 0.0
        %2175 = vmatpush1.msra.mxu0 %v2153
        %2176 = vmatprep.subr.mxu0 0.0
        %2177 = vmatpush1.msra.mxu0 %v2154
        %2178 = vmatprep.subr.mxu0 0.0
        %2179 = vmatpush1.msra.mxu0 %v2155
        %2180 = vmatprep.subr.mxu0 0.0
        %2181 = vmatpush1.msra.mxu0 %v2156
        %2182 = vmatprep.subr.mxu0 0.0
        %2183 = vmatpush1.msra.mxu0 %v2157
        %2184 = vmatprep.subr.mxu0 0.0
        %2185 = vmatpush1.msra.mxu0 %v2158
        %2186 = vmatprep.subr.mxu0 0.0
        %2187 = vmatpush1.msra.mxu0 %v2159
        %2188 = vmatprep.subr.mxu0 0.0
        %2189 = vmatpush1.msra.mxu0 %v2160
        %2190 = vmatprep.subr.mxu0 0.0
        %2191 = vmatpush1.msra.mxu0 %v2161
        %2192 = vmatprep.subr.mxu0 0.0
        %2193 = vmatpush1.msra.mxu0 %v2162
        %2194 = vmatprep.subr.mxu0 0.0
        %2195 = vmatpush1.msra.mxu0 %v2163
        %2196 = vmatprep.subr.mxu0 0.0
        %2197 = vmatpush1.msra.mxu0 0.0
        %2198 = vmatprep.subr.mxu0 0.0
        %2199 = vmatpush1.msra.mxu0 0.0
        %2200 = vmatprep.subr.mxu0 0.0
        %2201 = vmatpush1.msra.mxu0 0.0
        %2202 = vmatprep.subr.mxu0 0.0
        %2203 = vmatpush1.msra.mxu0 0.0
        %2204 = vmatprep.subr.mxu0 0.0
        %2205 = vmatpush1.msra.mxu0 0.0
        %2206 = vmatprep.subr.mxu0 0.0
        %2207 = vmatpush1.msra.mxu0 0.0
        %2208 = vmatprep.subr.mxu0 0.0
        %2209 = vmatpush1.msra.mxu0 0.0
        %2210 = vmatprep.subr.mxu0 0.0
        %2211 = vmatpush1.msra.mxu0 0.0
        %2212 = vmatprep.subr.mxu0 0.0
        %2213 = vmatpush1.msra.mxu0 0.0
        %2214 = vmatprep.subr.mxu0 0.0
        %2215 = vmatpush1.msra.mxu0 0.0
        %2216 = vmatprep.subr.mxu0 0.0
        %2217 = vmatpush1.msra.mxu0 0.0
        %2218 = vmatprep.subr.mxu0 0.0
        %2219 = vmatpush1.msra.mxu0 0.0
        %2220 = vmatprep.subr.mxu0 0.0
        %2221 = vmatpush1.msra.mxu0 0.0
        %2222 = vmatprep.subr.mxu0 0.0
        %2223 = vmatpush1.msra.mxu0 0.0
        %2224 = vmatprep.subr.mxu0 0.0
        %2225 = vmatpush1.msra.mxu0 0.0
        %2226 = vmatprep.subr.mxu0 0.0
        %2227 = vmatpush1.msra.mxu0 0.0
        %2228 = vmatprep.mubr.f32.mxu0 0.0
        %2229 = vmatmul.mubr.f32.gmra.mrb[0].mxu0 %v2084
        %v2230 = vpop.f32.mrb[0].mxu0
        %v2231 = vadd.f32 0.0, %v2230
        %v2232 = vpop.f32.mrb[0].mxu0
        %2233 = vmatprep.mubr.f32.mxu0 0.0
        %2234 = vmatmul.mubr.f32.gmra.mrb[0].mxu0 %v2085
        %v2235 = vpop.f32.mrb[0].mxu0
        %v2236 = vadd.f32 0.0, %v2235
        %v2237 = vpop.f32.mrb[0].mxu0
        %2238 = vmatprep.mubr.f32.mxu0 0.0
        %2239 = vmatmul.mubr.f32.gmra.mrb[0].mxu0 %v2086
        %v2240 = vpop.f32.mrb[0].mxu0
        %v2241 = vadd.f32 0.0, %v2240
        %v2242 = vpop.f32.mrb[0].mxu0
        %2243 = vmatprep.mubr.f32.mxu0 0.0
        %2244 = vmatmul.mubr.f32.gmra.mrb[0].mxu0 %v2087
        %v2245 = vpop.f32.mrb[0].mxu0
        %v2246 = vadd.f32 0.0, %v2245
        %v2247 = vpop.f32.mrb[0].mxu0
        %2248 = vmatprep.mubr.f32.mxu0 0.0
        %2249 = vmatmul.mubr.f32.gmra.mrb[0].mxu0 %v2088
        %v2250 = vpop.f32.mrb[0].mxu0
        %v2251 = vadd.f32 0.0, %v2250
        %v2252 = vpop.f32.mrb[0].mxu0
        %2253 = vmatprep.mubr.f32.mxu0 0.0
        %2254 = vmatmul.mubr.f32.gmra.mrb[0].mxu0 %v2089
        %v2255 = vpop.f32.mrb[0].mxu0
        %v2256 = vadd.f32 0.0, %v2255
        %v2257 = vpop.f32.mrb[0].mxu0
        %2258 = vmatprep.mubr.f32.mxu0 0.0
        %2259 = vmatmul.mubr.f32.gmra.mrb[0].mxu0 %v2090
        %v2260 = vpop.f32.mrb[0].mxu0
        %v2261 = vadd.f32 0.0, %v2260
        %v2262 = vpop.f32.mrb[0].mxu0
        %2263 = vmatprep.mubr.f32.mxu0 0.0
        %2264 = vmatmul.mubr.f32.gmra.mrb[0].mxu0 %v2091
        %v2265 = vpop.f32.mrb[0].mxu0
        %v2266 = vadd.f32 0.0, %v2265
        %v2267 = vpop.f32.mrb[0].mxu0
        %2268 = vmatprep.mubr.f32.mxu0 0.0
        %2269 = vmatmul.mubr.f32.gmra.mrb[0].mxu0 %v2092
        %v2270 = vpop.f32.mrb[0].mxu0
        %v2271 = vadd.f32 0.0, %v2270
        %v2272 = vpop.f32.mrb[0].mxu0
        %2273 = vmatprep.mubr.f32.mxu0 0.0
        %2274 = vmatmul.mubr.f32.gmra.mrb[0].mxu0 %v2093
        %v2275 = vpop.f32.mrb[0].mxu0
        %v2276 = vadd.f32 0.0, %v2275
        %v2277 = vpop.f32.mrb[0].mxu0
        %2278 = vmatprep.mubr.f32.mxu0 0.0
        %2279 = vmatmul.mubr.f32.gmra.mrb[0].mxu0 %v2094
        %v2280 = vpop.f32.mrb[0].mxu0
        %v2281 = vadd.f32 0.0, %v2280
        %v2282 = vpop.f32.mrb[0].mxu0
        %2283 = vmatprep.mubr.f32.mxu0 0.0
        %2284 = vmatmul.mubr.f32.gmra.mrb[0].mxu0 %v2095
        %v2285 = vpop.f32.mrb[0].mxu0
        %v2286 = vadd.f32 0.0, %v2285
        %v2287 = vpop.f32.mrb[0].mxu0
        %2288 = vmatprep.mubr.f32.mxu0 0.0
        %2289 = vmatmul.mubr.f32.gmra.mrb[0].mxu0 %v2096
        %v2290 = vpop.f32.mrb[0].mxu0
        %v2291 = vadd.f32 0.0, %v2290
        %v2292 = vpop.f32.mrb[0].mxu0
        %2293 = vmatprep.mubr.f32.mxu0 0.0
        %2294 = vmatmul.mubr.f32.gmra.mrb[0].mxu0 %v2097
        %v2295 = vpop.f32.mrb[0].mxu0
        %v2296 = vadd.f32 0.0, %v2295
        %v2297 = vpop.f32.mrb[0].mxu0
        %2298 = vmatprep.mubr.f32.mxu0 0.0
        %2299 = vmatmul.mubr.f32.gmra.mrb[0].mxu0 %v2098
        %v2300 = vpop.f32.mrb[0].mxu0
        %v2301 = vadd.f32 0.0, %v2300
        %v2302 = vpop.f32.mrb[0].mxu0
        %2303 = vmatprep.mubr.f32.mxu0 0.0
        %2304 = vmatmul.mubr.f32.gmra.mrb[0].mxu0 %v2099
        %v2305 = vpop.f32.mrb[0].mxu0
        %v2306 = vadd.f32 0.0, %v2305
        %v2307 = vpop.f32.mrb[0].mxu0
        %2308 = vdwg.mxu0
        %v2309 = vadd.f32 %v2101, 1e-08
        %v2310 = vadd.f32 %v2103, 1e-08
        %v2311 = vadd.f32 %v2105, 1e-08
        %v2312 = vadd.f32 %v2107, 1e-08
        %v2313 = vadd.f32 %v2109, 1e-08
        %v2314 = vadd.f32 %v2111, 1e-08
        %v2315 = vadd.f32 %v2113, 1e-08
        %v2316 = vadd.f32 %v2115, 1e-08
        %v2317 = vadd.f32 %v2117, 1e-08
        %v2318 = vadd.f32 %v2119, 1e-08
        %v2319 = vadd.f32 %v2121, 1e-08
        %v2320 = vadd.f32 %v2123, 1e-08
        %v2321 = vadd.f32 %v2125, 1e-08
        %v2322 = vadd.f32 %v2127, 1e-08
        %v2323 = vadd.f32 %v2129, 1e-08
        %v2324 = vadd.f32 %v2131, 1e-08
        %v2325 = vrcp.pop %v2309
        %v2326 = vmul.f32 %v2231, %v2325
        %v2327 = vrcp.pop %v2310
        %v2328 = vmul.f32 %v2236, %v2327
        %v2329 = vrcp.pop %v2311
        %v2330 = vmul.f32 %v2241, %v2329
        %v2331 = vrcp.pop %v2312
        %v2332 = vmul.f32 %v2246, %v2331
        %v2333 = vrcp.pop %v2313
        %v2334 = vmul.f32 %v2251, %v2333
        %v2335 = vrcp.pop %v2314
        %v2336 = vmul.f32 %v2256, %v2335
        %v2337 = vrcp.pop %v2315
        %v2338 = vmul.f32 %v2261, %v2337
        %v2339 = vrcp.pop %v2316
        %v2340 = vmul.f32 %v2266, %v2339
        %v2341 = vrcp.pop %v2317
        %v2342 = vmul.f32 %v2271, %v2341
        %v2343 = vrcp.pop %v2318
        %v2344 = vmul.f32 %v2276, %v2343
        %v2345 = vrcp.pop %v2319
        %v2346 = vmul.f32 %v2281, %v2345
        %v2347 = vrcp.pop %v2320
        %v2348 = vmul.f32 %v2286, %v2347
        %v2349 = vrcp.pop %v2321
        %v2350 = vmul.f32 %v2291, %v2349
        %v2351 = vrcp.pop %v2322
        %v2352 = vmul.f32 %v2296, %v2351
        %v2353 = vrcp.pop %v2323
        %v2354 = vmul.f32 %v2301, %v2353
        %v2355 = vrcp.pop %v2324
        %v2356 = vmul.f32 %v2306, %v2355
        %v2357 = vsub.f32 %v2326, %v2132
        %v2358 = vsub.f32 %v2328, %v2133
        %v2359 = vsub.f32 %v2330, %v2134
        %v2360 = vsub.f32 %v2332, %v2135
        %v2361 = vsub.f32 %v2334, %v2136
        %v2362 = vsub.f32 %v2336, %v2137
        %v2363 = vsub.f32 %v2338, %v2138
        %v2364 = vsub.f32 %v2340, %v2139
        %v2365 = vsub.f32 %v2342, %v2140
        %v2366 = vsub.f32 %v2344, %v2141
        %v2367 = vsub.f32 %v2346, %v2142
        %v2368 = vsub.f32 %v2348, %v2143
        %v2369 = vsub.f32 %v2350, %v2144
        %v2370 = vsub.f32 %v2352, %v2145
        %v2371 = vsub.f32 %v2354, %v2146
        %v2372 = vsub.f32 %v2356, %v2147
        %2373 = vst [vmem:[%s657] sm:$0xff] %v2084
        %2374 = vst [vmem:[%s657 + $0x8] sm:$0xff] %v2085
        %2375 = vst [vmem:[%s657 + $0x10] sm:$0xff] %v2086
        %2376 = vst [vmem:[%s657 + $0x18] sm:$0xff] %v2087
        %2377 = vst [vmem:[%s657 + $0x20] sm:$0xff] %v2088
        %2378 = vst [vmem:[%s657 + $0x28] sm:$0xff] %v2089
        %2379 = vst [vmem:[%s657 + $0x30] sm:$0xff] %v2090
        %2380 = vst [vmem:[%s657 + $0x38] sm:$0xff] %v2091
        %2381 = vst [vmem:[%s657 + $0x40] sm:$0xff] %v2092
        %2382 = vst [vmem:[%s657 + $0x48] sm:$0xff] %v2093
        %2383 = vst [vmem:[%s657 + $0x50] sm:$0xff] %v2094
        %2384 = vst [vmem:[%s657 + $0x58] sm:$0xff] %v2095
        %2385 = vst [vmem:[%s657 + $0x60] sm:$0xff] %v2096
        %2386 = vst [vmem:[%s657 + $0x68] sm:$0xff] %v2097
        %2387 = vst [vmem:[%s657 + $0x70] sm:$0xff] %v2098
        %2388 = vst [vmem:[%s657 + $0x78] sm:$0xff] %v2099
        %vm2389 = vcmask 7168
        %2390 = vst.msk [vmem:[%s693] sm:$0xff] %vm2389, %v2101
        %2391 = vst.msk [vmem:[%s693 + $0x8] sm:$0xff] %vm2389, %v2103
        %2392 = vst.msk [vmem:[%s693 + $0x10] sm:$0xff] %vm2389, %v2105
        %2393 = vst.msk [vmem:[%s693 + $0x18] sm:$0xff] %vm2389, %v2107
        %2394 = vst.msk [vmem:[%s693 + $0x20] sm:$0xff] %vm2389, %v2109
        %2395 = vst.msk [vmem:[%s693 + $0x28] sm:$0xff] %vm2389, %v2111
        %2396 = vst.msk [vmem:[%s693 + $0x30] sm:$0xff] %vm2389, %v2113
        %2397 = vst.msk [vmem:[%s693 + $0x38] sm:$0xff] %vm2389, %v2115
        %2398 = vst.msk [vmem:[%s693 + $0x40] sm:$0xff] %vm2389, %v2117
        %2399 = vst.msk [vmem:[%s693 + $0x48] sm:$0xff] %vm2389, %v2119
        %2400 = vst.msk [vmem:[%s693 + $0x50] sm:$0xff] %vm2389, %v2121
        %2401 = vst.msk [vmem:[%s693 + $0x58] sm:$0xff] %vm2389, %v2123
        %2402 = vst.msk [vmem:[%s693 + $0x60] sm:$0xff] %vm2389, %v2125
        %2403 = vst.msk [vmem:[%s693 + $0x68] sm:$0xff] %vm2389, %v2127
        %2404 = vst.msk [vmem:[%s693 + $0x70] sm:$0xff] %vm2389, %v2129
        %2405 = vst.msk [vmem:[%s693 + $0x78] sm:$0xff] %vm2389, %v2131
        %vm2406 = vcmask 23552
        %2407 = vst.msk [vmem:[%s698] sm:$0xff] %vm2406, %v2326
        %2408 = vst.msk [vmem:[%s698 + $0x8] sm:$0xff] %vm2406, %v2328
        %2409 = vst.msk [vmem:[%s698 + $0x10] sm:$0xff] %vm2406, %v2330
        %2410 = vst.msk [vmem:[%s698 + $0x18] sm:$0xff] %vm2406, %v2332
        %2411 = vst.msk [vmem:[%s698 + $0x20] sm:$0xff] %vm2406, %v2334
        %2412 = vst.msk [vmem:[%s698 + $0x28] sm:$0xff] %vm2406, %v2336
        %2413 = vst.msk [vmem:[%s698 + $0x30] sm:$0xff] %vm2406, %v2338
        %2414 = vst.msk [vmem:[%s698 + $0x38] sm:$0xff] %vm2406, %v2340
        %2415 = vst.msk [vmem:[%s698 + $0x40] sm:$0xff] %vm2406, %v2342
        %2416 = vst.msk [vmem:[%s698 + $0x48] sm:$0xff] %vm2406, %v2344
        %2417 = vst.msk [vmem:[%s698 + $0x50] sm:$0xff] %vm2406, %v2346
        %2418 = vst.msk [vmem:[%s698 + $0x58] sm:$0xff] %vm2406, %v2348
        %2419 = vst.msk [vmem:[%s698 + $0x60] sm:$0xff] %vm2406, %v2350
        %2420 = vst.msk [vmem:[%s698 + $0x68] sm:$0xff] %vm2406, %v2352
        %2421 = vst.msk [vmem:[%s698 + $0x70] sm:$0xff] %vm2406, %v2354
        %2422 = vst.msk [vmem:[%s698 + $0x78] sm:$0xff] %vm2406, %v2356
        %v2423 = vld [vmem:[#allocation9] sm:$0xff]
        %v2424 = vld [vmem:[#allocation9 + $0x8] sm:$0xff]
        %v2425 = vld [vmem:[#allocation9 + $0x10] sm:$0xff]
        %v2426 = vld [vmem:[#allocation9 + $0x18] sm:$0xff]
        %v2427 = vld [vmem:[#allocation9 + $0x20] sm:$0xff]
        %v2428 = vld [vmem:[#allocation9 + $0x28] sm:$0xff]
        %v2429 = vld [vmem:[#allocation9 + $0x30] sm:$0xff]
        %v2430 = vld [vmem:[#allocation9 + $0x38] sm:$0xff]
        %v2431 = vld [vmem:[#allocation9 + $0x40] sm:$0xff]
        %v2432 = vld [vmem:[#allocation9 + $0x48] sm:$0xff]
        %v2433 = vld [vmem:[#allocation9 + $0x50] sm:$0xff]
        %v2434 = vld [vmem:[#allocation9 + $0x58] sm:$0xff]
        %v2435 = vld [vmem:[#allocation9 + $0x60] sm:$0xff]
        %v2436 = vld [vmem:[#allocation9 + $0x68] sm:$0xff]
        %v2437 = vld [vmem:[#allocation9 + $0x70] sm:$0xff]
        %v2438 = vld [vmem:[#allocation9 + $0x78] sm:$0xff]
        %v2439 = vld [vmem:[#allocation9 + $0x80] sm:$0xff]
        %v2440 = vld [vmem:[#allocation9 + $0x88] sm:$0xff]
        %v2441 = vld [vmem:[#allocation9 + $0x90] sm:$0xff]
        %v2442 = vld [vmem:[#allocation9 + $0x98] sm:$0xff]
        %v2443 = vld [vmem:[#allocation9 + $0xa0] sm:$0xff]
        %v2444 = vld [vmem:[#allocation9 + $0xa8] sm:$0xff]
        %v2445 = vld [vmem:[#allocation9 + $0xb0] sm:$0xff]
        %v2446 = vld [vmem:[#allocation9 + $0xb8] sm:$0xff]
        %v2447 = vld [vmem:[#allocation9 + $0xc0] sm:$0xff]
        %v2448 = vld [vmem:[#allocation9 + $0xc8] sm:$0xff]
        %v2449 = vld [vmem:[#allocation9 + $0xd0] sm:$0xff]
        %v2450 = vld [vmem:[#allocation9 + $0xd8] sm:$0xff]
        %v2451 = vld [vmem:[#allocation9 + $0xe0] sm:$0xff]
        %v2452 = vld [vmem:[#allocation9 + $0xe8] sm:$0xff]
        %v2453 = vld [vmem:[#allocation9 + $0xf0] sm:$0xff]
        %v2454 = vld [vmem:[#allocation9 + $0xf8] sm:$0xff]
        %v2455 = vld [vmem:[#allocation9 + $0x100] sm:$0xff]
        %v2456 = vld [vmem:[#allocation9 + $0x108] sm:$0xff]
        %v2457 = vld [vmem:[#allocation9 + $0x110] sm:$0xff]
        %v2458 = vld [vmem:[#allocation9 + $0x118] sm:$0xff]
        %v2459 = vld [vmem:[#allocation9 + $0x120] sm:$0xff]
        %v2460 = vld [vmem:[#allocation9 + $0x128] sm:$0xff]
        %v2461 = vld [vmem:[#allocation9 + $0x130] sm:$0xff]
        %v2462 = vld [vmem:[#allocation9 + $0x138] sm:$0xff]
        %v2463 = vld [vmem:[#allocation9 + $0x140] sm:$0xff]
        %v2464 = vld [vmem:[#allocation9 + $0x148] sm:$0xff]
        %v2465 = vld [vmem:[#allocation9 + $0x150] sm:$0xff]
        %v2466 = vld [vmem:[#allocation9 + $0x158] sm:$0xff]
        %v2467 = vld [vmem:[#allocation9 + $0x160] sm:$0xff]
        %v2468 = vld [vmem:[#allocation9 + $0x168] sm:$0xff]
        %v2469 = vld [vmem:[#allocation9 + $0x170] sm:$0xff]
        %v2470 = vld [vmem:[#allocation9 + $0x178] sm:$0xff]
        %v2471 = vld [vmem:[#allocation9 + $0x180] sm:$0xff]
        %v2472 = vld [vmem:[#allocation9 + $0x188] sm:$0xff]
        %v2473 = vld [vmem:[#allocation9 + $0x190] sm:$0xff]
        %v2474 = vld [vmem:[#allocation9 + $0x198] sm:$0xff]
        %v2475 = vld [vmem:[#allocation9 + $0x1a0] sm:$0xff]
        %v2476 = vld [vmem:[#allocation9 + $0x1a8] sm:$0xff]
        %v2477 = vld [vmem:[#allocation9 + $0x1b0] sm:$0xff]
        %v2478 = vld [vmem:[#allocation9 + $0x1b8] sm:$0xff]
        %v2479 = vld [vmem:[#allocation9 + $0x1c0] sm:$0xff]
        %v2480 = vld [vmem:[#allocation9 + $0x1c8] sm:$0xff]
        %v2481 = vld [vmem:[#allocation9 + $0x1d0] sm:$0xff]
        %v2482 = vld [vmem:[#allocation9 + $0x1d8] sm:$0xff]
        %v2483 = vld [vmem:[#allocation9 + $0x1e0] sm:$0xff]
        %v2484 = vld [vmem:[#allocation9 + $0x1e8] sm:$0xff]
        %v2485 = vld [vmem:[#allocation9 + $0x1f0] sm:$0xff]
        %v2486 = vld [vmem:[#allocation9 + $0x1f8] sm:$0xff]
        %v2487 = vld [vmem:[#allocation9 + $0x200] sm:$0xff]
        %v2488 = vld [vmem:[#allocation9 + $0x208] sm:$0xff]
        %v2489 = vld [vmem:[#allocation9 + $0x210] sm:$0xff]
        %v2490 = vld [vmem:[#allocation9 + $0x218] sm:$0xff]
        %v2491 = vld [vmem:[#allocation9 + $0x220] sm:$0xff]
        %v2492 = vld [vmem:[#allocation9 + $0x228] sm:$0xff]
        %v2493 = vld [vmem:[#allocation9 + $0x230] sm:$0xff]
        %v2494 = vld [vmem:[#allocation9 + $0x238] sm:$0xff]
        %v2495 = vld [vmem:[#allocation9 + $0x240] sm:$0xff]
        %v2496 = vld [vmem:[#allocation9 + $0x248] sm:$0xff]
        %v2497 = vld [vmem:[#allocation9 + $0x250] sm:$0xff]
        %v2498 = vld [vmem:[#allocation9 + $0x258] sm:$0xff]
        %v2499 = vld [vmem:[#allocation9 + $0x260] sm:$0xff]
        %v2500 = vld [vmem:[#allocation9 + $0x268] sm:$0xff]
        %v2501 = vld [vmem:[#allocation9 + $0x270] sm:$0xff]
        %v2502 = vld [vmem:[#allocation9 + $0x278] sm:$0xff]
        %v2503 = vld [vmem:[#allocation9 + $0x280] sm:$0xff]
        %v2504 = vld [vmem:[#allocation9 + $0x288] sm:$0xff]
        %v2505 = vld [vmem:[#allocation9 + $0x290] sm:$0xff]
        %v2506 = vld [vmem:[#allocation9 + $0x298] sm:$0xff]
        %v2507 = vld [vmem:[#allocation9 + $0x2a0] sm:$0xff]
        %v2508 = vld [vmem:[#allocation9 + $0x2a8] sm:$0xff]
        %v2509 = vld [vmem:[#allocation9 + $0x2b0] sm:$0xff]
        %v2510 = vld [vmem:[#allocation9 + $0x2b8] sm:$0xff]
        %v2511 = vld [vmem:[#allocation9 + $0x2c0] sm:$0xff]
        %v2512 = vld [vmem:[#allocation9 + $0x2c8] sm:$0xff]
        %v2513 = vld [vmem:[#allocation9 + $0x2d0] sm:$0xff]
        %v2514 = vld [vmem:[#allocation9 + $0x2d8] sm:$0xff]
        %v2515 = vld [vmem:[#allocation9 + $0x2e0] sm:$0xff]
        %v2516 = vld [vmem:[#allocation9 + $0x2e8] sm:$0xff]
        %v2517 = vld [vmem:[#allocation9 + $0x2f0] sm:$0xff]
        %v2518 = vld [vmem:[#allocation9 + $0x2f8] sm:$0xff]
        %v2519 = vld [vmem:[#allocation9 + $0x300] sm:$0xff]
        %v2520 = vld [vmem:[#allocation9 + $0x308] sm:$0xff]
        %v2521 = vld [vmem:[#allocation9 + $0x310] sm:$0xff]
        %v2522 = vld [vmem:[#allocation9 + $0x318] sm:$0xff]
        %v2523 = vld [vmem:[#allocation9 + $0x320] sm:$0xff]
        %v2524 = vld [vmem:[#allocation9 + $0x328] sm:$0xff]
        %v2525 = vld [vmem:[#allocation9 + $0x330] sm:$0xff]
        %v2526 = vld [vmem:[#allocation9 + $0x338] sm:$0xff]
        %v2527 = vld [vmem:[#allocation9 + $0x340] sm:$0xff]
        %v2528 = vld [vmem:[#allocation9 + $0x348] sm:$0xff]
        %v2529 = vld [vmem:[#allocation9 + $0x350] sm:$0xff]
        %v2530 = vld [vmem:[#allocation9 + $0x358] sm:$0xff]
        %v2531 = vld [vmem:[#allocation9 + $0x360] sm:$0xff]
        %v2532 = vld [vmem:[#allocation9 + $0x368] sm:$0xff]
        %v2533 = vld [vmem:[#allocation9 + $0x370] sm:$0xff]
        %v2534 = vld [vmem:[#allocation9 + $0x378] sm:$0xff]
        %v2535 = vld [vmem:[#allocation9 + $0x380] sm:$0xff]
        %v2536 = vld [vmem:[#allocation9 + $0x388] sm:$0xff]
        %v2537 = vld [vmem:[#allocation9 + $0x390] sm:$0xff]
        %v2538 = vld [vmem:[#allocation9 + $0x398] sm:$0xff]
        %v2539 = vld [vmem:[#allocation9 + $0x3a0] sm:$0xff]
        %v2540 = vld [vmem:[#allocation9 + $0x3a8] sm:$0xff]
        %v2541 = vld [vmem:[#allocation9 + $0x3b0] sm:$0xff]
        %v2542 = vld [vmem:[#allocation9 + $0x3b8] sm:$0xff]
        %v2543 = vld [vmem:[#allocation9 + $0x3c0] sm:$0xff]
        %v2544 = vld [vmem:[#allocation9 + $0x3c8] sm:$0xff]
        %v2545 = vld [vmem:[#allocation9 + $0x3d0] sm:$0xff]
        %v2546 = vld [vmem:[#allocation9 + $0x3d8] sm:$0xff]
        %v2547 = vld [vmem:[#allocation9 + $0x3e0] sm:$0xff]
        %v2548 = vld [vmem:[#allocation9 + $0x3e8] sm:$0xff]
        %v2549 = vld [vmem:[#allocation9 + $0x3f0] sm:$0xff]
        %v2550 = vld [vmem:[#allocation9 + $0x3f8] sm:$0xff]
        %v2551 = vld [vmem:[#allocation9 + $0x400] sm:$0xff]
        %v2552 = vld [vmem:[#allocation9 + $0x408] sm:$0xff]
        %v2553 = vld [vmem:[#allocation9 + $0x410] sm:$0xff]
        %v2554 = vld [vmem:[#allocation9 + $0x418] sm:$0xff]
        %v2555 = vld [vmem:[#allocation9 + $0x420] sm:$0xff]
        %v2556 = vld [vmem:[#allocation9 + $0x428] sm:$0xff]
        %v2557 = vld [vmem:[#allocation9 + $0x430] sm:$0xff]
        %v2558 = vld [vmem:[#allocation9 + $0x438] sm:$0xff]
        %v2559 = vld [vmem:[#allocation9 + $0x440] sm:$0xff]
        %v2560 = vld [vmem:[#allocation9 + $0x448] sm:$0xff]
        %v2561 = vld [vmem:[#allocation9 + $0x450] sm:$0xff]
        %v2562 = vld [vmem:[#allocation9 + $0x458] sm:$0xff]
        %v2563 = vld [vmem:[#allocation9 + $0x460] sm:$0xff]
        %v2564 = vld [vmem:[#allocation9 + $0x468] sm:$0xff]
        %v2565 = vld [vmem:[#allocation9 + $0x470] sm:$0xff]
        %v2566 = vld [vmem:[#allocation9 + $0x478] sm:$0xff]
        %v2567 = vld [vmem:[#allocation9 + $0x480] sm:$0xff]
        %v2568 = vld [vmem:[#allocation9 + $0x488] sm:$0xff]
        %v2569 = vld [vmem:[#allocation9 + $0x490] sm:$0xff]
        %v2570 = vld [vmem:[#allocation9 + $0x498] sm:$0xff]
        %v2571 = vld [vmem:[#allocation9 + $0x4a0] sm:$0xff]
        %v2572 = vld [vmem:[#allocation9 + $0x4a8] sm:$0xff]
        %v2573 = vld [vmem:[#allocation9 + $0x4b0] sm:$0xff]
        %v2574 = vld [vmem:[#allocation9 + $0x4b8] sm:$0xff]
        %v2575 = vld [vmem:[#allocation9 + $0x4c0] sm:$0xff]
        %v2576 = vld [vmem:[#allocation9 + $0x4c8] sm:$0xff]
        %v2577 = vld [vmem:[#allocation9 + $0x4d0] sm:$0xff]
        %v2578 = vld [vmem:[#allocation9 + $0x4d8] sm:$0xff]
        %v2579 = vld [vmem:[#allocation9 + $0x4e0] sm:$0xff]
        %v2580 = vld [vmem:[#allocation9 + $0x4e8] sm:$0xff]
        %v2581 = vld [vmem:[#allocation9 + $0x4f0] sm:$0xff]
        %v2582 = vld [vmem:[#allocation9 + $0x4f8] sm:$0xff]
        %v2583 = vld [vmem:[#allocation9 + $0x500] sm:$0xff]
        %v2584 = vld [vmem:[#allocation9 + $0x508] sm:$0xff]
        %v2585 = vld [vmem:[#allocation9 + $0x510] sm:$0xff]
        %v2586 = vld [vmem:[#allocation9 + $0x518] sm:$0xff]
        %v2587 = vld [vmem:[#allocation9 + $0x520] sm:$0xff]
        %v2588 = vld [vmem:[#allocation9 + $0x528] sm:$0xff]
        %v2589 = vld [vmem:[#allocation9 + $0x530] sm:$0xff]
        %v2590 = vld [vmem:[#allocation9 + $0x538] sm:$0xff]
        %v2591 = vld [vmem:[#allocation9 + $0x540] sm:$0xff]
        %v2592 = vld [vmem:[#allocation9 + $0x548] sm:$0xff]
        %v2593 = vld [vmem:[#allocation9 + $0x550] sm:$0xff]
        %v2594 = vld [vmem:[#allocation9 + $0x558] sm:$0xff]
        %v2595 = vld [vmem:[#allocation9 + $0x560] sm:$0xff]
        %v2596 = vld [vmem:[#allocation9 + $0x568] sm:$0xff]
        %v2597 = vld [vmem:[#allocation9 + $0x570] sm:$0xff]
        %v2598 = vld [vmem:[#allocation9 + $0x578] sm:$0xff]
        %v2599 = vld [vmem:[#allocation9 + $0x580] sm:$0xff]
        %v2600 = vld [vmem:[#allocation9 + $0x588] sm:$0xff]
        %v2601 = vld [vmem:[#allocation9 + $0x590] sm:$0xff]
        %v2602 = vld [vmem:[#allocation9 + $0x598] sm:$0xff]
        %v2603 = vld [vmem:[#allocation9 + $0x5a0] sm:$0xff]
        %v2604 = vld [vmem:[#allocation9 + $0x5a8] sm:$0xff]
        %v2605 = vld [vmem:[#allocation9 + $0x5b0] sm:$0xff]
        %v2606 = vld [vmem:[#allocation9 + $0x5b8] sm:$0xff]
        %v2607 = vld [vmem:[#allocation9 + $0x5c0] sm:$0xff]
        %v2608 = vld [vmem:[#allocation9 + $0x5c8] sm:$0xff]
        %v2609 = vld [vmem:[#allocation9 + $0x5d0] sm:$0xff]
        %v2610 = vld [vmem:[#allocation9 + $0x5d8] sm:$0xff]
        %v2611 = vld [vmem:[#allocation9 + $0x5e0] sm:$0xff]
        %v2612 = vld [vmem:[#allocation9 + $0x5e8] sm:$0xff]
        %v2613 = vld [vmem:[#allocation9 + $0x5f0] sm:$0xff]
        %v2614 = vld [vmem:[#allocation9 + $0x5f8] sm:$0xff]
        %v2615 = vld [vmem:[#allocation9 + $0x600] sm:$0xff]
        %v2616 = vld [vmem:[#allocation9 + $0x608] sm:$0xff]
        %v2617 = vld [vmem:[#allocation9 + $0x610] sm:$0xff]
        %v2618 = vld [vmem:[#allocation9 + $0x618] sm:$0xff]
        %v2619 = vld [vmem:[#allocation9 + $0x620] sm:$0xff]
        %v2620 = vld [vmem:[#allocation9 + $0x628] sm:$0xff]
        %v2621 = vld [vmem:[#allocation9 + $0x630] sm:$0xff]
        %v2622 = vld [vmem:[#allocation9 + $0x638] sm:$0xff]
        %v2623 = vld [vmem:[#allocation9 + $0x640] sm:$0xff]
        %v2624 = vld [vmem:[#allocation9 + $0x648] sm:$0xff]
        %v2625 = vld [vmem:[#allocation9 + $0x650] sm:$0xff]
        %v2626 = vld [vmem:[#allocation9 + $0x658] sm:$0xff]
        %v2627 = vld [vmem:[#allocation9 + $0x660] sm:$0xff]
        %v2628 = vld [vmem:[#allocation9 + $0x668] sm:$0xff]
        %v2629 = vld [vmem:[#allocation9 + $0x670] sm:$0xff]
        %v2630 = vld [vmem:[#allocation9 + $0x678] sm:$0xff]
        %v2631 = vld [vmem:[#allocation9 + $0x680] sm:$0xff]
        %v2632 = vld [vmem:[#allocation9 + $0x688] sm:$0xff]
        %v2633 = vld [vmem:[#allocation9 + $0x690] sm:$0xff]
        %v2634 = vld [vmem:[#allocation9 + $0x698] sm:$0xff]
        %v2635 = vld [vmem:[#allocation9 + $0x6a0] sm:$0xff]
        %v2636 = vld [vmem:[#allocation9 + $0x6a8] sm:$0xff]
        %v2637 = vld [vmem:[#allocation9 + $0x6b0] sm:$0xff]
        %v2638 = vld [vmem:[#allocation9 + $0x6b8] sm:$0xff]
        %v2639 = vld [vmem:[#allocation9 + $0x6c0] sm:$0xff]
        %v2640 = vld [vmem:[#allocation9 + $0x6c8] sm:$0xff]
        %v2641 = vld [vmem:[#allocation9 + $0x6d0] sm:$0xff]
        %v2642 = vld [vmem:[#allocation9 + $0x6d8] sm:$0xff]
        %v2643 = vld [vmem:[#allocation9 + $0x6e0] sm:$0xff]
        %v2644 = vld [vmem:[#allocation9 + $0x6e8] sm:$0xff]
        %v2645 = vld [vmem:[#allocation9 + $0x6f0] sm:$0xff]
        %v2646 = vld [vmem:[#allocation9 + $0x6f8] sm:$0xff]
        %v2647 = vld [vmem:[#allocation9 + $0x700] sm:$0xff]
        %v2648 = vld [vmem:[#allocation9 + $0x708] sm:$0xff]
        %v2649 = vld [vmem:[#allocation9 + $0x710] sm:$0xff]
        %v2650 = vld [vmem:[#allocation9 + $0x718] sm:$0xff]
        %v2651 = vld [vmem:[#allocation9 + $0x720] sm:$0xff]
        %v2652 = vld [vmem:[#allocation9 + $0x728] sm:$0xff]
        %v2653 = vld [vmem:[#allocation9 + $0x730] sm:$0xff]
        %v2654 = vld [vmem:[#allocation9 + $0x738] sm:$0xff]
        %v2655 = vld [vmem:[#allocation9 + $0x740] sm:$0xff]
        %v2656 = vld [vmem:[#allocation9 + $0x748] sm:$0xff]
        %v2657 = vld [vmem:[#allocation9 + $0x750] sm:$0xff]
        %v2658 = vld [vmem:[#allocation9 + $0x758] sm:$0xff]
        %v2659 = vld [vmem:[#allocation9 + $0x760] sm:$0xff]
        %v2660 = vld [vmem:[#allocation9 + $0x768] sm:$0xff]
        %v2661 = vld [vmem:[#allocation9 + $0x770] sm:$0xff]
        %v2662 = vld [vmem:[#allocation9 + $0x778] sm:$0xff]
        %v2663 = vld [vmem:[#allocation9 + $0x780] sm:$0xff]
        %v2664 = vld [vmem:[#allocation9 + $0x788] sm:$0xff]
        %v2665 = vld [vmem:[#allocation9 + $0x790] sm:$0xff]
        %v2666 = vld [vmem:[#allocation9 + $0x798] sm:$0xff]
        %v2667 = vld [vmem:[#allocation9 + $0x7a0] sm:$0xff]
        %v2668 = vld [vmem:[#allocation9 + $0x7a8] sm:$0xff]
        %v2669 = vld [vmem:[#allocation9 + $0x7b0] sm:$0xff]
        %v2670 = vld [vmem:[#allocation9 + $0x7b8] sm:$0xff]
        %v2671 = vld [vmem:[#allocation9 + $0x7c0] sm:$0xff]
        %v2672 = vld [vmem:[#allocation9 + $0x7c8] sm:$0xff]
        %v2673 = vld [vmem:[#allocation9 + $0x7d0] sm:$0xff]
        %v2674 = vld [vmem:[#allocation9 + $0x7d8] sm:$0xff]
        %v2675 = vld [vmem:[#allocation9 + $0x7e0] sm:$0xff]
        %v2676 = vld [vmem:[#allocation9 + $0x7e8] sm:$0xff]
        %v2677 = vld [vmem:[#allocation9 + $0x7f0] sm:$0xff]
        %v2678 = vld [vmem:[#allocation9 + $0x7f8] sm:$0xff]
        %v2679 = vld [vmem:[#allocation9 + $0x800] sm:$0xff]
        %v2680 = vld [vmem:[#allocation9 + $0x808] sm:$0xff]
        %v2681 = vld [vmem:[#allocation9 + $0x810] sm:$0xff]
        %v2682 = vld [vmem:[#allocation9 + $0x818] sm:$0xff]
        %v2683 = vld [vmem:[#allocation9 + $0x820] sm:$0xff]
        %v2684 = vld [vmem:[#allocation9 + $0x828] sm:$0xff]
        %v2685 = vld [vmem:[#allocation9 + $0x830] sm:$0xff]
        %v2686 = vld [vmem:[#allocation9 + $0x838] sm:$0xff]
        %v2687 = vld [vmem:[#allocation9 + $0x840] sm:$0xff]
        %v2688 = vld [vmem:[#allocation9 + $0x848] sm:$0xff]
        %v2689 = vld [vmem:[#allocation9 + $0x850] sm:$0xff]
        %v2690 = vld [vmem:[#allocation9 + $0x858] sm:$0xff]
        %v2691 = vld [vmem:[#allocation9 + $0x860] sm:$0xff]
        %v2692 = vld [vmem:[#allocation9 + $0x868] sm:$0xff]
        %v2693 = vld [vmem:[#allocation9 + $0x870] sm:$0xff]
        %v2694 = vld [vmem:[#allocation9 + $0x878] sm:$0xff]
        %v2695 = vld [vmem:[#allocation9 + $0x880] sm:$0xff]
        %v2696 = vld [vmem:[#allocation9 + $0x888] sm:$0xff]
        %v2697 = vld [vmem:[#allocation9 + $0x890] sm:$0xff]
        %v2698 = vld [vmem:[#allocation9 + $0x898] sm:$0xff]
        %v2699 = vld [vmem:[#allocation9 + $0x8a0] sm:$0xff]
        %v2700 = vld [vmem:[#allocation9 + $0x8a8] sm:$0xff]
        %v2701 = vld [vmem:[#allocation9 + $0x8b0] sm:$0xff]
        %v2702 = vld [vmem:[#allocation9 + $0x8b8] sm:$0xff]
        %v2703 = vld [vmem:[#allocation9 + $0x8c0] sm:$0xff]
        %v2704 = vld [vmem:[#allocation9 + $0x8c8] sm:$0xff]
        %v2705 = vld [vmem:[#allocation9 + $0x8d0] sm:$0xff]
        %v2706 = vld [vmem:[#allocation9 + $0x8d8] sm:$0xff]
        %v2707 = vld [vmem:[#allocation9 + $0x8e0] sm:$0xff]
        %v2708 = vld [vmem:[#allocation9 + $0x8e8] sm:$0xff]
        %v2709 = vld [vmem:[#allocation9 + $0x8f0] sm:$0xff]
        %v2710 = vld [vmem:[#allocation9 + $0x8f8] sm:$0xff]
        %v2711 = vunpack.c.l.bf16 %v2423
        %v2712 = vunpack.c.h.bf16 %v2423
        %v2713 = vunpack.c.l.bf16 %v2424
        %v2714 = vunpack.c.h.bf16 %v2424
        %v2715 = vunpack.c.l.bf16 %v2425
        %v2716 = vunpack.c.h.bf16 %v2425
        %v2717 = vunpack.c.l.bf16 %v2426
        %v2718 = vunpack.c.h.bf16 %v2426
        %v2719 = vunpack.c.l.bf16 %v2427
        %v2720 = vunpack.c.h.bf16 %v2427
        %v2721 = vunpack.c.l.bf16 %v2428
        %v2722 = vunpack.c.h.bf16 %v2428
        %v2723 = vunpack.c.l.bf16 %v2429
        %v2724 = vunpack.c.h.bf16 %v2429
        %v2725 = vunpack.c.l.bf16 %v2430
        %v2726 = vunpack.c.h.bf16 %v2430
        %v2727 = vunpack.c.l.bf16 %v2431
        %v2728 = vunpack.c.h.bf16 %v2431
        %v2729 = vunpack.c.l.bf16 %v2432
        %v2730 = vunpack.c.h.bf16 %v2432
        %v2731 = vunpack.c.l.bf16 %v2433
        %v2732 = vunpack.c.h.bf16 %v2433
        %v2733 = vunpack.c.l.bf16 %v2434
        %v2734 = vunpack.c.h.bf16 %v2434
        %v2735 = vunpack.c.l.bf16 %v2435
        %v2736 = vunpack.c.h.bf16 %v2435
        %v2737 = vunpack.c.l.bf16 %v2436
        %v2738 = vunpack.c.h.bf16 %v2436
        %v2739 = vunpack.c.l.bf16 %v2437
        %v2740 = vunpack.c.h.bf16 %v2437
        %v2741 = vunpack.c.l.bf16 %v2438
        %v2742 = vunpack.c.h.bf16 %v2438
        %v2743 = vunpack.c.l.bf16 %v2439
        %v2744 = vunpack.c.h.bf16 %v2439
        %v2745 = vunpack.c.l.bf16 %v2440
        %v2746 = vunpack.c.h.bf16 %v2440
        %v2747 = vunpack.c.l.bf16 %v2441
        %v2748 = vunpack.c.h.bf16 %v2441
        %v2749 = vunpack.c.l.bf16 %v2442
        %v2750 = vunpack.c.h.bf16 %v2442
        %v2751 = vunpack.c.l.bf16 %v2443
        %v2752 = vunpack.c.h.bf16 %v2443
        %v2753 = vunpack.c.l.bf16 %v2444
        %v2754 = vunpack.c.h.bf16 %v2444
        %v2755 = vunpack.c.l.bf16 %v2445
        %v2756 = vunpack.c.h.bf16 %v2445
        %v2757 = vunpack.c.l.bf16 %v2446
        %v2758 = vunpack.c.h.bf16 %v2446
        %v2759 = vunpack.c.l.bf16 %v2447
        %v2760 = vunpack.c.h.bf16 %v2447
        %v2761 = vunpack.c.l.bf16 %v2448
        %v2762 = vunpack.c.h.bf16 %v2448
        %v2763 = vunpack.c.l.bf16 %v2449
        %v2764 = vunpack.c.h.bf16 %v2449
        %v2765 = vunpack.c.l.bf16 %v2450
        %v2766 = vunpack.c.h.bf16 %v2450
        %v2767 = vunpack.c.l.bf16 %v2451
        %v2768 = vunpack.c.h.bf16 %v2451
        %v2769 = vunpack.c.l.bf16 %v2452
        %v2770 = vunpack.c.h.bf16 %v2452
        %v2771 = vunpack.c.l.bf16 %v2453
        %v2772 = vunpack.c.h.bf16 %v2453
        %v2773 = vunpack.c.l.bf16 %v2454
        %v2774 = vunpack.c.h.bf16 %v2454
        %v2775 = vunpack.c.l.bf16 %v2455
        %v2776 = vunpack.c.h.bf16 %v2455
        %v2777 = vunpack.c.l.bf16 %v2456
        %v2778 = vunpack.c.h.bf16 %v2456
        %v2779 = vunpack.c.l.bf16 %v2457
        %v2780 = vunpack.c.h.bf16 %v2457
        %v2781 = vunpack.c.l.bf16 %v2458
        %v2782 = vunpack.c.h.bf16 %v2458
        %v2783 = vunpack.c.l.bf16 %v2459
        %v2784 = vunpack.c.h.bf16 %v2459
        %v2785 = vunpack.c.l.bf16 %v2460
        %v2786 = vunpack.c.h.bf16 %v2460
        %v2787 = vunpack.c.l.bf16 %v2461
        %v2788 = vunpack.c.h.bf16 %v2461
        %v2789 = vunpack.c.l.bf16 %v2462
        %v2790 = vunpack.c.h.bf16 %v2462
        %v2791 = vunpack.c.l.bf16 %v2463
        %v2792 = vunpack.c.h.bf16 %v2463
        %v2793 = vunpack.c.l.bf16 %v2464
        %v2794 = vunpack.c.h.bf16 %v2464
        %v2795 = vunpack.c.l.bf16 %v2465
        %v2796 = vunpack.c.h.bf16 %v2465
        %v2797 = vunpack.c.l.bf16 %v2466
        %v2798 = vunpack.c.h.bf16 %v2466
        %v2799 = vunpack.c.l.bf16 %v2467
        %v2800 = vunpack.c.h.bf16 %v2467
        %v2801 = vunpack.c.l.bf16 %v2468
        %v2802 = vunpack.c.h.bf16 %v2468
        %v2803 = vunpack.c.l.bf16 %v2469
        %v2804 = vunpack.c.h.bf16 %v2469
        %v2805 = vunpack.c.l.bf16 %v2470
        %v2806 = vunpack.c.h.bf16 %v2470
        %v2807 = vunpack.c.l.bf16 %v2471
        %v2808 = vunpack.c.h.bf16 %v2471
        %v2809 = vunpack.c.l.bf16 %v2472
        %v2810 = vunpack.c.h.bf16 %v2472
        %v2811 = vunpack.c.l.bf16 %v2473
        %v2812 = vunpack.c.h.bf16 %v2473
        %v2813 = vunpack.c.l.bf16 %v2474
        %v2814 = vunpack.c.h.bf16 %v2474
        %v2815 = vunpack.c.l.bf16 %v2475
        %v2816 = vunpack.c.h.bf16 %v2475
        %v2817 = vunpack.c.l.bf16 %v2476
        %v2818 = vunpack.c.h.bf16 %v2476
        %v2819 = vunpack.c.l.bf16 %v2477
        %v2820 = vunpack.c.h.bf16 %v2477
        %v2821 = vunpack.c.l.bf16 %v2478
        %v2822 = vunpack.c.h.bf16 %v2478
        %v2823 = vunpack.c.l.bf16 %v2479
        %v2824 = vunpack.c.h.bf16 %v2479
        %v2825 = vunpack.c.l.bf16 %v2480
        %v2826 = vunpack.c.h.bf16 %v2480
        %v2827 = vunpack.c.l.bf16 %v2481
        %v2828 = vunpack.c.h.bf16 %v2481
        %v2829 = vunpack.c.l.bf16 %v2482
        %v2830 = vunpack.c.h.bf16 %v2482
        %v2831 = vunpack.c.l.bf16 %v2483
        %v2832 = vunpack.c.h.bf16 %v2483
        %v2833 = vunpack.c.l.bf16 %v2484
        %v2834 = vunpack.c.h.bf16 %v2484
        %v2835 = vunpack.c.l.bf16 %v2485
        %v2836 = vunpack.c.h.bf16 %v2485
        %v2837 = vunpack.c.l.bf16 %v2486
        %v2838 = vunpack.c.h.bf16 %v2486
        %v2839 = vunpack.c.l.bf16 %v2487
        %v2840 = vunpack.c.h.bf16 %v2487
        %v2841 = vunpack.c.l.bf16 %v2488
        %v2842 = vunpack.c.h.bf16 %v2488
        %v2843 = vunpack.c.l.bf16 %v2489
        %v2844 = vunpack.c.h.bf16 %v2489
        %v2845 = vunpack.c.l.bf16 %v2490
        %v2846 = vunpack.c.h.bf16 %v2490
        %v2847 = vunpack.c.l.bf16 %v2491
        %v2848 = vunpack.c.h.bf16 %v2491
        %v2849 = vunpack.c.l.bf16 %v2492
        %v2850 = vunpack.c.h.bf16 %v2492
        %v2851 = vunpack.c.l.bf16 %v2493
        %v2852 = vunpack.c.h.bf16 %v2493
        %v2853 = vunpack.c.l.bf16 %v2494
        %v2854 = vunpack.c.h.bf16 %v2494
        %v2855 = vunpack.c.l.bf16 %v2495
        %v2856 = vunpack.c.h.bf16 %v2495
        %v2857 = vunpack.c.l.bf16 %v2496
        %v2858 = vunpack.c.h.bf16 %v2496
        %v2859 = vunpack.c.l.bf16 %v2497
        %v2860 = vunpack.c.h.bf16 %v2497
        %v2861 = vunpack.c.l.bf16 %v2498
        %v2862 = vunpack.c.h.bf16 %v2498
        %v2863 = vunpack.c.l.bf16 %v2499
        %v2864 = vunpack.c.h.bf16 %v2499
        %v2865 = vunpack.c.l.bf16 %v2500
        %v2866 = vunpack.c.h.bf16 %v2500
        %v2867 = vunpack.c.l.bf16 %v2501
        %v2868 = vunpack.c.h.bf16 %v2501
        %v2869 = vunpack.c.l.bf16 %v2502
        %v2870 = vunpack.c.h.bf16 %v2502
        %v2871 = vunpack.c.l.bf16 %v2503
        %v2872 = vunpack.c.h.bf16 %v2503
        %v2873 = vunpack.c.l.bf16 %v2504
        %v2874 = vunpack.c.h.bf16 %v2504
        %v2875 = vunpack.c.l.bf16 %v2505
        %v2876 = vunpack.c.h.bf16 %v2505
        %v2877 = vunpack.c.l.bf16 %v2506
        %v2878 = vunpack.c.h.bf16 %v2506
        %v2879 = vunpack.c.l.bf16 %v2507
        %v2880 = vunpack.c.h.bf16 %v2507
        %v2881 = vunpack.c.l.bf16 %v2508
        %v2882 = vunpack.c.h.bf16 %v2508
        %v2883 = vunpack.c.l.bf16 %v2509
        %v2884 = vunpack.c.h.bf16 %v2509
        %v2885 = vunpack.c.l.bf16 %v2510
        %v2886 = vunpack.c.h.bf16 %v2510
        %v2887 = vunpack.c.l.bf16 %v2511
        %v2888 = vunpack.c.h.bf16 %v2511
        %v2889 = vunpack.c.l.bf16 %v2512
        %v2890 = vunpack.c.h.bf16 %v2512
        %v2891 = vunpack.c.l.bf16 %v2513
        %v2892 = vunpack.c.h.bf16 %v2513
        %v2893 = vunpack.c.l.bf16 %v2514
        %v2894 = vunpack.c.h.bf16 %v2514
        %v2895 = vunpack.c.l.bf16 %v2515
        %v2896 = vunpack.c.h.bf16 %v2515
        %v2897 = vunpack.c.l.bf16 %v2516
        %v2898 = vunpack.c.h.bf16 %v2516
        %v2899 = vunpack.c.l.bf16 %v2517
        %v2900 = vunpack.c.h.bf16 %v2517
        %v2901 = vunpack.c.l.bf16 %v2518
        %v2902 = vunpack.c.h.bf16 %v2518
        %v2903 = vunpack.c.l.bf16 %v2519
        %v2904 = vunpack.c.h.bf16 %v2519
        %v2905 = vunpack.c.l.bf16 %v2520
        %v2906 = vunpack.c.h.bf16 %v2520
        %v2907 = vunpack.c.l.bf16 %v2521
        %v2908 = vunpack.c.h.bf16 %v2521
        %v2909 = vunpack.c.l.bf16 %v2522
        %v2910 = vunpack.c.h.bf16 %v2522
        %v2911 = vunpack.c.l.bf16 %v2523
        %v2912 = vunpack.c.h.bf16 %v2523
        %v2913 = vunpack.c.l.bf16 %v2524
        %v2914 = vunpack.c.h.bf16 %v2524
        %v2915 = vunpack.c.l.bf16 %v2525
        %v2916 = vunpack.c.h.bf16 %v2525
        %v2917 = vunpack.c.l.bf16 %v2526
        %v2918 = vunpack.c.h.bf16 %v2526
        %v2919 = vunpack.c.l.bf16 %v2527
        %v2920 = vunpack.c.h.bf16 %v2527
        %v2921 = vunpack.c.l.bf16 %v2528
        %v2922 = vunpack.c.h.bf16 %v2528
        %v2923 = vunpack.c.l.bf16 %v2529
        %v2924 = vunpack.c.h.bf16 %v2529
        %v2925 = vunpack.c.l.bf16 %v2530
        %v2926 = vunpack.c.h.bf16 %v2530
        %v2927 = vunpack.c.l.bf16 %v2531
        %v2928 = vunpack.c.h.bf16 %v2531
        %v2929 = vunpack.c.l.bf16 %v2532
        %v2930 = vunpack.c.h.bf16 %v2532
        %v2931 = vunpack.c.l.bf16 %v2533
        %v2932 = vunpack.c.h.bf16 %v2533
        %v2933 = vunpack.c.l.bf16 %v2534
        %v2934 = vunpack.c.h.bf16 %v2534
        %v2935 = vunpack.c.l.bf16 %v2535
        %v2936 = vunpack.c.h.bf16 %v2535
        %v2937 = vunpack.c.l.bf16 %v2536
        %v2938 = vunpack.c.h.bf16 %v2536
        %v2939 = vunpack.c.l.bf16 %v2537
        %v2940 = vunpack.c.h.bf16 %v2537
        %v2941 = vunpack.c.l.bf16 %v2538
        %v2942 = vunpack.c.h.bf16 %v2538
        %v2943 = vunpack.c.l.bf16 %v2539
        %v2944 = vunpack.c.h.bf16 %v2539
        %v2945 = vunpack.c.l.bf16 %v2540
        %v2946 = vunpack.c.h.bf16 %v2540
        %v2947 = vunpack.c.l.bf16 %v2541
        %v2948 = vunpack.c.h.bf16 %v2541
        %v2949 = vunpack.c.l.bf16 %v2542
        %v2950 = vunpack.c.h.bf16 %v2542
        %v2951 = vunpack.c.l.bf16 %v2543
        %v2952 = vunpack.c.h.bf16 %v2543
        %v2953 = vunpack.c.l.bf16 %v2544
        %v2954 = vunpack.c.h.bf16 %v2544
        %v2955 = vunpack.c.l.bf16 %v2545
        %v2956 = vunpack.c.h.bf16 %v2545
        %v2957 = vunpack.c.l.bf16 %v2546
        %v2958 = vunpack.c.h.bf16 %v2546
        %v2959 = vunpack.c.l.bf16 %v2547
        %v2960 = vunpack.c.h.bf16 %v2547
        %v2961 = vunpack.c.l.bf16 %v2548
        %v2962 = vunpack.c.h.bf16 %v2548
        %v2963 = vunpack.c.l.bf16 %v2549
        %v2964 = vunpack.c.h.bf16 %v2549
        %v2965 = vunpack.c.l.bf16 %v2550
        %v2966 = vunpack.c.h.bf16 %v2550
        %v2967 = vunpack.c.l.bf16 %v2551
        %v2968 = vunpack.c.h.bf16 %v2551
        %v2969 = vunpack.c.l.bf16 %v2552
        %v2970 = vunpack.c.h.bf16 %v2552
        %v2971 = vunpack.c.l.bf16 %v2553
        %v2972 = vunpack.c.h.bf16 %v2553
        %v2973 = vunpack.c.l.bf16 %v2554
        %v2974 = vunpack.c.h.bf16 %v2554
        %v2975 = vunpack.c.l.bf16 %v2555
        %v2976 = vunpack.c.h.bf16 %v2555
        %v2977 = vunpack.c.l.bf16 %v2556
        %v2978 = vunpack.c.h.bf16 %v2556
        %v2979 = vunpack.c.l.bf16 %v2557
        %v2980 = vunpack.c.h.bf16 %v2557
        %v2981 = vunpack.c.l.bf16 %v2558
        %v2982 = vunpack.c.h.bf16 %v2558
        %v2983 = vunpack.c.l.bf16 %v2559
        %v2984 = vunpack.c.h.bf16 %v2559
        %v2985 = vunpack.c.l.bf16 %v2560
        %v2986 = vunpack.c.h.bf16 %v2560
        %v2987 = vunpack.c.l.bf16 %v2561
        %v2988 = vunpack.c.h.bf16 %v2561
        %v2989 = vunpack.c.l.bf16 %v2562
        %v2990 = vunpack.c.h.bf16 %v2562
        %v2991 = vunpack.c.l.bf16 %v2563
        %v2992 = vunpack.c.h.bf16 %v2563
        %v2993 = vunpack.c.l.bf16 %v2564
        %v2994 = vunpack.c.h.bf16 %v2564
        %v2995 = vunpack.c.l.bf16 %v2565
        %v2996 = vunpack.c.h.bf16 %v2565
        %v2997 = vunpack.c.l.bf16 %v2566
        %v2998 = vunpack.c.h.bf16 %v2566
        %v2999 = vunpack.c.l.bf16 %v2567
        %v3000 = vunpack.c.h.bf16 %v2567
        %v3001 = vunpack.c.l.bf16 %v2568
        %v3002 = vunpack.c.h.bf16 %v2568
        %v3003 = vunpack.c.l.bf16 %v2569
        %v3004 = vunpack.c.h.bf16 %v2569
        %v3005 = vunpack.c.l.bf16 %v2570
        %v3006 = vunpack.c.h.bf16 %v2570
        %v3007 = vunpack.c.l.bf16 %v2571
        %v3008 = vunpack.c.h.bf16 %v2571
        %v3009 = vunpack.c.l.bf16 %v2572
        %v3010 = vunpack.c.h.bf16 %v2572
        %v3011 = vunpack.c.l.bf16 %v2573
        %v3012 = vunpack.c.h.bf16 %v2573
        %v3013 = vunpack.c.l.bf16 %v2574
        %v3014 = vunpack.c.h.bf16 %v2574
        %v3015 = vunpack.c.l.bf16 %v2575
        %v3016 = vunpack.c.h.bf16 %v2575
        %v3017 = vunpack.c.l.bf16 %v2576
        %v3018 = vunpack.c.h.bf16 %v2576
        %v3019 = vunpack.c.l.bf16 %v2577
        %v3020 = vunpack.c.h.bf16 %v2577
        %v3021 = vunpack.c.l.bf16 %v2578
        %v3022 = vunpack.c.h.bf16 %v2578
        %v3023 = vunpack.c.l.bf16 %v2579
        %v3024 = vunpack.c.h.bf16 %v2579
        %v3025 = vunpack.c.l.bf16 %v2580
        %v3026 = vunpack.c.h.bf16 %v2580
        %v3027 = vunpack.c.l.bf16 %v2581
        %v3028 = vunpack.c.h.bf16 %v2581
        %v3029 = vunpack.c.l.bf16 %v2582
        %v3030 = vunpack.c.h.bf16 %v2582
        %v3031 = vunpack.c.l.bf16 %v2583
        %v3032 = vunpack.c.h.bf16 %v2583
        %v3033 = vunpack.c.l.bf16 %v2584
        %v3034 = vunpack.c.h.bf16 %v2584
        %v3035 = vunpack.c.l.bf16 %v2585
        %v3036 = vunpack.c.h.bf16 %v2585
        %v3037 = vunpack.c.l.bf16 %v2586
        %v3038 = vunpack.c.h.bf16 %v2586
        %v3039 = vunpack.c.l.bf16 %v2587
        %v3040 = vunpack.c.h.bf16 %v2587
        %v3041 = vunpack.c.l.bf16 %v2588
        %v3042 = vunpack.c.h.bf16 %v2588
        %v3043 = vunpack.c.l.bf16 %v2589
        %v3044 = vunpack.c.h.bf16 %v2589
        %v3045 = vunpack.c.l.bf16 %v2590
        %v3046 = vunpack.c.h.bf16 %v2590
        %v3047 = vunpack.c.l.bf16 %v2591
        %v3048 = vunpack.c.h.bf16 %v2591
        %v3049 = vunpack.c.l.bf16 %v2592
        %v3050 = vunpack.c.h.bf16 %v2592
        %v3051 = vunpack.c.l.bf16 %v2593
        %v3052 = vunpack.c.h.bf16 %v2593
        %v3053 = vunpack.c.l.bf16 %v2594
        %v3054 = vunpack.c.h.bf16 %v2594
        %v3055 = vunpack.c.l.bf16 %v2595
        %v3056 = vunpack.c.h.bf16 %v2595
        %v3057 = vunpack.c.l.bf16 %v2596
        %v3058 = vunpack.c.h.bf16 %v2596
        %v3059 = vunpack.c.l.bf16 %v2597
        %v3060 = vunpack.c.h.bf16 %v2597
        %v3061 = vunpack.c.l.bf16 %v2598
        %v3062 = vunpack.c.h.bf16 %v2598
        %v3063 = vunpack.c.l.bf16 %v2599
        %v3064 = vunpack.c.h.bf16 %v2599
        %v3065 = vunpack.c.l.bf16 %v2600
        %v3066 = vunpack.c.h.bf16 %v2600
        %v3067 = vunpack.c.l.bf16 %v2601
        %v3068 = vunpack.c.h.bf16 %v2601
        %v3069 = vunpack.c.l.bf16 %v2602
        %v3070 = vunpack.c.h.bf16 %v2602
        %v3071 = vunpack.c.l.bf16 %v2603
        %v3072 = vunpack.c.h.bf16 %v2603
        %v3073 = vunpack.c.l.bf16 %v2604
        %v3074 = vunpack.c.h.bf16 %v2604
        %v3075 = vunpack.c.l.bf16 %v2605
        %v3076 = vunpack.c.h.bf16 %v2605
        %v3077 = vunpack.c.l.bf16 %v2606
        %v3078 = vunpack.c.h.bf16 %v2606
        %v3079 = vunpack.c.l.bf16 %v2607
        %v3080 = vunpack.c.h.bf16 %v2607
        %v3081 = vunpack.c.l.bf16 %v2608
        %v3082 = vunpack.c.h.bf16 %v2608
        %v3083 = vunpack.c.l.bf16 %v2609
        %v3084 = vunpack.c.h.bf16 %v2609
        %v3085 = vunpack.c.l.bf16 %v2610
        %v3086 = vunpack.c.h.bf16 %v2610
        %v3087 = vunpack.c.l.bf16 %v2611
        %v3088 = vunpack.c.h.bf16 %v2611
        %v3089 = vunpack.c.l.bf16 %v2612
        %v3090 = vunpack.c.h.bf16 %v2612
        %v3091 = vunpack.c.l.bf16 %v2613
        %v3092 = vunpack.c.h.bf16 %v2613
        %v3093 = vunpack.c.l.bf16 %v2614
        %v3094 = vunpack.c.h.bf16 %v2614
        %v3095 = vunpack.c.l.bf16 %v2615
        %v3096 = vunpack.c.h.bf16 %v2615
        %v3097 = vunpack.c.l.bf16 %v2616
        %v3098 = vunpack.c.h.bf16 %v2616
        %v3099 = vunpack.c.l.bf16 %v2617
        %v3100 = vunpack.c.h.bf16 %v2617
        %v3101 = vunpack.c.l.bf16 %v2618
        %v3102 = vunpack.c.h.bf16 %v2618
        %v3103 = vunpack.c.l.bf16 %v2619
        %v3104 = vunpack.c.h.bf16 %v2619
        %v3105 = vunpack.c.l.bf16 %v2620
        %v3106 = vunpack.c.h.bf16 %v2620
        %v3107 = vunpack.c.l.bf16 %v2621
        %v3108 = vunpack.c.h.bf16 %v2621
        %v3109 = vunpack.c.l.bf16 %v2622
        %v3110 = vunpack.c.h.bf16 %v2622
        %v3111 = vunpack.c.l.bf16 %v2623
        %v3112 = vunpack.c.h.bf16 %v2623
        %v3113 = vunpack.c.l.bf16 %v2624
        %v3114 = vunpack.c.h.bf16 %v2624
        %v3115 = vunpack.c.l.bf16 %v2625
        %v3116 = vunpack.c.h.bf16 %v2625
        %v3117 = vunpack.c.l.bf16 %v2626
        %v3118 = vunpack.c.h.bf16 %v2626
        %v3119 = vunpack.c.l.bf16 %v2627
        %v3120 = vunpack.c.h.bf16 %v2627
        %v3121 = vunpack.c.l.bf16 %v2628
        %v3122 = vunpack.c.h.bf16 %v2628
        %v3123 = vunpack.c.l.bf16 %v2629
        %v3124 = vunpack.c.h.bf16 %v2629
        %v3125 = vunpack.c.l.bf16 %v2630
        %v3126 = vunpack.c.h.bf16 %v2630
        %v3127 = vunpack.c.l.bf16 %v2631
        %v3128 = vunpack.c.h.bf16 %v2631
        %v3129 = vunpack.c.l.bf16 %v2632
        %v3130 = vunpack.c.h.bf16 %v2632
        %v3131 = vunpack.c.l.bf16 %v2633
        %v3132 = vunpack.c.h.bf16 %v2633
        %v3133 = vunpack.c.l.bf16 %v2634
        %v3134 = vunpack.c.h.bf16 %v2634
        %v3135 = vunpack.c.l.bf16 %v2635
        %v3136 = vunpack.c.h.bf16 %v2635
        %v3137 = vunpack.c.l.bf16 %v2636
        %v3138 = vunpack.c.h.bf16 %v2636
        %v3139 = vunpack.c.l.bf16 %v2637
        %v3140 = vunpack.c.h.bf16 %v2637
        %v3141 = vunpack.c.l.bf16 %v2638
        %v3142 = vunpack.c.h.bf16 %v2638
        %v3143 = vunpack.c.l.bf16 %v2639
        %v3144 = vunpack.c.h.bf16 %v2639
        %v3145 = vunpack.c.l.bf16 %v2640
        %v3146 = vunpack.c.h.bf16 %v2640
        %v3147 = vunpack.c.l.bf16 %v2641
        %v3148 = vunpack.c.h.bf16 %v2641
        %v3149 = vunpack.c.l.bf16 %v2642
        %v3150 = vunpack.c.h.bf16 %v2642
        %v3151 = vunpack.c.l.bf16 %v2643
        %v3152 = vunpack.c.h.bf16 %v2643
        %v3153 = vunpack.c.l.bf16 %v2644
        %v3154 = vunpack.c.h.bf16 %v2644
        %v3155 = vunpack.c.l.bf16 %v2645
        %v3156 = vunpack.c.h.bf16 %v2645
        %v3157 = vunpack.c.l.bf16 %v2646
        %v3158 = vunpack.c.h.bf16 %v2646
        %v3159 = vunpack.c.l.bf16 %v2647
        %v3160 = vunpack.c.h.bf16 %v2647
        %v3161 = vunpack.c.l.bf16 %v2648
        %v3162 = vunpack.c.h.bf16 %v2648
        %v3163 = vunpack.c.l.bf16 %v2649
        %v3164 = vunpack.c.h.bf16 %v2649
        %v3165 = vunpack.c.l.bf16 %v2650
        %v3166 = vunpack.c.h.bf16 %v2650
        %v3167 = vunpack.c.l.bf16 %v2651
        %v3168 = vunpack.c.h.bf16 %v2651
        %v3169 = vunpack.c.l.bf16 %v2652
        %v3170 = vunpack.c.h.bf16 %v2652
        %v3171 = vunpack.c.l.bf16 %v2653
        %v3172 = vunpack.c.h.bf16 %v2653
        %v3173 = vunpack.c.l.bf16 %v2654
        %v3174 = vunpack.c.h.bf16 %v2654
        %v3175 = vunpack.c.l.bf16 %v2655
        %v3176 = vunpack.c.h.bf16 %v2655
        %v3177 = vunpack.c.l.bf16 %v2656
        %v3178 = vunpack.c.h.bf16 %v2656
        %v3179 = vunpack.c.l.bf16 %v2657
        %v3180 = vunpack.c.h.bf16 %v2657
        %v3181 = vunpack.c.l.bf16 %v2658
        %v3182 = vunpack.c.h.bf16 %v2658
        %v3183 = vunpack.c.l.bf16 %v2659
        %v3184 = vunpack.c.h.bf16 %v2659
        %v3185 = vunpack.c.l.bf16 %v2660
        %v3186 = vunpack.c.h.bf16 %v2660
        %v3187 = vunpack.c.l.bf16 %v2661
        %v3188 = vunpack.c.h.bf16 %v2661
        %v3189 = vunpack.c.l.bf16 %v2662
        %v3190 = vunpack.c.h.bf16 %v2662
        %v3191 = vunpack.c.l.bf16 %v2663
        %v3192 = vunpack.c.h.bf16 %v2663
        %v3193 = vunpack.c.l.bf16 %v2664
        %v3194 = vunpack.c.h.bf16 %v2664
        %v3195 = vunpack.c.l.bf16 %v2665
        %v3196 = vunpack.c.h.bf16 %v2665
        %v3197 = vunpack.c.l.bf16 %v2666
        %v3198 = vunpack.c.h.bf16 %v2666
        %v3199 = vunpack.c.l.bf16 %v2667
        %v3200 = vunpack.c.h.bf16 %v2667
        %v3201 = vunpack.c.l.bf16 %v2668
        %v3202 = vunpack.c.h.bf16 %v2668
        %v3203 = vunpack.c.l.bf16 %v2669
        %v3204 = vunpack.c.h.bf16 %v2669
        %v3205 = vunpack.c.l.bf16 %v2670
        %v3206 = vunpack.c.h.bf16 %v2670
        %v3207 = vunpack.c.l.bf16 %v2671
        %v3208 = vunpack.c.h.bf16 %v2671
        %v3209 = vunpack.c.l.bf16 %v2672
        %v3210 = vunpack.c.h.bf16 %v2672
        %v3211 = vunpack.c.l.bf16 %v2673
        %v3212 = vunpack.c.h.bf16 %v2673
        %v3213 = vunpack.c.l.bf16 %v2674
        %v3214 = vunpack.c.h.bf16 %v2674
        %v3215 = vunpack.c.l.bf16 %v2675
        %v3216 = vunpack.c.h.bf16 %v2675
        %v3217 = vunpack.c.l.bf16 %v2676
        %v3218 = vunpack.c.h.bf16 %v2676
        %v3219 = vunpack.c.l.bf16 %v2677
        %v3220 = vunpack.c.h.bf16 %v2677
        %v3221 = vunpack.c.l.bf16 %v2678
        %v3222 = vunpack.c.h.bf16 %v2678
        %v3223 = vunpack.c.l.bf16 %v2679
        %v3224 = vunpack.c.h.bf16 %v2679
        %v3225 = vunpack.c.l.bf16 %v2680
        %v3226 = vunpack.c.h.bf16 %v2680
        %v3227 = vunpack.c.l.bf16 %v2681
        %v3228 = vunpack.c.h.bf16 %v2681
        %v3229 = vunpack.c.l.bf16 %v2682
        %v3230 = vunpack.c.h.bf16 %v2682
        %v3231 = vunpack.c.l.bf16 %v2683
        %v3232 = vunpack.c.h.bf16 %v2683
        %v3233 = vunpack.c.l.bf16 %v2684
        %v3234 = vunpack.c.h.bf16 %v2684
        %v3235 = vunpack.c.l.bf16 %v2685
        %v3236 = vunpack.c.h.bf16 %v2685
        %v3237 = vunpack.c.l.bf16 %v2686
        %v3238 = vunpack.c.h.bf16 %v2686
        %v3239 = vunpack.c.l.bf16 %v2687
        %v3240 = vunpack.c.h.bf16 %v2687
        %v3241 = vunpack.c.l.bf16 %v2688
        %v3242 = vunpack.c.h.bf16 %v2688
        %v3243 = vunpack.c.l.bf16 %v2689
        %v3244 = vunpack.c.h.bf16 %v2689
        %v3245 = vunpack.c.l.bf16 %v2690
        %v3246 = vunpack.c.h.bf16 %v2690
        %v3247 = vunpack.c.l.bf16 %v2691
        %v3248 = vunpack.c.h.bf16 %v2691
        %v3249 = vunpack.c.l.bf16 %v2692
        %v3250 = vunpack.c.h.bf16 %v2692
        %v3251 = vunpack.c.l.bf16 %v2693
        %v3252 = vunpack.c.h.bf16 %v2693
        %v3253 = vunpack.c.l.bf16 %v2694
        %v3254 = vunpack.c.h.bf16 %v2694
        %v3255 = vunpack.c.l.bf16 %v2695
        %v3256 = vunpack.c.h.bf16 %v2695
        %v3257 = vunpack.c.l.bf16 %v2696
        %v3258 = vunpack.c.h.bf16 %v2696
        %v3259 = vunpack.c.l.bf16 %v2697
        %v3260 = vunpack.c.h.bf16 %v2697
        %v3261 = vunpack.c.l.bf16 %v2698
        %v3262 = vunpack.c.h.bf16 %v2698
        %v3263 = vunpack.c.l.bf16 %v2699
        %v3264 = vunpack.c.h.bf16 %v2699
        %v3265 = vunpack.c.l.bf16 %v2700
        %v3266 = vunpack.c.h.bf16 %v2700
        %v3267 = vunpack.c.l.bf16 %v2701
        %v3268 = vunpack.c.h.bf16 %v2701
        %v3269 = vunpack.c.l.bf16 %v2702
        %v3270 = vunpack.c.h.bf16 %v2702
        %v3271 = vunpack.c.l.bf16 %v2703
        %v3272 = vunpack.c.h.bf16 %v2703
        %v3273 = vunpack.c.l.bf16 %v2704
        %v3274 = vunpack.c.h.bf16 %v2704
        %v3275 = vunpack.c.l.bf16 %v2705
        %v3276 = vunpack.c.h.bf16 %v2705
        %v3277 = vunpack.c.l.bf16 %v2706
        %v3278 = vunpack.c.h.bf16 %v2706
        %v3279 = vunpack.c.l.bf16 %v2707
        %v3280 = vunpack.c.h.bf16 %v2707
        %v3281 = vunpack.c.l.bf16 %v2708
        %v3282 = vunpack.c.h.bf16 %v2708
        %v3283 = vunpack.c.l.bf16 %v2709
        %v3284 = vunpack.c.h.bf16 %v2709
        %v3285 = vunpack.c.l.bf16 %v2710
        %v3286 = vunpack.c.h.bf16 %v2710
        %3287 = vxpose.xlu0.b32.start [1/16] %v2132, 128
        %3288 = vxpose.xlu0.b32.cont [2/16] %v2133, 128
        %3289 = vxpose.xlu0.b32.cont [3/16] %v2134, 128
        %3290 = vxpose.xlu0.b32.cont [4/16] %v2135, 128
        %3291 = vxpose.xlu0.b32.cont [5/16] %v2136, 128
        %3292 = vxpose.xlu0.b32.cont [6/16] %v2137, 128
        %3293 = vxpose.xlu0.b32.cont [7/16] %v2138, 128
        %3294 = vxpose.xlu0.b32.cont [8/16] %v2139, 128
        %3295 = vxpose.xlu0.b32.cont [9/16] %v2140, 128
        %3296 = vxpose.xlu0.b32.cont [10/16] %v2141, 128
        %3297 = vxpose.xlu0.b32.cont [11/16] %v2142, 128
        %3298 = vxpose.xlu0.b32.cont [12/16] %v2143, 128
        %3299 = vxpose.xlu0.b32.cont [13/16] %v2144, 128
        %3300 = vxpose.xlu0.b32.cont [14/16] %v2145, 128
        %3301 = vxpose.xlu0.b32.cont [15/16] %v2146, 128
        %3302 = vxpose.xlu0.b32.end [16/16] %v2147, 128
        %v3303 = vpop.trf.xlu0
        %v3304 = vpop.trf.xlu0
        %v3305 = vpop.trf.xlu0
        %v3306 = vpop.trf.xlu0
        %v3307 = vpop.trf.xlu0
        %v3308 = vpop.trf.xlu0
        %v3309 = vpop.trf.xlu0
        %v3310 = vpop.trf.xlu0
        %v3311 = vpop.trf.xlu0
        %v3312 = vpop.trf.xlu0
        %v3313 = vpop.trf.xlu0
        %v3314 = vpop.trf.xlu0
        %v3315 = vpop.trf.xlu0
        %v3316 = vpop.trf.xlu0
        %v3317 = vpop.trf.xlu0
        %v3318 = vpop.trf.xlu0
        %3319 = vmatprep.subr.mxu0 %v2712
        %3320 = vmatpush1.msra.mxu0 %v2711
        %3321 = vmatprep.subr.mxu0 %v2748
        %3322 = vmatpush1.msra.mxu0 %v2747
        %3323 = vmatprep.subr.mxu0 %v2784
        %3324 = vmatpush1.msra.mxu0 %v2783
        %3325 = vmatprep.subr.mxu0 %v2820
        %3326 = vmatpush1.msra.mxu0 %v2819
        %3327 = vmatprep.subr.mxu0 %v2856
        %3328 = vmatpush1.msra.mxu0 %v2855
        %3329 = vmatprep.subr.mxu0 %v2892
        %3330 = vmatpush1.msra.mxu0 %v2891
        %3331 = vmatprep.subr.mxu0 %v2928
        %3332 = vmatpush1.msra.mxu0 %v2927
        %3333 = vmatprep.subr.mxu0 %v2964
        %3334 = vmatpush1.msra.mxu0 %v2963
        %3335 = vmatprep.subr.mxu0 %v3000
        %3336 = vmatpush1.msra.mxu0 %v2999
        %3337 = vmatprep.subr.mxu0 %v3036
        %3338 = vmatpush1.msra.mxu0 %v3035
        %3339 = vmatprep.subr.mxu0 %v3072
        %3340 = vmatpush1.msra.mxu0 %v3071
        %3341 = vmatprep.subr.mxu0 %v3108
        %3342 = vmatpush1.msra.mxu0 %v3107
        %3343 = vmatprep.subr.mxu0 %v3144
        %3344 = vmatpush1.msra.mxu0 %v3143
        %3345 = vmatprep.subr.mxu0 %v3180
        %3346 = vmatpush1.msra.mxu0 %v3179
        %3347 = vmatprep.subr.mxu0 %v3216
        %3348 = vmatpush1.msra.mxu0 %v3215
        %3349 = vmatprep.subr.mxu0 %v3252
        %3350 = vmatpush1.msra.mxu0 %v3251
        %3351 = vmatprep.subr.mxu0 0.0
        %3352 = vmatpush1.msra.mxu0 0.0
        %3353 = vmatprep.subr.mxu0 0.0
        %3354 = vmatpush1.msra.mxu0 0.0
        %3355 = vmatprep.subr.mxu0 0.0
        %3356 = vmatpush1.msra.mxu0 0.0
        %3357 = vmatprep.subr.mxu0 0.0
        %3358 = vmatpush1.msra.mxu0 0.0
        %3359 = vmatprep.subr.mxu0 0.0
        %3360 = vmatpush1.msra.mxu0 0.0
        %3361 = vmatprep.subr.mxu0 0.0
        %3362 = vmatpush1.msra.mxu0 0.0
        %3363 = vmatprep.subr.mxu0 0.0
        %3364 = vmatpush1.msra.mxu0 0.0
        %3365 = vmatprep.subr.mxu0 0.0
        %3366 = vmatpush1.msra.mxu0 0.0
        %3367 = vmatprep.subr.mxu0 0.0
        %3368 = vmatpush1.msra.mxu0 0.0
        %3369 = vmatprep.subr.mxu0 0.0
        %3370 = vmatpush1.msra.mxu0 0.0
        %3371 = vmatprep.subr.mxu0 0.0
        %3372 = vmatpush1.msra.mxu0 0.0
        %3373 = vmatprep.subr.mxu0 0.0
        %3374 = vmatpush1.msra.mxu0 0.0
        %3375 = vmatprep.subr.mxu0 0.0
        %3376 = vmatpush1.msra.mxu0 0.0
        %3377 = vmatprep.subr.mxu0 0.0
        %3378 = vmatpush1.msra.mxu0 0.0
        %3379 = vmatprep.subr.mxu0 0.0
        %3380 = vmatpush1.msra.mxu0 0.0
        %3381 = vmatprep.subr.mxu0 0.0
        %3382 = vmatpush1.msra.mxu0 0.0
        %3383 = vmatprep.mubr.f32.mxu0 0.0
        %3384 = vmatmul.mubr.f32.gmra.mrb[0].mxu0 %v3303
        %v3385 = vpop.f32.mrb[0].mxu0
        %v3386 = vadd.f32 0.0, %v3385
        %v3387 = vpop.f32.mrb[0].mxu0
        %v3388 = vadd.f32 0.0, %v3387
        %3389 = vdwg.mxu0
        %3390 = vmatprep.subr.mxu0 %v2714
        %3391 = vmatpush1.msra.mxu0 %v2713
        %3392 = vmatprep.subr.mxu0 %v2750
        %3393 = vmatpush1.msra.mxu0 %v2749
        %3394 = vmatprep.subr.mxu0 %v2786
        %3395 = vmatpush1.msra.mxu0 %v2785
        %3396 = vmatprep.subr.mxu0 %v2822
        %3397 = vmatpush1.msra.mxu0 %v2821
        %3398 = vmatprep.subr.mxu0 %v2858
        %3399 = vmatpush1.msra.mxu0 %v2857
        %3400 = vmatprep.subr.mxu0 %v2894
        %3401 = vmatpush1.msra.mxu0 %v2893
        %3402 = vmatprep.subr.mxu0 %v2930
        %3403 = vmatpush1.msra.mxu0 %v2929
        %3404 = vmatprep.subr.mxu0 %v2966
        %3405 = vmatpush1.msra.mxu0 %v2965
        %3406 = vmatprep.subr.mxu0 %v3002
        %3407 = vmatpush1.msra.mxu0 %v3001
        %3408 = vmatprep.subr.mxu0 %v3038
        %3409 = vmatpush1.msra.mxu0 %v3037
        %3410 = vmatprep.subr.mxu0 %v3074
        %3411 = vmatpush1.msra.mxu0 %v3073
        %3412 = vmatprep.subr.mxu0 %v3110
        %3413 = vmatpush1.msra.mxu0 %v3109
        %3414 = vmatprep.subr.mxu0 %v3146
        %3415 = vmatpush1.msra.mxu0 %v3145
        %3416 = vmatprep.subr.mxu0 %v3182
        %3417 = vmatpush1.msra.mxu0 %v3181
        %3418 = vmatprep.subr.mxu0 %v3218
        %3419 = vmatpush1.msra.mxu0 %v3217
        %3420 = vmatprep.subr.mxu0 %v3254
        %3421 = vmatpush1.msra.mxu0 %v3253
        %3422 = vmatprep.subr.mxu0 0.0
        %3423 = vmatpush1.msra.mxu0 0.0
        %3424 = vmatprep.subr.mxu0 0.0
        %3425 = vmatpush1.msra.mxu0 0.0
        %3426 = vmatprep.subr.mxu0 0.0
        %3427 = vmatpush1.msra.mxu0 0.0
        %3428 = vmatprep.subr.mxu0 0.0
        %3429 = vmatpush1.msra.mxu0 0.0
        %3430 = vmatprep.subr.mxu0 0.0
        %3431 = vmatpush1.msra.mxu0 0.0
        %3432 = vmatprep.subr.mxu0 0.0
        %3433 = vmatpush1.msra.mxu0 0.0
        %3434 = vmatprep.subr.mxu0 0.0
        %3435 = vmatpush1.msra.mxu0 0.0
        %3436 = vmatprep.subr.mxu0 0.0
        %3437 = vmatpush1.msra.mxu0 0.0
        %3438 = vmatprep.subr.mxu0 0.0
        %3439 = vmatpush1.msra.mxu0 0.0
        %3440 = vmatprep.subr.mxu0 0.0
        %3441 = vmatpush1.msra.mxu0 0.0
        %3442 = vmatprep.subr.mxu0 0.0
        %3443 = vmatpush1.msra.mxu0 0.0
        %3444 = vmatprep.subr.mxu0 0.0
        %3445 = vmatpush1.msra.mxu0 0.0
        %3446 = vmatprep.subr.mxu0 0.0
        %3447 = vmatpush1.msra.mxu0 0.0
        %3448 = vmatprep.subr.mxu0 0.0
        %3449 = vmatpush1.msra.mxu0 0.0
        %3450 = vmatprep.subr.mxu0 0.0
        %3451 = vmatpush1.msra.mxu0 0.0
        %3452 = vmatprep.subr.mxu0 0.0
        %3453 = vmatpush1.msra.mxu0 0.0
        %3454 = vmatprep.mubr.f32.mxu0 0.0
        %3455 = vmatmul.mubr.f32.gmra.mrb[0].mxu0 %v3303
        %v3456 = vpop.f32.mrb[0].mxu0
        %v3457 = vadd.f32 0.0, %v3456
        %v3458 = vpop.f32.mrb[0].mxu0
        %v3459 = vadd.f32 0.0, %v3458
        %3460 = vdwg.mxu0
        %3461 = vmatprep.subr.mxu0 %v2716
        %3462 = vmatpush1.msra.mxu0 %v2715
        %3463 = vmatprep.subr.mxu0 %v2752
        %3464 = vmatpush1.msra.mxu0 %v2751
        %3465 = vmatprep.subr.mxu0 %v2788
        %3466 = vmatpush1.msra.mxu0 %v2787
        %3467 = vmatprep.subr.mxu0 %v2824
        %3468 = vmatpush1.msra.mxu0 %v2823
        %3469 = vmatprep.subr.mxu0 %v2860
        %3470 = vmatpush1.msra.mxu0 %v2859
        %3471 = vmatprep.subr.mxu0 %v2896
        %3472 = vmatpush1.msra.mxu0 %v2895
        %3473 = vmatprep.subr.mxu0 %v2932
        %3474 = vmatpush1.msra.mxu0 %v2931
        %3475 = vmatprep.subr.mxu0 %v2968
        %3476 = vmatpush1.msra.mxu0 %v2967
        %3477 = vmatprep.subr.mxu0 %v3004
        %3478 = vmatpush1.msra.mxu0 %v3003
        %3479 = vmatprep.subr.mxu0 %v3040
        %3480 = vmatpush1.msra.mxu0 %v3039
        %3481 = vmatprep.subr.mxu0 %v3076
        %3482 = vmatpush1.msra.mxu0 %v3075
        %3483 = vmatprep.subr.mxu0 %v3112
        %3484 = vmatpush1.msra.mxu0 %v3111
        %3485 = vmatprep.subr.mxu0 %v3148
        %3486 = vmatpush1.msra.mxu0 %v3147
        %3487 = vmatprep.subr.mxu0 %v3184
        %3488 = vmatpush1.msra.mxu0 %v3183
        %3489 = vmatprep.subr.mxu0 %v3220
        %3490 = vmatpush1.msra.mxu0 %v3219
        %3491 = vmatprep.subr.mxu0 %v3256
        %3492 = vmatpush1.msra.mxu0 %v3255
        %3493 = vmatprep.subr.mxu0 0.0
        %3494 = vmatpush1.msra.mxu0 0.0
        %3495 = vmatprep.subr.mxu0 0.0
        %3496 = vmatpush1.msra.mxu0 0.0
        %3497 = vmatprep.subr.mxu0 0.0
        %3498 = vmatpush1.msra.mxu0 0.0
        %3499 = vmatprep.subr.mxu0 0.0
        %3500 = vmatpush1.msra.mxu0 0.0
        %3501 = vmatprep.subr.mxu0 0.0
        %3502 = vmatpush1.msra.mxu0 0.0
        %3503 = vmatprep.subr.mxu0 0.0
        %3504 = vmatpush1.msra.mxu0 0.0
        %3505 = vmatprep.subr.mxu0 0.0
        %3506 = vmatpush1.msra.mxu0 0.0
        %3507 = vmatprep.subr.mxu0 0.0
        %3508 = vmatpush1.msra.mxu0 0.0
        %3509 = vmatprep.subr.mxu0 0.0
        %3510 = vmatpush1.msra.mxu0 0.0
        %3511 = vmatprep.subr.mxu0 0.0
        %3512 = vmatpush1.msra.mxu0 0.0
        %3513 = vmatprep.subr.mxu0 0.0
        %3514 = vmatpush1.msra.mxu0 0.0
        %3515 = vmatprep.subr.mxu0 0.0
        %3516 = vmatpush1.msra.mxu0 0.0
        %3517 = vmatprep.subr.mxu0 0.0
        %3518 = vmatpush1.msra.mxu0 0.0
        %3519 = vmatprep.subr.mxu0 0.0
        %3520 = vmatpush1.msra.mxu0 0.0
        %3521 = vmatprep.subr.mxu0 0.0
        %3522 = vmatpush1.msra.mxu0 0.0
        %3523 = vmatprep.subr.mxu0 0.0
        %3524 = vmatpush1.msra.mxu0 0.0
        %3525 = vmatprep.mubr.f32.mxu0 0.0
        %3526 = vmatmul.mubr.f32.gmra.mrb[0].mxu0 %v3303
        %v3527 = vpop.f32.mrb[0].mxu0
        %v3528 = vadd.f32 0.0, %v3527
        %v3529 = vpop.f32.mrb[0].mxu0
        %v3530 = vadd.f32 0.0, %v3529
        %3531 = vdwg.mxu0
        %3532 = vmatprep.subr.mxu0 %v2718
        %3533 = vmatpush1.msra.mxu0 %v2717
        %3534 = vmatprep.subr.mxu0 %v2754
        %3535 = vmatpush1.msra.mxu0 %v2753
        %3536 = vmatprep.subr.mxu0 %v2790
        %3537 = vmatpush1.msra.mxu0 %v2789
        %3538 = vmatprep.subr.mxu0 %v2826
        %3539 = vmatpush1.msra.mxu0 %v2825
        %3540 = vmatprep.subr.mxu0 %v2862
        %3541 = vmatpush1.msra.mxu0 %v2861
        %3542 = vmatprep.subr.mxu0 %v2898
        %3543 = vmatpush1.msra.mxu0 %v2897
        %3544 = vmatprep.subr.mxu0 %v2934
        %3545 = vmatpush1.msra.mxu0 %v2933
        %3546 = vmatprep.subr.mxu0 %v2970
        %3547 = vmatpush1.msra.mxu0 %v2969
        %3548 = vmatprep.subr.mxu0 %v3006
        %3549 = vmatpush1.msra.mxu0 %v3005
        %3550 = vmatprep.subr.mxu0 %v3042
        %3551 = vmatpush1.msra.mxu0 %v3041
        %3552 = vmatprep.subr.mxu0 %v3078
        %3553 = vmatpush1.msra.mxu0 %v3077
        %3554 = vmatprep.subr.mxu0 %v3114
        %3555 = vmatpush1.msra.mxu0 %v3113
        %3556 = vmatprep.subr.mxu0 %v3150
        %3557 = vmatpush1.msra.mxu0 %v3149
        %3558 = vmatprep.subr.mxu0 %v3186
        %3559 = vmatpush1.msra.mxu0 %v3185
        %3560 = vmatprep.subr.mxu0 %v3222
        %3561 = vmatpush1.msra.mxu0 %v3221
        %3562 = vmatprep.subr.mxu0 %v3258
        %3563 = vmatpush1.msra.mxu0 %v3257
        %3564 = vmatprep.subr.mxu0 0.0
        %3565 = vmatpush1.msra.mxu0 0.0
        %3566 = vmatprep.subr.mxu0 0.0
        %3567 = vmatpush1.msra.mxu0 0.0
        %3568 = vmatprep.subr.mxu0 0.0
        %3569 = vmatpush1.msra.mxu0 0.0
        %3570 = vmatprep.subr.mxu0 0.0
        %3571 = vmatpush1.msra.mxu0 0.0
        %3572 = vmatprep.subr.mxu0 0.0
        %3573 = vmatpush1.msra.mxu0 0.0
        %3574 = vmatprep.subr.mxu0 0.0
        %3575 = vmatpush1.msra.mxu0 0.0
        %3576 = vmatprep.subr.mxu0 0.0
        %3577 = vmatpush1.msra.mxu0 0.0
        %3578 = vmatprep.subr.mxu0 0.0
        %3579 = vmatpush1.msra.mxu0 0.0
        %3580 = vmatprep.subr.mxu0 0.0
        %3581 = vmatpush1.msra.mxu0 0.0
        %3582 = vmatprep.subr.mxu0 0.0
        %3583 = vmatpush1.msra.mxu0 0.0
        %3584 = vmatprep.subr.mxu0 0.0
        %3585 = vmatpush1.msra.mxu0 0.0
        %3586 = vmatprep.subr.mxu0 0.0
        %3587 = vmatpush1.msra.mxu0 0.0
        %3588 = vmatprep.subr.mxu0 0.0
        %3589 = vmatpush1.msra.mxu0 0.0
        %3590 = vmatprep.subr.mxu0 0.0
        %3591 = vmatpush1.msra.mxu0 0.0
        %3592 = vmatprep.subr.mxu0 0.0
        %3593 = vmatpush1.msra.mxu0 0.0
        %3594 = vmatprep.subr.mxu0 0.0
        %3595 = vmatpush1.msra.mxu0 0.0
        %3596 = vmatprep.mubr.f32.mxu0 0.0
        %3597 = vmatmul.mubr.f32.gmra.mrb[0].mxu0 %v3303
        %v3598 = vpop.f32.mrb[0].mxu0
        %v3599 = vadd.f32 0.0, %v3598
        %v3600 = vpop.f32.mrb[0].mxu0
        %v3601 = vadd.f32 0.0, %v3600
        %3602 = vdwg.mxu0
        %3603 = vmatprep.subr.mxu0 %v2720
        %3604 = vmatpush1.msra.mxu0 %v2719
        %3605 = vmatprep.subr.mxu0 %v2756
        %3606 = vmatpush1.msra.mxu0 %v2755
        %3607 = vmatprep.subr.mxu0 %v2792
        %3608 = vmatpush1.msra.mxu0 %v2791
        %3609 = vmatprep.subr.mxu0 %v2828
        %3610 = vmatpush1.msra.mxu0 %v2827
        %3611 = vmatprep.subr.mxu0 %v2864
        %3612 = vmatpush1.msra.mxu0 %v2863
        %3613 = vmatprep.subr.mxu0 %v2900
        %3614 = vmatpush1.msra.mxu0 %v2899
        %3615 = vmatprep.subr.mxu0 %v2936
        %3616 = vmatpush1.msra.mxu0 %v2935
        %3617 = vmatprep.subr.mxu0 %v2972
        %3618 = vmatpush1.msra.mxu0 %v2971
        %3619 = vmatprep.subr.mxu0 %v3008
        %3620 = vmatpush1.msra.mxu0 %v3007
        %3621 = vmatprep.subr.mxu0 %v3044
        %3622 = vmatpush1.msra.mxu0 %v3043
        %3623 = vmatprep.subr.mxu0 %v3080
        %3624 = vmatpush1.msra.mxu0 %v3079
        %3625 = vmatprep.subr.mxu0 %v3116
        %3626 = vmatpush1.msra.mxu0 %v3115
        %3627 = vmatprep.subr.mxu0 %v3152
        %3628 = vmatpush1.msra.mxu0 %v3151
        %3629 = vmatprep.subr.mxu0 %v3188
        %3630 = vmatpush1.msra.mxu0 %v3187
        %3631 = vmatprep.subr.mxu0 %v3224
        %3632 = vmatpush1.msra.mxu0 %v3223
        %3633 = vmatprep.subr.mxu0 %v3260
        %3634 = vmatpush1.msra.mxu0 %v3259
        %3635 = vmatprep.subr.mxu0 0.0
        %3636 = vmatpush1.msra.mxu0 0.0
        %3637 = vmatprep.subr.mxu0 0.0
        %3638 = vmatpush1.msra.mxu0 0.0
        %3639 = vmatprep.subr.mxu0 0.0
        %3640 = vmatpush1.msra.mxu0 0.0
        %3641 = vmatprep.subr.mxu0 0.0
        %3642 = vmatpush1.msra.mxu0 0.0
        %3643 = vmatprep.subr.mxu0 0.0
        %3644 = vmatpush1.msra.mxu0 0.0
        %3645 = vmatprep.subr.mxu0 0.0
        %3646 = vmatpush1.msra.mxu0 0.0
        %3647 = vmatprep.subr.mxu0 0.0
        %3648 = vmatpush1.msra.mxu0 0.0
        %3649 = vmatprep.subr.mxu0 0.0
        %3650 = vmatpush1.msra.mxu0 0.0
        %3651 = vmatprep.subr.mxu0 0.0
        %3652 = vmatpush1.msra.mxu0 0.0
        %3653 = vmatprep.subr.mxu0 0.0
        %3654 = vmatpush1.msra.mxu0 0.0
        %3655 = vmatprep.subr.mxu0 0.0
        %3656 = vmatpush1.msra.mxu0 0.0
        %3657 = vmatprep.subr.mxu0 0.0
        %3658 = vmatpush1.msra.mxu0 0.0
        %3659 = vmatprep.subr.mxu0 0.0
        %3660 = vmatpush1.msra.mxu0 0.0
        %3661 = vmatprep.subr.mxu0 0.0
        %3662 = vmatpush1.msra.mxu0 0.0
        %3663 = vmatprep.subr.mxu0 0.0
        %3664 = vmatpush1.msra.mxu0 0.0
        %3665 = vmatprep.subr.mxu0 0.0
        %3666 = vmatpush1.msra.mxu0 0.0
        %3667 = vmatprep.mubr.f32.mxu0 0.0
        %3668 = vmatmul.mubr.f32.gmra.mrb[0].mxu0 %v3303
        %v3669 = vpop.f32.mrb[0].mxu0
        %v3670 = vadd.f32 0.0, %v3669
        %v3671 = vpop.f32.mrb[0].mxu0
        %v3672 = vadd.f32 0.0, %v3671
        %3673 = vdwg.mxu0
        %3674 = vmatprep.subr.mxu0 %v2722
        %3675 = vmatpush1.msra.mxu0 %v2721
        %3676 = vmatprep.subr.mxu0 %v2758
        %3677 = vmatpush1.msra.mxu0 %v2757
        %3678 = vmatprep.subr.mxu0 %v2794
        %3679 = vmatpush1.msra.mxu0 %v2793
        %3680 = vmatprep.subr.mxu0 %v2830
        %3681 = vmatpush1.msra.mxu0 %v2829
        %3682 = vmatprep.subr.mxu0 %v2866
        %3683 = vmatpush1.msra.mxu0 %v2865
        %3684 = vmatprep.subr.mxu0 %v2902
        %3685 = vmatpush1.msra.mxu0 %v2901
        %3686 = vmatprep.subr.mxu0 %v2938
        %3687 = vmatpush1.msra.mxu0 %v2937
        %3688 = vmatprep.subr.mxu0 %v2974
        %3689 = vmatpush1.msra.mxu0 %v2973
        %3690 = vmatprep.subr.mxu0 %v3010
        %3691 = vmatpush1.msra.mxu0 %v3009
        %3692 = vmatprep.subr.mxu0 %v3046
        %3693 = vmatpush1.msra.mxu0 %v3045
        %3694 = vmatprep.subr.mxu0 %v3082
        %3695 = vmatpush1.msra.mxu0 %v3081
        %3696 = vmatprep.subr.mxu0 %v3118
        %3697 = vmatpush1.msra.mxu0 %v3117
        %3698 = vmatprep.subr.mxu0 %v3154
        %3699 = vmatpush1.msra.mxu0 %v3153
        %3700 = vmatprep.subr.mxu0 %v3190
        %3701 = vmatpush1.msra.mxu0 %v3189
        %3702 = vmatprep.subr.mxu0 %v3226
        %3703 = vmatpush1.msra.mxu0 %v3225
        %3704 = vmatprep.subr.mxu0 %v3262
        %3705 = vmatpush1.msra.mxu0 %v3261
        %3706 = vmatprep.subr.mxu0 0.0
        %3707 = vmatpush1.msra.mxu0 0.0
        %3708 = vmatprep.subr.mxu0 0.0
        %3709 = vmatpush1.msra.mxu0 0.0
        %3710 = vmatprep.subr.mxu0 0.0
        %3711 = vmatpush1.msra.mxu0 0.0
        %3712 = vmatprep.subr.mxu0 0.0
        %3713 = vmatpush1.msra.mxu0 0.0
        %3714 = vmatprep.subr.mxu0 0.0
        %3715 = vmatpush1.msra.mxu0 0.0
        %3716 = vmatprep.subr.mxu0 0.0
        %3717 = vmatpush1.msra.mxu0 0.0
        %3718 = vmatprep.subr.mxu0 0.0
        %3719 = vmatpush1.msra.mxu0 0.0
        %3720 = vmatprep.subr.mxu0 0.0
        %3721 = vmatpush1.msra.mxu0 0.0
        %3722 = vmatprep.subr.mxu0 0.0
        %3723 = vmatpush1.msra.mxu0 0.0
        %3724 = vmatprep.subr.mxu0 0.0
        %3725 = vmatpush1.msra.mxu0 0.0
        %3726 = vmatprep.subr.mxu0 0.0
        %3727 = vmatpush1.msra.mxu0 0.0
        %3728 = vmatprep.subr.mxu0 0.0
        %3729 = vmatpush1.msra.mxu0 0.0
        %3730 = vmatprep.subr.mxu0 0.0
        %3731 = vmatpush1.msra.mxu0 0.0
        %3732 = vmatprep.subr.mxu0 0.0
        %3733 = vmatpush1.msra.mxu0 0.0
        %3734 = vmatprep.subr.mxu0 0.0
        %3735 = vmatpush1.msra.mxu0 0.0
        %3736 = vmatprep.subr.mxu0 0.0
        %3737 = vmatpush1.msra.mxu0 0.0
        %3738 = vmatprep.mubr.f32.mxu0 0.0
        %3739 = vmatmul.mubr.f32.gmra.mrb[0].mxu0 %v3303
        %v3740 = vpop.f32.mrb[0].mxu0
        %v3741 = vadd.f32 0.0, %v3740
        %v3742 = vpop.f32.mrb[0].mxu0
        %v3743 = vadd.f32 0.0, %v3742
        %3744 = vdwg.mxu0
        %3745 = vxpose.xlu0.b32.start [1/16] %v2326, 128
        %3746 = vxpose.xlu0.b32.cont [2/16] %v2328, 128
        %3747 = vxpose.xlu0.b32.cont [3/16] %v2330, 128
        %3748 = vxpose.xlu0.b32.cont [4/16] %v2332, 128
        %3749 = vxpose.xlu0.b32.cont [5/16] %v2334, 128
        %3750 = vxpose.xlu0.b32.cont [6/16] %v2336, 128
        %3751 = vxpose.xlu0.b32.cont [7/16] %v2338, 128
        %3752 = vxpose.xlu0.b32.cont [8/16] %v2340, 128
        %3753 = vxpose.xlu0.b32.cont [9/16] %v2342, 128
        %3754 = vxpose.xlu0.b32.cont [10/16] %v2344, 128
        %3755 = vxpose.xlu0.b32.cont [11/16] %v2346, 128
        %3756 = vxpose.xlu0.b32.cont [12/16] %v2348, 128
        %3757 = vxpose.xlu0.b32.cont [13/16] %v2350, 128
        %3758 = vxpose.xlu0.b32.cont [14/16] %v2352, 128
        %3759 = vxpose.xlu0.b32.cont [15/16] %v2354, 128
        %3760 = vxpose.xlu0.b32.end [16/16] %v2356, 128
        %v3761 = vpop.trf.xlu0
        %v3762 = vpop.trf.xlu0
        %v3763 = vpop.trf.xlu0
        %v3764 = vpop.trf.xlu0
        %v3765 = vpop.trf.xlu0
        %v3766 = vpop.trf.xlu0
        %v3767 = vpop.trf.xlu0
        %v3768 = vpop.trf.xlu0
        %v3769 = vpop.trf.xlu0
        %v3770 = vpop.trf.xlu0
        %v3771 = vpop.trf.xlu0
        %v3772 = vpop.trf.xlu0
        %v3773 = vpop.trf.xlu0
        %v3774 = vpop.trf.xlu0
        %v3775 = vpop.trf.xlu0
        %v3776 = vpop.trf.xlu0
        %3777 = vmatprep.subr.mxu0 %v2724
        %3778 = vmatpush1.msra.mxu0 %v2723
        %3779 = vmatprep.subr.mxu0 %v2760
        %3780 = vmatpush1.msra.mxu0 %v2759
        %3781 = vmatprep.subr.mxu0 %v2796
        %3782 = vmatpush1.msra.mxu0 %v2795
        %3783 = vmatprep.subr.mxu0 %v2832
        %3784 = vmatpush1.msra.mxu0 %v2831
        %3785 = vmatprep.subr.mxu0 %v2868
        %3786 = vmatpush1.msra.mxu0 %v2867
        %3787 = vmatprep.subr.mxu0 %v2904
        %3788 = vmatpush1.msra.mxu0 %v2903
        %3789 = vmatprep.subr.mxu0 %v2940
        %3790 = vmatpush1.msra.mxu0 %v2939
        %3791 = vmatprep.subr.mxu0 %v2976
        %3792 = vmatpush1.msra.mxu0 %v2975
        %3793 = vmatprep.subr.mxu0 %v3012
        %3794 = vmatpush1.msra.mxu0 %v3011
        %3795 = vmatprep.subr.mxu0 %v3048
        %3796 = vmatpush1.msra.mxu0 %v3047
        %3797 = vmatprep.subr.mxu0 %v3084
        %3798 = vmatpush1.msra.mxu0 %v3083
        %3799 = vmatprep.subr.mxu0 %v3120
        %3800 = vmatpush1.msra.mxu0 %v3119
        %3801 = vmatprep.subr.mxu0 %v3156
        %3802 = vmatpush1.msra.mxu0 %v3155
        %3803 = vmatprep.subr.mxu0 %v3192
        %3804 = vmatpush1.msra.mxu0 %v3191
        %3805 = vmatprep.subr.mxu0 %v3228
        %3806 = vmatpush1.msra.mxu0 %v3227
        %3807 = vmatprep.subr.mxu0 %v3264
        %3808 = vmatpush1.msra.mxu0 %v3263
        %3809 = vmatprep.subr.mxu0 0.0
        %3810 = vmatpush1.msra.mxu0 0.0
        %3811 = vmatprep.subr.mxu0 0.0
        %3812 = vmatpush1.msra.mxu0 0.0
        %3813 = vmatprep.subr.mxu0 0.0
        %3814 = vmatpush1.msra.mxu0 0.0
        %3815 = vmatprep.subr.mxu0 0.0
        %3816 = vmatpush1.msra.mxu0 0.0
        %3817 = vmatprep.subr.mxu0 0.0
        %3818 = vmatpush1.msra.mxu0 0.0
        %3819 = vmatprep.subr.mxu0 0.0
        %3820 = vmatpush1.msra.mxu0 0.0
        %3821 = vmatprep.subr.mxu0 0.0
        %3822 = vmatpush1.msra.mxu0 0.0
        %3823 = vmatprep.subr.mxu0 0.0
        %3824 = vmatpush1.msra.mxu0 0.0
        %3825 = vmatprep.subr.mxu0 0.0
        %3826 = vmatpush1.msra.mxu0 0.0
        %3827 = vmatprep.subr.mxu0 0.0
        %3828 = vmatpush1.msra.mxu0 0.0
        %3829 = vmatprep.subr.mxu0 0.0
        %3830 = vmatpush1.msra.mxu0 0.0
        %3831 = vmatprep.subr.mxu0 0.0
        %3832 = vmatpush1.msra.mxu0 0.0
        %3833 = vmatprep.subr.mxu0 0.0
        %3834 = vmatpush1.msra.mxu0 0.0
        %3835 = vmatprep.subr.mxu0 0.0
        %3836 = vmatpush1.msra.mxu0 0.0
        %3837 = vmatprep.subr.mxu0 0.0
        %3838 = vmatpush1.msra.mxu0 0.0
        %3839 = vmatprep.subr.mxu0 0.0
        %3840 = vmatpush1.msra.mxu0 0.0
        %3841 = vmatprep.mubr.f32.mxu0 0.0
        %3842 = vmatmul.mubr.f32.gmra.mrb[0].mxu0 %v3761
        %v3843 = vpop.f32.mrb[0].mxu0
        %v3844 = vadd.f32 0.0, %v3843
        %v3845 = vpop.f32.mrb[0].mxu0
        %v3846 = vadd.f32 0.0, %v3845
        %3847 = vdwg.mxu0
        %3848 = vmatprep.subr.mxu0 %v2726
        %3849 = vmatpush1.msra.mxu0 %v2725
        %3850 = vmatprep.subr.mxu0 %v2762
        %3851 = vmatpush1.msra.mxu0 %v2761
        %3852 = vmatprep.subr.mxu0 %v2798
        %3853 = vmatpush1.msra.mxu0 %v2797
        %3854 = vmatprep.subr.mxu0 %v2834
        %3855 = vmatpush1.msra.mxu0 %v2833
        %3856 = vmatprep.subr.mxu0 %v2870
        %3857 = vmatpush1.msra.mxu0 %v2869
        %3858 = vmatprep.subr.mxu0 %v2906
        %3859 = vmatpush1.msra.mxu0 %v2905
        %3860 = vmatprep.subr.mxu0 %v2942
        %3861 = vmatpush1.msra.mxu0 %v2941
        %3862 = vmatprep.subr.mxu0 %v2978
        %3863 = vmatpush1.msra.mxu0 %v2977
        %3864 = vmatprep.subr.mxu0 %v3014
        %3865 = vmatpush1.msra.mxu0 %v3013
        %3866 = vmatprep.subr.mxu0 %v3050
        %3867 = vmatpush1.msra.mxu0 %v3049
        %3868 = vmatprep.subr.mxu0 %v3086
        %3869 = vmatpush1.msra.mxu0 %v3085
        %3870 = vmatprep.subr.mxu0 %v3122
        %3871 = vmatpush1.msra.mxu0 %v3121
        %3872 = vmatprep.subr.mxu0 %v3158
        %3873 = vmatpush1.msra.mxu0 %v3157
        %3874 = vmatprep.subr.mxu0 %v3194
        %3875 = vmatpush1.msra.mxu0 %v3193
        %3876 = vmatprep.subr.mxu0 %v3230
        %3877 = vmatpush1.msra.mxu0 %v3229
        %3878 = vmatprep.subr.mxu0 %v3266
        %3879 = vmatpush1.msra.mxu0 %v3265
        %3880 = vmatprep.subr.mxu0 0.0
        %3881 = vmatpush1.msra.mxu0 0.0
        %3882 = vmatprep.subr.mxu0 0.0
        %3883 = vmatpush1.msra.mxu0 0.0
        %3884 = vmatprep.subr.mxu0 0.0
        %3885 = vmatpush1.msra.mxu0 0.0
        %3886 = vmatprep.subr.mxu0 0.0
        %3887 = vmatpush1.msra.mxu0 0.0
        %3888 = vmatprep.subr.mxu0 0.0
        %3889 = vmatpush1.msra.mxu0 0.0
        %3890 = vmatprep.subr.mxu0 0.0
        %3891 = vmatpush1.msra.mxu0 0.0
        %3892 = vmatprep.subr.mxu0 0.0
        %3893 = vmatpush1.msra.mxu0 0.0
        %3894 = vmatprep.subr.mxu0 0.0
        %3895 = vmatpush1.msra.mxu0 0.0
        %3896 = vmatprep.subr.mxu0 0.0
        %3897 = vmatpush1.msra.mxu0 0.0
        %3898 = vmatprep.subr.mxu0 0.0
        %3899 = vmatpush1.msra.mxu0 0.0
        %3900 = vmatprep.subr.mxu0 0.0
        %3901 = vmatpush1.msra.mxu0 0.0
        %3902 = vmatprep.subr.mxu0 0.0
        %3903 = vmatpush1.msra.mxu0 0.0
        %3904 = vmatprep.subr.mxu0 0.0
        %3905 = vmatpush1.msra.mxu0 0.0
        %3906 = vmatprep.subr.mxu0 0.0
        %3907 = vmatpush1.msra.mxu0 0.0
        %3908 = vmatprep.subr.mxu0 0.0
        %3909 = vmatpush1.msra.mxu0 0.0
        %3910 = vmatprep.subr.mxu0 0.0
        %3911 = vmatpush1.msra.mxu0 0.0
        %3912 = vmatprep.mubr.f32.mxu0 0.0
        %3913 = vmatmul.mubr.f32.gmra.mrb[0].mxu0 %v3761
        %v3914 = vpop.f32.mrb[0].mxu0
        %v3915 = vadd.f32 0.0, %v3914
        %v3916 = vpop.f32.mrb[0].mxu0
        %v3917 = vadd.f32 0.0, %v3916
        %3918 = vdwg.mxu0
        %3919 = vmatprep.subr.mxu0 %v2728
        %3920 = vmatpush1.msra.mxu0 %v2727
        %3921 = vmatprep.subr.mxu0 %v2764
        %3922 = vmatpush1.msra.mxu0 %v2763
        %3923 = vmatprep.subr.mxu0 %v2800
        %3924 = vmatpush1.msra.mxu0 %v2799
        %3925 = vmatprep.subr.mxu0 %v2836
        %3926 = vmatpush1.msra.mxu0 %v2835
        %3927 = vmatprep.subr.mxu0 %v2872
        %3928 = vmatpush1.msra.mxu0 %v2871
        %3929 = vmatprep.subr.mxu0 %v2908
        %3930 = vmatpush1.msra.mxu0 %v2907
        %3931 = vmatprep.subr.mxu0 %v2944
        %3932 = vmatpush1.msra.mxu0 %v2943
        %3933 = vmatprep.subr.mxu0 %v2980
        %3934 = vmatpush1.msra.mxu0 %v2979
        %3935 = vmatprep.subr.mxu0 %v3016
        %3936 = vmatpush1.msra.mxu0 %v3015
        %3937 = vmatprep.subr.mxu0 %v3052
        %3938 = vmatpush1.msra.mxu0 %v3051
        %3939 = vmatprep.subr.mxu0 %v3088
        %3940 = vmatpush1.msra.mxu0 %v3087
        %3941 = vmatprep.subr.mxu0 %v3124
        %3942 = vmatpush1.msra.mxu0 %v3123
        %3943 = vmatprep.subr.mxu0 %v3160
        %3944 = vmatpush1.msra.mxu0 %v3159
        %3945 = vmatprep.subr.mxu0 %v3196
        %3946 = vmatpush1.msra.mxu0 %v3195
        %3947 = vmatprep.subr.mxu0 %v3232
        %3948 = vmatpush1.msra.mxu0 %v3231
        %3949 = vmatprep.subr.mxu0 %v3268
        %3950 = vmatpush1.msra.mxu0 %v3267
        %3951 = vmatprep.subr.mxu0 0.0
        %3952 = vmatpush1.msra.mxu0 0.0
        %3953 = vmatprep.subr.mxu0 0.0
        %3954 = vmatpush1.msra.mxu0 0.0
        %3955 = vmatprep.subr.mxu0 0.0
        %3956 = vmatpush1.msra.mxu0 0.0
        %3957 = vmatprep.subr.mxu0 0.0
        %3958 = vmatpush1.msra.mxu0 0.0
        %3959 = vmatprep.subr.mxu0 0.0
        %3960 = vmatpush1.msra.mxu0 0.0
        %3961 = vmatprep.subr.mxu0 0.0
        %3962 = vmatpush1.msra.mxu0 0.0
        %3963 = vmatprep.subr.mxu0 0.0
        %3964 = vmatpush1.msra.mxu0 0.0
        %3965 = vmatprep.subr.mxu0 0.0
        %3966 = vmatpush1.msra.mxu0 0.0
        %3967 = vmatprep.subr.mxu0 0.0
        %3968 = vmatpush1.msra.mxu0 0.0
        %3969 = vmatprep.subr.mxu0 0.0
        %3970 = vmatpush1.msra.mxu0 0.0
        %3971 = vmatprep.subr.mxu0 0.0
        %3972 = vmatpush1.msra.mxu0 0.0
        %3973 = vmatprep.subr.mxu0 0.0
        %3974 = vmatpush1.msra.mxu0 0.0
        %3975 = vmatprep.subr.mxu0 0.0
        %3976 = vmatpush1.msra.mxu0 0.0
        %3977 = vmatprep.subr.mxu0 0.0
        %3978 = vmatpush1.msra.mxu0 0.0
        %3979 = vmatprep.subr.mxu0 0.0
        %3980 = vmatpush1.msra.mxu0 0.0
        %3981 = vmatprep.subr.mxu0 0.0
        %3982 = vmatpush1.msra.mxu0 0.0
        %3983 = vmatprep.mubr.f32.mxu0 0.0
        %3984 = vmatmul.mubr.f32.gmra.mrb[0].mxu0 %v3761
        %v3985 = vpop.f32.mrb[0].mxu0
        %v3986 = vadd.f32 0.0, %v3985
        %v3987 = vpop.f32.mrb[0].mxu0
        %v3988 = vadd.f32 0.0, %v3987
        %3989 = vdwg.mxu0
        %3990 = vmatprep.subr.mxu0 %v2730
        %3991 = vmatpush1.msra.mxu0 %v2729
        %3992 = vmatprep.subr.mxu0 %v2766
        %3993 = vmatpush1.msra.mxu0 %v2765
        %3994 = vmatprep.subr.mxu0 %v2802
        %3995 = vmatpush1.msra.mxu0 %v2801
        %3996 = vmatprep.subr.mxu0 %v2838
        %3997 = vmatpush1.msra.mxu0 %v2837
        %3998 = vmatprep.subr.mxu0 %v2874
        %3999 = vmatpush1.msra.mxu0 %v2873
        %4000 = vmatprep.subr.mxu0 %v2910
        %4001 = vmatpush1.msra.mxu0 %v2909
        %4002 = vmatprep.subr.mxu0 %v2946
        %4003 = vmatpush1.msra.mxu0 %v2945
        %4004 = vmatprep.subr.mxu0 %v2982
        %4005 = vmatpush1.msra.mxu0 %v2981
        %4006 = vmatprep.subr.mxu0 %v3018
        %4007 = vmatpush1.msra.mxu0 %v3017
        %4008 = vmatprep.subr.mxu0 %v3054
        %4009 = vmatpush1.msra.mxu0 %v3053
        %4010 = vmatprep.subr.mxu0 %v3090
        %4011 = vmatpush1.msra.mxu0 %v3089
        %4012 = vmatprep.subr.mxu0 %v3126
        %4013 = vmatpush1.msra.mxu0 %v3125
        %4014 = vmatprep.subr.mxu0 %v3162
        %4015 = vmatpush1.msra.mxu0 %v3161
        %4016 = vmatprep.subr.mxu0 %v3198
        %4017 = vmatpush1.msra.mxu0 %v3197
        %4018 = vmatprep.subr.mxu0 %v3234
        %4019 = vmatpush1.msra.mxu0 %v3233
        %4020 = vmatprep.subr.mxu0 %v3270
        %4021 = vmatpush1.msra.mxu0 %v3269
        %4022 = vmatprep.subr.mxu0 0.0
        %4023 = vmatpush1.msra.mxu0 0.0
        %4024 = vmatprep.subr.mxu0 0.0
        %4025 = vmatpush1.msra.mxu0 0.0
        %4026 = vmatprep.subr.mxu0 0.0
        %4027 = vmatpush1.msra.mxu0 0.0
        %4028 = vmatprep.subr.mxu0 0.0
        %4029 = vmatpush1.msra.mxu0 0.0
        %4030 = vmatprep.subr.mxu0 0.0
        %4031 = vmatpush1.msra.mxu0 0.0
        %4032 = vmatprep.subr.mxu0 0.0
        %4033 = vmatpush1.msra.mxu0 0.0
        %4034 = vmatprep.subr.mxu0 0.0
        %4035 = vmatpush1.msra.mxu0 0.0
        %4036 = vmatprep.subr.mxu0 0.0
        %4037 = vmatpush1.msra.mxu0 0.0
        %4038 = vmatprep.subr.mxu0 0.0
        %4039 = vmatpush1.msra.mxu0 0.0
        %4040 = vmatprep.subr.mxu0 0.0
        %4041 = vmatpush1.msra.mxu0 0.0
        %4042 = vmatprep.subr.mxu0 0.0
        %4043 = vmatpush1.msra.mxu0 0.0
        %4044 = vmatprep.subr.mxu0 0.0
        %4045 = vmatpush1.msra.mxu0 0.0
        %4046 = vmatprep.subr.mxu0 0.0
        %4047 = vmatpush1.msra.mxu0 0.0
        %4048 = vmatprep.subr.mxu0 0.0
        %4049 = vmatpush1.msra.mxu0 0.0
        %4050 = vmatprep.subr.mxu0 0.0
        %4051 = vmatpush1.msra.mxu0 0.0
        %4052 = vmatprep.subr.mxu0 0.0
        %4053 = vmatpush1.msra.mxu0 0.0
        %4054 = vmatprep.mubr.f32.mxu0 0.0
        %4055 = vmatmul.mubr.f32.gmra.mrb[0].mxu0 %v3761
        %v4056 = vpop.f32.mrb[0].mxu0
        %v4057 = vadd.f32 0.0, %v4056
        %v4058 = vpop.f32.mrb[0].mxu0
        %v4059 = vadd.f32 0.0, %v4058
        %4060 = vdwg.mxu0
        %4061 = vmatprep.subr.mxu0 %v2732
        %4062 = vmatpush1.msra.mxu0 %v2731
        %4063 = vmatprep.subr.mxu0 %v2768
        %4064 = vmatpush1.msra.mxu0 %v2767
        %4065 = vmatprep.subr.mxu0 %v2804
        %4066 = vmatpush1.msra.mxu0 %v2803
        %4067 = vmatprep.subr.mxu0 %v2840
        %4068 = vmatpush1.msra.mxu0 %v2839
        %4069 = vmatprep.subr.mxu0 %v2876
        %4070 = vmatpush1.msra.mxu0 %v2875
        %4071 = vmatprep.subr.mxu0 %v2912
        %4072 = vmatpush1.msra.mxu0 %v2911
        %4073 = vmatprep.subr.mxu0 %v2948
        %4074 = vmatpush1.msra.mxu0 %v2947
        %4075 = vmatprep.subr.mxu0 %v2984
        %4076 = vmatpush1.msra.mxu0 %v2983
        %4077 = vmatprep.subr.mxu0 %v3020
        %4078 = vmatpush1.msra.mxu0 %v3019
        %4079 = vmatprep.subr.mxu0 %v3056
        %4080 = vmatpush1.msra.mxu0 %v3055
        %4081 = vmatprep.subr.mxu0 %v3092
        %4082 = vmatpush1.msra.mxu0 %v3091
        %4083 = vmatprep.subr.mxu0 %v3128
        %4084 = vmatpush1.msra.mxu0 %v3127
        %4085 = vmatprep.subr.mxu0 %v3164
        %4086 = vmatpush1.msra.mxu0 %v3163
        %4087 = vmatprep.subr.mxu0 %v3200
        %4088 = vmatpush1.msra.mxu0 %v3199
        %4089 = vmatprep.subr.mxu0 %v3236
        %4090 = vmatpush1.msra.mxu0 %v3235
        %4091 = vmatprep.subr.mxu0 %v3272
        %4092 = vmatpush1.msra.mxu0 %v3271
        %4093 = vmatprep.subr.mxu0 0.0
        %4094 = vmatpush1.msra.mxu0 0.0
        %4095 = vmatprep.subr.mxu0 0.0
        %4096 = vmatpush1.msra.mxu0 0.0
        %4097 = vmatprep.subr.mxu0 0.0
        %4098 = vmatpush1.msra.mxu0 0.0
        %4099 = vmatprep.subr.mxu0 0.0
        %4100 = vmatpush1.msra.mxu0 0.0
        %4101 = vmatprep.subr.mxu0 0.0
        %4102 = vmatpush1.msra.mxu0 0.0
        %4103 = vmatprep.subr.mxu0 0.0
        %4104 = vmatpush1.msra.mxu0 0.0
        %4105 = vmatprep.subr.mxu0 0.0
        %4106 = vmatpush1.msra.mxu0 0.0
        %4107 = vmatprep.subr.mxu0 0.0
        %4108 = vmatpush1.msra.mxu0 0.0
        %4109 = vmatprep.subr.mxu0 0.0
        %4110 = vmatpush1.msra.mxu0 0.0
        %4111 = vmatprep.subr.mxu0 0.0
        %4112 = vmatpush1.msra.mxu0 0.0
        %4113 = vmatprep.subr.mxu0 0.0
        %4114 = vmatpush1.msra.mxu0 0.0
        %4115 = vmatprep.subr.mxu0 0.0
        %4116 = vmatpush1.msra.mxu0 0.0
        %4117 = vmatprep.subr.mxu0 0.0
        %4118 = vmatpush1.msra.mxu0 0.0
        %4119 = vmatprep.subr.mxu0 0.0
        %4120 = vmatpush1.msra.mxu0 0.0
        %4121 = vmatprep.subr.mxu0 0.0
        %4122 = vmatpush1.msra.mxu0 0.0
        %4123 = vmatprep.subr.mxu0 0.0
        %4124 = vmatpush1.msra.mxu0 0.0
        %4125 = vmatprep.mubr.f32.mxu0 0.0
        %4126 = vmatmul.mubr.f32.gmra.mrb[0].mxu0 %v3761
        %v4127 = vpop.f32.mrb[0].mxu0
        %v4128 = vadd.f32 0.0, %v4127
        %v4129 = vpop.f32.mrb[0].mxu0
        %v4130 = vadd.f32 0.0, %v4129
        %4131 = vdwg.mxu0
        %4132 = vmatprep.subr.mxu0 %v2734
        %4133 = vmatpush1.msra.mxu0 %v2733
        %4134 = vmatprep.subr.mxu0 %v2770
        %4135 = vmatpush1.msra.mxu0 %v2769
        %4136 = vmatprep.subr.mxu0 %v2806
        %4137 = vmatpush1.msra.mxu0 %v2805
        %4138 = vmatprep.subr.mxu0 %v2842
        %4139 = vmatpush1.msra.mxu0 %v2841
        %4140 = vmatprep.subr.mxu0 %v2878
        %4141 = vmatpush1.msra.mxu0 %v2877
        %4142 = vmatprep.subr.mxu0 %v2914
        %4143 = vmatpush1.msra.mxu0 %v2913
        %4144 = vmatprep.subr.mxu0 %v2950
        %4145 = vmatpush1.msra.mxu0 %v2949
        %4146 = vmatprep.subr.mxu0 %v2986
        %4147 = vmatpush1.msra.mxu0 %v2985
        %4148 = vmatprep.subr.mxu0 %v3022
        %4149 = vmatpush1.msra.mxu0 %v3021
        %4150 = vmatprep.subr.mxu0 %v3058
        %4151 = vmatpush1.msra.mxu0 %v3057
        %4152 = vmatprep.subr.mxu0 %v3094
        %4153 = vmatpush1.msra.mxu0 %v3093
        %4154 = vmatprep.subr.mxu0 %v3130
        %4155 = vmatpush1.msra.mxu0 %v3129
        %4156 = vmatprep.subr.mxu0 %v3166
        %4157 = vmatpush1.msra.mxu0 %v3165
        %4158 = vmatprep.subr.mxu0 %v3202
        %4159 = vmatpush1.msra.mxu0 %v3201
        %4160 = vmatprep.subr.mxu0 %v3238
        %4161 = vmatpush1.msra.mxu0 %v3237
        %4162 = vmatprep.subr.mxu0 %v3274
        %4163 = vmatpush1.msra.mxu0 %v3273
        %4164 = vmatprep.subr.mxu0 0.0
        %4165 = vmatpush1.msra.mxu0 0.0
        %4166 = vmatprep.subr.mxu0 0.0
        %4167 = vmatpush1.msra.mxu0 0.0
        %4168 = vmatprep.subr.mxu0 0.0
        %4169 = vmatpush1.msra.mxu0 0.0
        %4170 = vmatprep.subr.mxu0 0.0
        %4171 = vmatpush1.msra.mxu0 0.0
        %4172 = vmatprep.subr.mxu0 0.0
        %4173 = vmatpush1.msra.mxu0 0.0
        %4174 = vmatprep.subr.mxu0 0.0
        %4175 = vmatpush1.msra.mxu0 0.0
        %4176 = vmatprep.subr.mxu0 0.0
        %4177 = vmatpush1.msra.mxu0 0.0
        %4178 = vmatprep.subr.mxu0 0.0
        %4179 = vmatpush1.msra.mxu0 0.0
        %4180 = vmatprep.subr.mxu0 0.0
        %4181 = vmatpush1.msra.mxu0 0.0
        %4182 = vmatprep.subr.mxu0 0.0
        %4183 = vmatpush1.msra.mxu0 0.0
        %4184 = vmatprep.subr.mxu0 0.0
        %4185 = vmatpush1.msra.mxu0 0.0
        %4186 = vmatprep.subr.mxu0 0.0
        %4187 = vmatpush1.msra.mxu0 0.0
        %4188 = vmatprep.subr.mxu0 0.0
        %4189 = vmatpush1.msra.mxu0 0.0
        %4190 = vmatprep.subr.mxu0 0.0
        %4191 = vmatpush1.msra.mxu0 0.0
        %4192 = vmatprep.subr.mxu0 0.0
        %4193 = vmatpush1.msra.mxu0 0.0
        %4194 = vmatprep.subr.mxu0 0.0
        %4195 = vmatpush1.msra.mxu0 0.0
        %4196 = vmatprep.mubr.f32.mxu0 0.0
        %4197 = vmatmul.mubr.f32.gmra.mrb[0].mxu0 %v3761
        %v4198 = vpop.f32.mrb[0].mxu0
        %v4199 = vadd.f32 0.0, %v4198
        %v4200 = vpop.f32.mrb[0].mxu0
        %v4201 = vadd.f32 0.0, %v4200
        %4202 = vdwg.mxu0
        %4203 = vxpose.xlu0.b32.start [1/16] %v2357, 128
        %4204 = vxpose.xlu0.b32.cont [2/16] %v2358, 128
        %4205 = vxpose.xlu0.b32.cont [3/16] %v2359, 128
        %4206 = vxpose.xlu0.b32.cont [4/16] %v2360, 128
        %4207 = vxpose.xlu0.b32.cont [5/16] %v2361, 128
        %4208 = vxpose.xlu0.b32.cont [6/16] %v2362, 128
        %4209 = vxpose.xlu0.b32.cont [7/16] %v2363, 128
        %4210 = vxpose.xlu0.b32.cont [8/16] %v2364, 128
        %4211 = vxpose.xlu0.b32.cont [9/16] %v2365, 128
        %4212 = vxpose.xlu0.b32.cont [10/16] %v2366, 128
        %4213 = vxpose.xlu0.b32.cont [11/16] %v2367, 128
        %4214 = vxpose.xlu0.b32.cont [12/16] %v2368, 128
        %4215 = vxpose.xlu0.b32.cont [13/16] %v2369, 128
        %4216 = vxpose.xlu0.b32.cont [14/16] %v2370, 128
        %4217 = vxpose.xlu0.b32.cont [15/16] %v2371, 128
        %4218 = vxpose.xlu0.b32.end [16/16] %v2372, 128
        %v4219 = vpop.trf.xlu0
        %v4220 = vpop.trf.xlu0
        %v4221 = vpop.trf.xlu0
        %v4222 = vpop.trf.xlu0
        %v4223 = vpop.trf.xlu0
        %v4224 = vpop.trf.xlu0
        %v4225 = vpop.trf.xlu0
        %v4226 = vpop.trf.xlu0
        %v4227 = vpop.trf.xlu0
        %v4228 = vpop.trf.xlu0
        %v4229 = vpop.trf.xlu0
        %v4230 = vpop.trf.xlu0
        %v4231 = vpop.trf.xlu0
        %v4232 = vpop.trf.xlu0
        %v4233 = vpop.trf.xlu0
        %v4234 = vpop.trf.xlu0
        %4235 = vmatprep.subr.mxu0 %v2736
        %4236 = vmatpush1.msra.mxu0 %v2735
        %4237 = vmatprep.subr.mxu0 %v2772
        %4238 = vmatpush1.msra.mxu0 %v2771
        %4239 = vmatprep.subr.mxu0 %v2808
        %4240 = vmatpush1.msra.mxu0 %v2807
        %4241 = vmatprep.subr.mxu0 %v2844
        %4242 = vmatpush1.msra.mxu0 %v2843
        %4243 = vmatprep.subr.mxu0 %v2880
        %4244 = vmatpush1.msra.mxu0 %v2879
        %4245 = vmatprep.subr.mxu0 %v2916
        %4246 = vmatpush1.msra.mxu0 %v2915
        %4247 = vmatprep.subr.mxu0 %v2952
        %4248 = vmatpush1.msra.mxu0 %v2951
        %4249 = vmatprep.subr.mxu0 %v2988
        %4250 = vmatpush1.msra.mxu0 %v2987
        %4251 = vmatprep.subr.mxu0 %v3024
        %4252 = vmatpush1.msra.mxu0 %v3023
        %4253 = vmatprep.subr.mxu0 %v3060
        %4254 = vmatpush1.msra.mxu0 %v3059
        %4255 = vmatprep.subr.mxu0 %v3096
        %4256 = vmatpush1.msra.mxu0 %v3095
        %4257 = vmatprep.subr.mxu0 %v3132
        %4258 = vmatpush1.msra.mxu0 %v3131
        %4259 = vmatprep.subr.mxu0 %v3168
        %4260 = vmatpush1.msra.mxu0 %v3167
        %4261 = vmatprep.subr.mxu0 %v3204
        %4262 = vmatpush1.msra.mxu0 %v3203
        %4263 = vmatprep.subr.mxu0 %v3240
        %4264 = vmatpush1.msra.mxu0 %v3239
        %4265 = vmatprep.subr.mxu0 %v3276
        %4266 = vmatpush1.msra.mxu0 %v3275
        %4267 = vmatprep.subr.mxu0 0.0
        %4268 = vmatpush1.msra.mxu0 0.0
        %4269 = vmatprep.subr.mxu0 0.0
        %4270 = vmatpush1.msra.mxu0 0.0
        %4271 = vmatprep.subr.mxu0 0.0
        %4272 = vmatpush1.msra.mxu0 0.0
        %4273 = vmatprep.subr.mxu0 0.0
        %4274 = vmatpush1.msra.mxu0 0.0
        %4275 = vmatprep.subr.mxu0 0.0
        %4276 = vmatpush1.msra.mxu0 0.0
        %4277 = vmatprep.subr.mxu0 0.0
        %4278 = vmatpush1.msra.mxu0 0.0
        %4279 = vmatprep.subr.mxu0 0.0
        %4280 = vmatpush1.msra.mxu0 0.0
        %4281 = vmatprep.subr.mxu0 0.0
        %4282 = vmatpush1.msra.mxu0 0.0
        %4283 = vmatprep.subr.mxu0 0.0
        %4284 = vmatpush1.msra.mxu0 0.0
        %4285 = vmatprep.subr.mxu0 0.0
        %4286 = vmatpush1.msra.mxu0 0.0
        %4287 = vmatprep.subr.mxu0 0.0
        %4288 = vmatpush1.msra.mxu0 0.0
        %4289 = vmatprep.subr.mxu0 0.0
        %4290 = vmatpush1.msra.mxu0 0.0
        %4291 = vmatprep.subr.mxu0 0.0
        %4292 = vmatpush1.msra.mxu0 0.0
        %4293 = vmatprep.subr.mxu0 0.0
        %4294 = vmatpush1.msra.mxu0 0.0
        %4295 = vmatprep.subr.mxu0 0.0
        %4296 = vmatpush1.msra.mxu0 0.0
        %4297 = vmatprep.subr.mxu0 0.0
        %4298 = vmatpush1.msra.mxu0 0.0
        %4299 = vmatprep.mubr.f32.mxu0 0.0
        %4300 = vmatmul.mubr.f32.gmra.mrb[0].mxu0 %v4219
        %v4301 = vpop.f32.mrb[0].mxu0
        %v4302 = vadd.f32 0.0, %v4301
        %v4303 = vpop.f32.mrb[0].mxu0
        %v4304 = vadd.f32 0.0, %v4303
        %4305 = vdwg.mxu0
        %4306 = vmatprep.subr.mxu0 %v2738
        %4307 = vmatpush1.msra.mxu0 %v2737
        %4308 = vmatprep.subr.mxu0 %v2774
        %4309 = vmatpush1.msra.mxu0 %v2773
        %4310 = vmatprep.subr.mxu0 %v2810
        %4311 = vmatpush1.msra.mxu0 %v2809
        %4312 = vmatprep.subr.mxu0 %v2846
        %4313 = vmatpush1.msra.mxu0 %v2845
        %4314 = vmatprep.subr.mxu0 %v2882
        %4315 = vmatpush1.msra.mxu0 %v2881
        %4316 = vmatprep.subr.mxu0 %v2918
        %4317 = vmatpush1.msra.mxu0 %v2917
        %4318 = vmatprep.subr.mxu0 %v2954
        %4319 = vmatpush1.msra.mxu0 %v2953
        %4320 = vmatprep.subr.mxu0 %v2990
        %4321 = vmatpush1.msra.mxu0 %v2989
        %4322 = vmatprep.subr.mxu0 %v3026
        %4323 = vmatpush1.msra.mxu0 %v3025
        %4324 = vmatprep.subr.mxu0 %v3062
        %4325 = vmatpush1.msra.mxu0 %v3061
        %4326 = vmatprep.subr.mxu0 %v3098
        %4327 = vmatpush1.msra.mxu0 %v3097
        %4328 = vmatprep.subr.mxu0 %v3134
        %4329 = vmatpush1.msra.mxu0 %v3133
        %4330 = vmatprep.subr.mxu0 %v3170
        %4331 = vmatpush1.msra.mxu0 %v3169
        %4332 = vmatprep.subr.mxu0 %v3206
        %4333 = vmatpush1.msra.mxu0 %v3205
        %4334 = vmatprep.subr.mxu0 %v3242
        %4335 = vmatpush1.msra.mxu0 %v3241
        %4336 = vmatprep.subr.mxu0 %v3278
        %4337 = vmatpush1.msra.mxu0 %v3277
        %4338 = vmatprep.subr.mxu0 0.0
        %4339 = vmatpush1.msra.mxu0 0.0
        %4340 = vmatprep.subr.mxu0 0.0
        %4341 = vmatpush1.msra.mxu0 0.0
        %4342 = vmatprep.subr.mxu0 0.0
        %4343 = vmatpush1.msra.mxu0 0.0
        %4344 = vmatprep.subr.mxu0 0.0
        %4345 = vmatpush1.msra.mxu0 0.0
        %4346 = vmatprep.subr.mxu0 0.0
        %4347 = vmatpush1.msra.mxu0 0.0
        %4348 = vmatprep.subr.mxu0 0.0
        %4349 = vmatpush1.msra.mxu0 0.0
        %4350 = vmatprep.subr.mxu0 0.0
        %4351 = vmatpush1.msra.mxu0 0.0
        %4352 = vmatprep.subr.mxu0 0.0
        %4353 = vmatpush1.msra.mxu0 0.0
        %4354 = vmatprep.subr.mxu0 0.0
        %4355 = vmatpush1.msra.mxu0 0.0
        %4356 = vmatprep.subr.mxu0 0.0
        %4357 = vmatpush1.msra.mxu0 0.0
        %4358 = vmatprep.subr.mxu0 0.0
        %4359 = vmatpush1.msra.mxu0 0.0
        %4360 = vmatprep.subr.mxu0 0.0
        %4361 = vmatpush1.msra.mxu0 0.0
        %4362 = vmatprep.subr.mxu0 0.0
        %4363 = vmatpush1.msra.mxu0 0.0
        %4364 = vmatprep.subr.mxu0 0.0
        %4365 = vmatpush1.msra.mxu0 0.0
        %4366 = vmatprep.subr.mxu0 0.0
        %4367 = vmatpush1.msra.mxu0 0.0
        %4368 = vmatprep.subr.mxu0 0.0
        %4369 = vmatpush1.msra.mxu0 0.0
        %4370 = vmatprep.mubr.f32.mxu0 0.0
        %4371 = vmatmul.mubr.f32.gmra.mrb[0].mxu0 %v4219
        %v4372 = vpop.f32.mrb[0].mxu0
        %v4373 = vadd.f32 0.0, %v4372
        %v4374 = vpop.f32.mrb[0].mxu0
        %v4375 = vadd.f32 0.0, %v4374
        %4376 = vdwg.mxu0
        %4377 = vmatprep.subr.mxu0 %v2740
        %4378 = vmatpush1.msra.mxu0 %v2739
        %4379 = vmatprep.subr.mxu0 %v2776
        %4380 = vmatpush1.msra.mxu0 %v2775
        %4381 = vmatprep.subr.mxu0 %v2812
        %4382 = vmatpush1.msra.mxu0 %v2811
        %4383 = vmatprep.subr.mxu0 %v2848
        %4384 = vmatpush1.msra.mxu0 %v2847
        %4385 = vmatprep.subr.mxu0 %v2884
        %4386 = vmatpush1.msra.mxu0 %v2883
        %4387 = vmatprep.subr.mxu0 %v2920
        %4388 = vmatpush1.msra.mxu0 %v2919
        %4389 = vmatprep.subr.mxu0 %v2956
        %4390 = vmatpush1.msra.mxu0 %v2955
        %4391 = vmatprep.subr.mxu0 %v2992
        %4392 = vmatpush1.msra.mxu0 %v2991
        %4393 = vmatprep.subr.mxu0 %v3028
        %4394 = vmatpush1.msra.mxu0 %v3027
        %4395 = vmatprep.subr.mxu0 %v3064
        %4396 = vmatpush1.msra.mxu0 %v3063
        %4397 = vmatprep.subr.mxu0 %v3100
        %4398 = vmatpush1.msra.mxu0 %v3099
        %4399 = vmatprep.subr.mxu0 %v3136
        %4400 = vmatpush1.msra.mxu0 %v3135
        %4401 = vmatprep.subr.mxu0 %v3172
        %4402 = vmatpush1.msra.mxu0 %v3171
        %4403 = vmatprep.subr.mxu0 %v3208
        %4404 = vmatpush1.msra.mxu0 %v3207
        %4405 = vmatprep.subr.mxu0 %v3244
        %4406 = vmatpush1.msra.mxu0 %v3243
        %4407 = vmatprep.subr.mxu0 %v3280
        %4408 = vmatpush1.msra.mxu0 %v3279
        %4409 = vmatprep.subr.mxu0 0.0
        %4410 = vmatpush1.msra.mxu0 0.0
        %4411 = vmatprep.subr.mxu0 0.0
        %4412 = vmatpush1.msra.mxu0 0.0
        %4413 = vmatprep.subr.mxu0 0.0
        %4414 = vmatpush1.msra.mxu0 0.0
        %4415 = vmatprep.subr.mxu0 0.0
        %4416 = vmatpush1.msra.mxu0 0.0
        %4417 = vmatprep.subr.mxu0 0.0
        %4418 = vmatpush1.msra.mxu0 0.0
        %4419 = vmatprep.subr.mxu0 0.0
        %4420 = vmatpush1.msra.mxu0 0.0
        %4421 = vmatprep.subr.mxu0 0.0
        %4422 = vmatpush1.msra.mxu0 0.0
        %4423 = vmatprep.subr.mxu0 0.0
        %4424 = vmatpush1.msra.mxu0 0.0
        %4425 = vmatprep.subr.mxu0 0.0
        %4426 = vmatpush1.msra.mxu0 0.0
        %4427 = vmatprep.subr.mxu0 0.0
        %4428 = vmatpush1.msra.mxu0 0.0
        %4429 = vmatprep.subr.mxu0 0.0
        %4430 = vmatpush1.msra.mxu0 0.0
        %4431 = vmatprep.subr.mxu0 0.0
        %4432 = vmatpush1.msra.mxu0 0.0
        %4433 = vmatprep.subr.mxu0 0.0
        %4434 = vmatpush1.msra.mxu0 0.0
        %4435 = vmatprep.subr.mxu0 0.0
        %4436 = vmatpush1.msra.mxu0 0.0
        %4437 = vmatprep.subr.mxu0 0.0
        %4438 = vmatpush1.msra.mxu0 0.0
        %4439 = vmatprep.subr.mxu0 0.0
        %4440 = vmatpush1.msra.mxu0 0.0
        %4441 = vmatprep.mubr.f32.mxu0 0.0
        %4442 = vmatmul.mubr.f32.gmra.mrb[0].mxu0 %v4219
        %v4443 = vpop.f32.mrb[0].mxu0
        %v4444 = vadd.f32 0.0, %v4443
        %v4445 = vpop.f32.mrb[0].mxu0
        %v4446 = vadd.f32 0.0, %v4445
        %4447 = vdwg.mxu0
        %4448 = vmatprep.subr.mxu0 %v2742
        %4449 = vmatpush1.msra.mxu0 %v2741
        %4450 = vmatprep.subr.mxu0 %v2778
        %4451 = vmatpush1.msra.mxu0 %v2777
        %4452 = vmatprep.subr.mxu0 %v2814
        %4453 = vmatpush1.msra.mxu0 %v2813
        %4454 = vmatprep.subr.mxu0 %v2850
        %4455 = vmatpush1.msra.mxu0 %v2849
        %4456 = vmatprep.subr.mxu0 %v2886
        %4457 = vmatpush1.msra.mxu0 %v2885
        %4458 = vmatprep.subr.mxu0 %v2922
        %4459 = vmatpush1.msra.mxu0 %v2921
        %4460 = vmatprep.subr.mxu0 %v2958
        %4461 = vmatpush1.msra.mxu0 %v2957
        %4462 = vmatprep.subr.mxu0 %v2994
        %4463 = vmatpush1.msra.mxu0 %v2993
        %4464 = vmatprep.subr.mxu0 %v3030
        %4465 = vmatpush1.msra.mxu0 %v3029
        %4466 = vmatprep.subr.mxu0 %v3066
        %4467 = vmatpush1.msra.mxu0 %v3065
        %4468 = vmatprep.subr.mxu0 %v3102
        %4469 = vmatpush1.msra.mxu0 %v3101
        %4470 = vmatprep.subr.mxu0 %v3138
        %4471 = vmatpush1.msra.mxu0 %v3137
        %4472 = vmatprep.subr.mxu0 %v3174
        %4473 = vmatpush1.msra.mxu0 %v3173
        %4474 = vmatprep.subr.mxu0 %v3210
        %4475 = vmatpush1.msra.mxu0 %v3209
        %4476 = vmatprep.subr.mxu0 %v3246
        %4477 = vmatpush1.msra.mxu0 %v3245
        %4478 = vmatprep.subr.mxu0 %v3282
        %4479 = vmatpush1.msra.mxu0 %v3281
        %4480 = vmatprep.subr.mxu0 0.0
        %4481 = vmatpush1.msra.mxu0 0.0
        %4482 = vmatprep.subr.mxu0 0.0
        %4483 = vmatpush1.msra.mxu0 0.0
        %4484 = vmatprep.subr.mxu0 0.0
        %4485 = vmatpush1.msra.mxu0 0.0
        %4486 = vmatprep.subr.mxu0 0.0
        %4487 = vmatpush1.msra.mxu0 0.0
        %4488 = vmatprep.subr.mxu0 0.0
        %4489 = vmatpush1.msra.mxu0 0.0
        %4490 = vmatprep.subr.mxu0 0.0
        %4491 = vmatpush1.msra.mxu0 0.0
        %4492 = vmatprep.subr.mxu0 0.0
        %4493 = vmatpush1.msra.mxu0 0.0
        %4494 = vmatprep.subr.mxu0 0.0
        %4495 = vmatpush1.msra.mxu0 0.0
        %4496 = vmatprep.subr.mxu0 0.0
        %4497 = vmatpush1.msra.mxu0 0.0
        %4498 = vmatprep.subr.mxu0 0.0
        %4499 = vmatpush1.msra.mxu0 0.0
        %4500 = vmatprep.subr.mxu0 0.0
        %4501 = vmatpush1.msra.mxu0 0.0
        %4502 = vmatprep.subr.mxu0 0.0
        %4503 = vmatpush1.msra.mxu0 0.0
        %4504 = vmatprep.subr.mxu0 0.0
        %4505 = vmatpush1.msra.mxu0 0.0
        %4506 = vmatprep.subr.mxu0 0.0
        %4507 = vmatpush1.msra.mxu0 0.0
        %4508 = vmatprep.subr.mxu0 0.0
        %4509 = vmatpush1.msra.mxu0 0.0
        %4510 = vmatprep.subr.mxu0 0.0
        %4511 = vmatpush1.msra.mxu0 0.0
        %4512 = vmatprep.mubr.f32.mxu0 0.0
        %4513 = vmatmul.mubr.f32.gmra.mrb[0].mxu0 %v4219
        %v4514 = vpop.f32.mrb[0].mxu0
        %v4515 = vadd.f32 0.0, %v4514
        %v4516 = vpop.f32.mrb[0].mxu0
        %v4517 = vadd.f32 0.0, %v4516
        %4518 = vdwg.mxu0
        %4519 = vmatprep.subr.mxu0 %v2744
        %4520 = vmatpush1.msra.mxu0 %v2743
        %4521 = vmatprep.subr.mxu0 %v2780
        %4522 = vmatpush1.msra.mxu0 %v2779
        %4523 = vmatprep.subr.mxu0 %v2816
        %4524 = vmatpush1.msra.mxu0 %v2815
        %4525 = vmatprep.subr.mxu0 %v2852
        %4526 = vmatpush1.msra.mxu0 %v2851
        %4527 = vmatprep.subr.mxu0 %v2888
        %4528 = vmatpush1.msra.mxu0 %v2887
        %4529 = vmatprep.subr.mxu0 %v2924
        %4530 = vmatpush1.msra.mxu0 %v2923
        %4531 = vmatprep.subr.mxu0 %v2960
        %4532 = vmatpush1.msra.mxu0 %v2959
        %4533 = vmatprep.subr.mxu0 %v2996
        %4534 = vmatpush1.msra.mxu0 %v2995
        %4535 = vmatprep.subr.mxu0 %v3032
        %4536 = vmatpush1.msra.mxu0 %v3031
        %4537 = vmatprep.subr.mxu0 %v3068
        %4538 = vmatpush1.msra.mxu0 %v3067
        %4539 = vmatprep.subr.mxu0 %v3104
        %4540 = vmatpush1.msra.mxu0 %v3103
        %4541 = vmatprep.subr.mxu0 %v3140
        %4542 = vmatpush1.msra.mxu0 %v3139
        %4543 = vmatprep.subr.mxu0 %v3176
        %4544 = vmatpush1.msra.mxu0 %v3175
        %4545 = vmatprep.subr.mxu0 %v3212
        %4546 = vmatpush1.msra.mxu0 %v3211
        %4547 = vmatprep.subr.mxu0 %v3248
        %4548 = vmatpush1.msra.mxu0 %v3247
        %4549 = vmatprep.subr.mxu0 %v3284
        %4550 = vmatpush1.msra.mxu0 %v3283
        %4551 = vmatprep.subr.mxu0 0.0
        %4552 = vmatpush1.msra.mxu0 0.0
        %4553 = vmatprep.subr.mxu0 0.0
        %4554 = vmatpush1.msra.mxu0 0.0
        %4555 = vmatprep.subr.mxu0 0.0
        %4556 = vmatpush1.msra.mxu0 0.0
        %4557 = vmatprep.subr.mxu0 0.0
        %4558 = vmatpush1.msra.mxu0 0.0
        %4559 = vmatprep.subr.mxu0 0.0
        %4560 = vmatpush1.msra.mxu0 0.0
        %4561 = vmatprep.subr.mxu0 0.0
        %4562 = vmatpush1.msra.mxu0 0.0
        %4563 = vmatprep.subr.mxu0 0.0
        %4564 = vmatpush1.msra.mxu0 0.0
        %4565 = vmatprep.subr.mxu0 0.0
        %4566 = vmatpush1.msra.mxu0 0.0
        %4567 = vmatprep.subr.mxu0 0.0
        %4568 = vmatpush1.msra.mxu0 0.0
        %4569 = vmatprep.subr.mxu0 0.0
        %4570 = vmatpush1.msra.mxu0 0.0
        %4571 = vmatprep.subr.mxu0 0.0
        %4572 = vmatpush1.msra.mxu0 0.0
        %4573 = vmatprep.subr.mxu0 0.0
        %4574 = vmatpush1.msra.mxu0 0.0
        %4575 = vmatprep.subr.mxu0 0.0
        %4576 = vmatpush1.msra.mxu0 0.0
        %4577 = vmatprep.subr.mxu0 0.0
        %4578 = vmatpush1.msra.mxu0 0.0
        %4579 = vmatprep.subr.mxu0 0.0
        %4580 = vmatpush1.msra.mxu0 0.0
        %4581 = vmatprep.subr.mxu0 0.0
        %4582 = vmatpush1.msra.mxu0 0.0
        %4583 = vmatprep.mubr.f32.mxu0 0.0
        %4584 = vmatmul.mubr.f32.gmra.mrb[0].mxu0 %v4219
        %v4585 = vpop.f32.mrb[0].mxu0
        %v4586 = vadd.f32 0.0, %v4585
        %v4587 = vpop.f32.mrb[0].mxu0
        %v4588 = vadd.f32 0.0, %v4587
        %4589 = vdwg.mxu0
        %4590 = vmatprep.subr.mxu0 %v2746
        %4591 = vmatpush1.msra.mxu0 %v2745
        %4592 = vmatprep.subr.mxu0 %v2782
        %4593 = vmatpush1.msra.mxu0 %v2781
        %4594 = vmatprep.subr.mxu0 %v2818
        %4595 = vmatpush1.msra.mxu0 %v2817
        %4596 = vmatprep.subr.mxu0 %v2854
        %4597 = vmatpush1.msra.mxu0 %v2853
        %4598 = vmatprep.subr.mxu0 %v2890
        %4599 = vmatpush1.msra.mxu0 %v2889
        %4600 = vmatprep.subr.mxu0 %v2926
        %4601 = vmatpush1.msra.mxu0 %v2925
        %4602 = vmatprep.subr.mxu0 %v2962
        %4603 = vmatpush1.msra.mxu0 %v2961
        %4604 = vmatprep.subr.mxu0 %v2998
        %4605 = vmatpush1.msra.mxu0 %v2997
        %4606 = vmatprep.subr.mxu0 %v3034
        %4607 = vmatpush1.msra.mxu0 %v3033
        %4608 = vmatprep.subr.mxu0 %v3070
        %4609 = vmatpush1.msra.mxu0 %v3069
        %4610 = vmatprep.subr.mxu0 %v3106
        %4611 = vmatpush1.msra.mxu0 %v3105
        %4612 = vmatprep.subr.mxu0 %v3142
        %4613 = vmatpush1.msra.mxu0 %v3141
        %4614 = vmatprep.subr.mxu0 %v3178
        %4615 = vmatpush1.msra.mxu0 %v3177
        %4616 = vmatprep.subr.mxu0 %v3214
        %4617 = vmatpush1.msra.mxu0 %v3213
        %4618 = vmatprep.subr.mxu0 %v3250
        %4619 = vmatpush1.msra.mxu0 %v3249
        %4620 = vmatprep.subr.mxu0 %v3286
        %4621 = vmatpush1.msra.mxu0 %v3285
        %4622 = vmatprep.subr.mxu0 0.0
        %4623 = vmatpush1.msra.mxu0 0.0
        %4624 = vmatprep.subr.mxu0 0.0
        %4625 = vmatpush1.msra.mxu0 0.0
        %4626 = vmatprep.subr.mxu0 0.0
        %4627 = vmatpush1.msra.mxu0 0.0
        %4628 = vmatprep.subr.mxu0 0.0
        %4629 = vmatpush1.msra.mxu0 0.0
        %4630 = vmatprep.subr.mxu0 0.0
        %4631 = vmatpush1.msra.mxu0 0.0
        %4632 = vmatprep.subr.mxu0 0.0
        %4633 = vmatpush1.msra.mxu0 0.0
        %4634 = vmatprep.subr.mxu0 0.0
        %4635 = vmatpush1.msra.mxu0 0.0
        %4636 = vmatprep.subr.mxu0 0.0
        %4637 = vmatpush1.msra.mxu0 0.0
        %4638 = vmatprep.subr.mxu0 0.0
        %4639 = vmatpush1.msra.mxu0 0.0
        %4640 = vmatprep.subr.mxu0 0.0
        %4641 = vmatpush1.msra.mxu0 0.0
        %4642 = vmatprep.subr.mxu0 0.0
        %4643 = vmatpush1.msra.mxu0 0.0
        %4644 = vmatprep.subr.mxu0 0.0
        %4645 = vmatpush1.msra.mxu0 0.0
        %4646 = vmatprep.subr.mxu0 0.0
        %4647 = vmatpush1.msra.mxu0 0.0
        %4648 = vmatprep.subr.mxu0 0.0
        %4649 = vmatpush1.msra.mxu0 0.0
        %4650 = vmatprep.subr.mxu0 0.0
        %4651 = vmatpush1.msra.mxu0 0.0
        %4652 = vmatprep.subr.mxu0 0.0
        %4653 = vmatpush1.msra.mxu0 0.0
        %4654 = vmatprep.mubr.f32.mxu0 0.0
        %4655 = vmatmul.mubr.f32.gmra.mrb[0].mxu0 %v4219
        %v4656 = vpop.f32.mrb[0].mxu0
        %v4657 = vadd.f32 0.0, %v4656
        %v4658 = vpop.f32.mrb[0].mxu0
        %v4659 = vadd.f32 0.0, %v4658
        %4660 = vdwg.mxu0
        %v4661 = vld [vmem:[#allocation10] sm:$0xf]
        %v4666 = vcombine.low %v3386, %v3388
        %v4667 = vcombine.low %v3457, %v3459
        %v4669 = vunpack.c.l.s4 1966171168
        %v4670 = vunpack.c.0.s8 %v4669
        %v4671 = vlaneseq
        %v4672 = vshrl.u32 %v4671, 7
        %v4673 = vsub.s32 %v4670, %v4672
        %v4674 = vrot.slane %v4666, %v4673
        %v4676 = vunpack.c.l.s4 1966171168
        %v4677 = vunpack.c.0.s8 %v4676
        %v4678 = vlaneseq
        %v4679 = vshrl.u32 %v4678, 7
        %v4680 = vsub.s32 %v4677, %v4679
        %v4681 = vrot.slane %v4667, %v4680
        %v4682 = vcombine.low %v4674, %v4681
        %v4684 = vunpack.c.l.s4 1966171168
        %v4685 = vunpack.c.0.s8 %v4684
        %v4686 = vlaneseq
        %v4687 = vshrl.u32 %v4686, 7
        %v4688 = vsub.s32 %v4685, %v4687
        %v4689 = vrot.slane %v4682, %v4688
        %v4691 = vadd.f32 %v4661, %v4689
        %v4696 = vcombine.low %v3844, %v3846
        %v4697 = vcombine.low %v3915, %v3917
        %v4699 = vunpack.c.l.s4 1966171168
        %v4700 = vunpack.c.0.s8 %v4699
        %v4701 = vlaneseq
        %v4702 = vshrl.u32 %v4701, 7
        %v4703 = vsub.s32 %v4700, %v4702
        %v4704 = vrot.slane %v4696, %v4703
        %v4706 = vunpack.c.l.s4 1966171168
        %v4707 = vunpack.c.0.s8 %v4706
        %v4708 = vlaneseq
        %v4709 = vshrl.u32 %v4708, 7
        %v4710 = vsub.s32 %v4707, %v4709
        %v4711 = vrot.slane %v4697, %v4710
        %v4712 = vcombine.low %v4704, %v4711
        %v4714 = vunpack.c.l.s4 1966171168
        %v4715 = vunpack.c.0.s8 %v4714
        %v4716 = vlaneseq
        %v4717 = vshrl.u32 %v4716, 7
        %v4718 = vsub.s32 %v4715, %v4717
        %v4719 = vrot.slane %v4712, %v4718
        %v4721 = vadd.f32 %v4691, %v4719
        %v4726 = vcombine.low %v4302, %v4304
        %v4727 = vcombine.low %v4373, %v4375
        %v4729 = vunpack.c.l.s4 1966171168
        %v4730 = vunpack.c.0.s8 %v4729
        %v4731 = vlaneseq
        %v4732 = vshrl.u32 %v4731, 7
        %v4733 = vsub.s32 %v4730, %v4732
        %v4734 = vrot.slane %v4726, %v4733
        %v4736 = vunpack.c.l.s4 1966171168
        %v4737 = vunpack.c.0.s8 %v4736
        %v4738 = vlaneseq
        %v4739 = vshrl.u32 %v4738, 7
        %v4740 = vsub.s32 %v4737, %v4739
        %v4741 = vrot.slane %v4727, %v4740
        %v4742 = vcombine.low %v4734, %v4741
        %v4744 = vunpack.c.l.s4 1966171168
        %v4745 = vunpack.c.0.s8 %v4744
        %v4746 = vlaneseq
        %v4747 = vshrl.u32 %v4746, 7
        %v4748 = vsub.s32 %v4745, %v4747
        %v4749 = vrot.slane %v4742, %v4748
        %v4751 = vadd.f32 %v4721, %v4749
        %v4756 = vcombine.low %v3528, %v3530
        %v4757 = vcombine.low %v3599, %v3601
        %v4759 = vunpack.c.l.s4 1966171168
        %v4760 = vunpack.c.0.s8 %v4759
        %v4761 = vlaneseq
        %v4762 = vshrl.u32 %v4761, 7
        %v4763 = vsub.s32 %v4760, %v4762
        %v4764 = vrot.slane %v4756, %v4763
        %v4766 = vunpack.c.l.s4 1966171168
        %v4767 = vunpack.c.0.s8 %v4766
        %v4768 = vlaneseq
        %v4769 = vshrl.u32 %v4768, 7
        %v4770 = vsub.s32 %v4767, %v4769
        %v4771 = vrot.slane %v4757, %v4770
        %v4772 = vcombine.high %v4764, %v4771
        %v4774 = vunpack.c.l.s4 1966171168
        %v4775 = vunpack.c.0.s8 %v4774
        %v4776 = vlaneseq
        %v4777 = vshrl.u32 %v4776, 7
        %v4778 = vsub.s32 %v4775, %v4777
        %v4779 = vrot.slane %v4772, %v4778
        %v4781 = vadd.f32 %v4751, %v4779
        %v4786 = vcombine.low %v3986, %v3988
        %v4787 = vcombine.low %v4057, %v4059
        %v4789 = vunpack.c.l.s4 1966171168
        %v4790 = vunpack.c.0.s8 %v4789
        %v4791 = vlaneseq
        %v4792 = vshrl.u32 %v4791, 7
        %v4793 = vsub.s32 %v4790, %v4792
        %v4794 = vrot.slane %v4786, %v4793
        %v4796 = vunpack.c.l.s4 1966171168
        %v4797 = vunpack.c.0.s8 %v4796
        %v4798 = vlaneseq
        %v4799 = vshrl.u32 %v4798, 7
        %v4800 = vsub.s32 %v4797, %v4799
        %v4801 = vrot.slane %v4787, %v4800
        %v4802 = vcombine.high %v4794, %v4801
        %v4804 = vunpack.c.l.s4 1966171168
        %v4805 = vunpack.c.0.s8 %v4804
        %v4806 = vlaneseq
        %v4807 = vshrl.u32 %v4806, 7
        %v4808 = vsub.s32 %v4805, %v4807
        %v4809 = vrot.slane %v4802, %v4808
        %v4811 = vadd.f32 %v4781, %v4809
        %v4816 = vcombine.low %v4444, %v4446
        %v4817 = vcombine.low %v4515, %v4517
        %v4819 = vunpack.c.l.s4 1966171168
        %v4820 = vunpack.c.0.s8 %v4819
        %v4821 = vlaneseq
        %v4822 = vshrl.u32 %v4821, 7
        %v4823 = vsub.s32 %v4820, %v4822
        %v4824 = vrot.slane %v4816, %v4823
        %v4826 = vunpack.c.l.s4 1966171168
        %v4827 = vunpack.c.0.s8 %v4826
        %v4828 = vlaneseq
        %v4829 = vshrl.u32 %v4828, 7
        %v4830 = vsub.s32 %v4827, %v4829
        %v4831 = vrot.slane %v4817, %v4830
        %v4832 = vcombine.high %v4824, %v4831
        %v4834 = vunpack.c.l.s4 1966171168
        %v4835 = vunpack.c.0.s8 %v4834
        %v4836 = vlaneseq
        %v4837 = vshrl.u32 %v4836, 7
        %v4838 = vsub.s32 %v4835, %v4837
        %v4839 = vrot.slane %v4832, %v4838
        %v4841 = vadd.f32 %v4811, %v4839
        %v4846 = vcombine.low %v3670, %v3672
        %v4847 = vcombine.low %v3741, %v3743
        %v4849 = vunpack.c.l.s4 1966171168
        %v4850 = vunpack.c.0.s8 %v4849
        %v4851 = vlaneseq
        %v4852 = vshrl.u32 %v4851, 7
        %v4853 = vsub.s32 %v4850, %v4852
        %v4854 = vrot.slane %v4846, %v4853
        %v4856 = vunpack.c.l.s4 1966171168
        %v4857 = vunpack.c.0.s8 %v4856
        %v4858 = vlaneseq
        %v4859 = vshrl.u32 %v4858, 7
        %v4860 = vsub.s32 %v4857, %v4859
        %v4861 = vrot.slane %v4847, %v4860
        %v4862 = vcombine.low %v4854, %v4861
        %v4864 = vunpack.c.l.s4 1966171168
        %v4865 = vunpack.c.0.s8 %v4864
        %v4866 = vlaneseq
        %v4867 = vshrl.u32 %v4866, 7
        %v4868 = vsub.s32 %v4865, %v4867
        %v4869 = vrot.slane %v4862, %v4868
        %v4870 = vcombine.high %v4869, %v4869
        %v4872 = vadd.f32 %v4841, %v4870
        %v4877 = vcombine.low %v4128, %v4130
        %v4878 = vcombine.low %v4199, %v4201
        %v4880 = vunpack.c.l.s4 1966171168
        %v4881 = vunpack.c.0.s8 %v4880
        %v4882 = vlaneseq
        %v4883 = vshrl.u32 %v4882, 7
        %v4884 = vsub.s32 %v4881, %v4883
        %v4885 = vrot.slane %v4877, %v4884
        %v4887 = vunpack.c.l.s4 1966171168
        %v4888 = vunpack.c.0.s8 %v4887
        %v4889 = vlaneseq
        %v4890 = vshrl.u32 %v4889, 7
        %v4891 = vsub.s32 %v4888, %v4890
        %v4892 = vrot.slane %v4878, %v4891
        %v4893 = vcombine.low %v4885, %v4892
        %v4895 = vunpack.c.l.s4 1966171168
        %v4896 = vunpack.c.0.s8 %v4895
        %v4897 = vlaneseq
        %v4898 = vshrl.u32 %v4897, 7
        %v4899 = vsub.s32 %v4896, %v4898
        %v4900 = vrot.slane %v4893, %v4899
        %v4901 = vcombine.high %v4900, %v4900
        %v4903 = vadd.f32 %v4872, %v4901
        %v4908 = vcombine.low %v4586, %v4588
        %v4909 = vcombine.low %v4657, %v4659
        %v4911 = vunpack.c.l.s4 1966171168
        %v4912 = vunpack.c.0.s8 %v4911
        %v4913 = vlaneseq
        %v4914 = vshrl.u32 %v4913, 7
        %v4915 = vsub.s32 %v4912, %v4914
        %v4916 = vrot.slane %v4908, %v4915
        %v4918 = vunpack.c.l.s4 1966171168
        %v4919 = vunpack.c.0.s8 %v4918
        %v4920 = vlaneseq
        %v4921 = vshrl.u32 %v4920, 7
        %v4922 = vsub.s32 %v4919, %v4921
        %v4923 = vrot.slane %v4909, %v4922
        %v4924 = vcombine.low %v4916, %v4923
        %v4926 = vunpack.c.l.s4 1966171168
        %v4927 = vunpack.c.0.s8 %v4926
        %v4928 = vlaneseq
        %v4929 = vshrl.u32 %v4928, 7
        %v4930 = vsub.s32 %v4927, %v4929
        %v4931 = vrot.slane %v4924, %v4930
        %v4932 = vcombine.high %v4931, %v4931
        %v4934 = vadd.f32 %v4903, %v4932
        %v4935 = vmax.f32 %v4934, 0.0
        %v4936 = vld [vmem:[#allocation12] sm:$0xff]
        %v4937 = vld [vmem:[#allocation12 + $0x8] sm:$0xff]
        %v4938 = vld [vmem:[#allocation12 + $0x10] sm:$0xff]
        %v4939 = vld [vmem:[#allocation12 + $0x18] sm:$0xff]
        %v4940 = vld [vmem:[#allocation12 + $0x20] sm:$0xff]
        %v4941 = vld [vmem:[#allocation12 + $0x28] sm:$0xff]
        %v4942 = vld [vmem:[#allocation12 + $0x30] sm:$0xff]
        %v4943 = vld [vmem:[#allocation12 + $0x38] sm:$0xff]
        %v4944 = vld [vmem:[#allocation12 + $0x40] sm:$0xff]
        %v4945 = vld [vmem:[#allocation12 + $0x48] sm:$0xff]
        %v4946 = vld [vmem:[#allocation12 + $0x50] sm:$0xff]
        %v4947 = vld [vmem:[#allocation12 + $0x58] sm:$0xff]
        %v4948 = vld [vmem:[#allocation12 + $0x60] sm:$0xff]
        %v4949 = vld [vmem:[#allocation12 + $0x68] sm:$0xff]
        %v4950 = vld [vmem:[#allocation12 + $0x70] sm:$0xff]
        %v4951 = vld [vmem:[#allocation12 + $0x78] sm:$0xff]
        %v4952 = vld [vmem:[#allocation12 + $0x80] sm:$0xff]
        %v4953 = vld [vmem:[#allocation12 + $0x88] sm:$0xff]
        %v4954 = vld [vmem:[#allocation12 + $0x90] sm:$0xff]
        %v4955 = vld [vmem:[#allocation12 + $0x98] sm:$0xff]
        %v4956 = vld [vmem:[#allocation12 + $0xa0] sm:$0xff]
        %v4957 = vld [vmem:[#allocation12 + $0xa8] sm:$0xff]
        %v4958 = vld [vmem:[#allocation12 + $0xb0] sm:$0xff]
        %v4959 = vld [vmem:[#allocation12 + $0xb8] sm:$0xff]
        %v4960 = vld [vmem:[#allocation12 + $0xc0] sm:$0xff]
        %v4961 = vld [vmem:[#allocation12 + $0xc8] sm:$0xff]
        %v4962 = vld [vmem:[#allocation12 + $0xd0] sm:$0xff]
        %v4963 = vld [vmem:[#allocation12 + $0xd8] sm:$0xff]
        %v4964 = vld [vmem:[#allocation12 + $0xe0] sm:$0xff]
        %v4965 = vld [vmem:[#allocation12 + $0xe8] sm:$0xff]
        %v4966 = vld [vmem:[#allocation12 + $0xf0] sm:$0xff]
        %v4967 = vld [vmem:[#allocation12 + $0xf8] sm:$0xff]
        %v4968 = vld [vmem:[#allocation12 + $0x100] sm:$0xff]
        %v4969 = vld [vmem:[#allocation12 + $0x108] sm:$0xff]
        %v4970 = vld [vmem:[#allocation12 + $0x110] sm:$0xff]
        %v4971 = vld [vmem:[#allocation12 + $0x118] sm:$0xff]
        %v4972 = vld [vmem:[#allocation12 + $0x120] sm:$0xff]
        %v4973 = vld [vmem:[#allocation12 + $0x128] sm:$0xff]
        %v4974 = vld [vmem:[#allocation12 + $0x130] sm:$0xff]
        %v4975 = vld [vmem:[#allocation12 + $0x138] sm:$0xff]
        %v4976 = vld [vmem:[#allocation12 + $0x140] sm:$0xff]
        %v4977 = vld [vmem:[#allocation12 + $0x148] sm:$0xff]
        %v4978 = vld [vmem:[#allocation12 + $0x150] sm:$0xff]
        %v4979 = vld [vmem:[#allocation12 + $0x158] sm:$0xff]
        %v4980 = vld [vmem:[#allocation12 + $0x160] sm:$0xff]
        %v4981 = vld [vmem:[#allocation12 + $0x168] sm:$0xff]
        %v4982 = vld [vmem:[#allocation12 + $0x170] sm:$0xff]
        %v4983 = vld [vmem:[#allocation12 + $0x178] sm:$0xff]
        %v4984 = vld [vmem:[#allocation12 + $0x180] sm:$0xff]
        %v4985 = vld [vmem:[#allocation12 + $0x188] sm:$0xff]
        %v4986 = vld [vmem:[#allocation12 + $0x190] sm:$0xff]
        %v4987 = vld [vmem:[#allocation12 + $0x198] sm:$0xff]
        %v4988 = vld [vmem:[#allocation12 + $0x1a0] sm:$0xff]
        %v4989 = vld [vmem:[#allocation12 + $0x1a8] sm:$0xff]
        %v4990 = vld [vmem:[#allocation12 + $0x1b0] sm:$0xff]
        %v4991 = vld [vmem:[#allocation12 + $0x1b8] sm:$0xff]
        %v4992 = vld [vmem:[#allocation12 + $0x1c0] sm:$0xff]
        %v4993 = vld [vmem:[#allocation12 + $0x1c8] sm:$0xff]
        %v4994 = vld [vmem:[#allocation12 + $0x1d0] sm:$0xff]
        %v4995 = vld [vmem:[#allocation12 + $0x1d8] sm:$0xff]
        %v4996 = vld [vmem:[#allocation12 + $0x1e0] sm:$0xff]
        %v4997 = vld [vmem:[#allocation12 + $0x1e8] sm:$0xff]
        %v4998 = vld [vmem:[#allocation12 + $0x1f0] sm:$0xff]
        %v4999 = vld [vmem:[#allocation12 + $0x1f8] sm:$0xff]
        %v5000 = vunpack.c.l.bf16 %v4936
        %v5001 = vunpack.c.h.bf16 %v4936
        %v5002 = vunpack.c.l.bf16 %v4937
        %v5003 = vunpack.c.h.bf16 %v4937
        %v5004 = vunpack.c.l.bf16 %v4938
        %v5005 = vunpack.c.h.bf16 %v4938
        %v5006 = vunpack.c.l.bf16 %v4939
        %v5007 = vunpack.c.h.bf16 %v4939
        %v5008 = vunpack.c.l.bf16 %v4940
        %v5009 = vunpack.c.h.bf16 %v4940
        %v5010 = vunpack.c.l.bf16 %v4941
        %v5011 = vunpack.c.h.bf16 %v4941
        %v5012 = vunpack.c.l.bf16 %v4942
        %v5013 = vunpack.c.h.bf16 %v4942
        %v5014 = vunpack.c.l.bf16 %v4943
        %v5015 = vunpack.c.h.bf16 %v4943
        %v5016 = vunpack.c.l.bf16 %v4944
        %v5017 = vunpack.c.h.bf16 %v4944
        %v5018 = vunpack.c.l.bf16 %v4945
        %v5019 = vunpack.c.h.bf16 %v4945
        %v5020 = vunpack.c.l.bf16 %v4946
        %v5021 = vunpack.c.h.bf16 %v4946
        %v5022 = vunpack.c.l.bf16 %v4947
        %v5023 = vunpack.c.h.bf16 %v4947
        %v5024 = vunpack.c.l.bf16 %v4948
        %v5025 = vunpack.c.h.bf16 %v4948
        %v5026 = vunpack.c.l.bf16 %v4949
        %v5027 = vunpack.c.h.bf16 %v4949
        %v5028 = vunpack.c.l.bf16 %v4950
        %v5029 = vunpack.c.h.bf16 %v4950
        %v5030 = vunpack.c.l.bf16 %v4951
        %v5031 = vunpack.c.h.bf16 %v4951
        %v5032 = vunpack.c.l.bf16 %v4952
        %v5033 = vunpack.c.h.bf16 %v4952
        %v5034 = vunpack.c.l.bf16 %v4953
        %v5035 = vunpack.c.h.bf16 %v4953
        %v5036 = vunpack.c.l.bf16 %v4954
        %v5037 = vunpack.c.h.bf16 %v4954
        %v5038 = vunpack.c.l.bf16 %v4955
        %v5039 = vunpack.c.h.bf16 %v4955
        %v5040 = vunpack.c.l.bf16 %v4956
        %v5041 = vunpack.c.h.bf16 %v4956
        %v5042 = vunpack.c.l.bf16 %v4957
        %v5043 = vunpack.c.h.bf16 %v4957
        %v5044 = vunpack.c.l.bf16 %v4958
        %v5045 = vunpack.c.h.bf16 %v4958
        %v5046 = vunpack.c.l.bf16 %v4959
        %v5047 = vunpack.c.h.bf16 %v4959
        %v5048 = vunpack.c.l.bf16 %v4960
        %v5049 = vunpack.c.h.bf16 %v4960
        %v5050 = vunpack.c.l.bf16 %v4961
        %v5051 = vunpack.c.h.bf16 %v4961
        %v5052 = vunpack.c.l.bf16 %v4962
        %v5053 = vunpack.c.h.bf16 %v4962
        %v5054 = vunpack.c.l.bf16 %v4963
        %v5055 = vunpack.c.h.bf16 %v4963
        %v5056 = vunpack.c.l.bf16 %v4964
        %v5057 = vunpack.c.h.bf16 %v4964
        %v5058 = vunpack.c.l.bf16 %v4965
        %v5059 = vunpack.c.h.bf16 %v4965
        %v5060 = vunpack.c.l.bf16 %v4966
        %v5061 = vunpack.c.h.bf16 %v4966
        %v5062 = vunpack.c.l.bf16 %v4967
        %v5063 = vunpack.c.h.bf16 %v4967
        %v5064 = vunpack.c.l.bf16 %v4968
        %v5065 = vunpack.c.h.bf16 %v4968
        %v5066 = vunpack.c.l.bf16 %v4969
        %v5067 = vunpack.c.h.bf16 %v4969
        %v5068 = vunpack.c.l.bf16 %v4970
        %v5069 = vunpack.c.h.bf16 %v4970
        %v5070 = vunpack.c.l.bf16 %v4971
        %v5071 = vunpack.c.h.bf16 %v4971
        %v5072 = vunpack.c.l.bf16 %v4972
        %v5073 = vunpack.c.h.bf16 %v4972
        %v5074 = vunpack.c.l.bf16 %v4973
        %v5075 = vunpack.c.h.bf16 %v4973
        %v5076 = vunpack.c.l.bf16 %v4974
        %v5077 = vunpack.c.h.bf16 %v4974
        %v5078 = vunpack.c.l.bf16 %v4975
        %v5079 = vunpack.c.h.bf16 %v4975
        %v5080 = vunpack.c.l.bf16 %v4976
        %v5081 = vunpack.c.h.bf16 %v4976
        %v5082 = vunpack.c.l.bf16 %v4977
        %v5083 = vunpack.c.h.bf16 %v4977
        %v5084 = vunpack.c.l.bf16 %v4978
        %v5085 = vunpack.c.h.bf16 %v4978
        %v5086 = vunpack.c.l.bf16 %v4979
        %v5087 = vunpack.c.h.bf16 %v4979
        %v5088 = vunpack.c.l.bf16 %v4980
        %v5089 = vunpack.c.h.bf16 %v4980
        %v5090 = vunpack.c.l.bf16 %v4981
        %v5091 = vunpack.c.h.bf16 %v4981
        %v5092 = vunpack.c.l.bf16 %v4982
        %v5093 = vunpack.c.h.bf16 %v4982
        %v5094 = vunpack.c.l.bf16 %v4983
        %v5095 = vunpack.c.h.bf16 %v4983
        %v5096 = vunpack.c.l.bf16 %v4984
        %v5097 = vunpack.c.h.bf16 %v4984
        %v5098 = vunpack.c.l.bf16 %v4985
        %v5099 = vunpack.c.h.bf16 %v4985
        %v5100 = vunpack.c.l.bf16 %v4986
        %v5101 = vunpack.c.h.bf16 %v4986
        %v5102 = vunpack.c.l.bf16 %v4987
        %v5103 = vunpack.c.h.bf16 %v4987
        %v5104 = vunpack.c.l.bf16 %v4988
        %v5105 = vunpack.c.h.bf16 %v4988
        %v5106 = vunpack.c.l.bf16 %v4989
        %v5107 = vunpack.c.h.bf16 %v4989
        %v5108 = vunpack.c.l.bf16 %v4990
        %v5109 = vunpack.c.h.bf16 %v4990
        %v5110 = vunpack.c.l.bf16 %v4991
        %v5111 = vunpack.c.h.bf16 %v4991
        %v5112 = vunpack.c.l.bf16 %v4992
        %v5113 = vunpack.c.h.bf16 %v4992
        %v5114 = vunpack.c.l.bf16 %v4993
        %v5115 = vunpack.c.h.bf16 %v4993
        %v5116 = vunpack.c.l.bf16 %v4994
        %v5117 = vunpack.c.h.bf16 %v4994
        %v5118 = vunpack.c.l.bf16 %v4995
        %v5119 = vunpack.c.h.bf16 %v4995
        %v5120 = vunpack.c.l.bf16 %v4996
        %v5121 = vunpack.c.h.bf16 %v4996
        %v5122 = vunpack.c.l.bf16 %v4997
        %v5123 = vunpack.c.h.bf16 %v4997
        %v5124 = vunpack.c.l.bf16 %v4998
        %v5125 = vunpack.c.h.bf16 %v4998
        %v5126 = vunpack.c.l.bf16 %v4999
        %v5127 = vunpack.c.h.bf16 %v4999
        %v5128 = vld [vmem:[#allocation13] sm:$0x3]
        %v5130 = vlaneseq
        %v5131 = vshrl.u32 %v5130, 7
        %v5132 = vsub.s32 0, %v5131
        %v5133 = vrot.slane %v4935, %v5132
        %v5134 = vlaneseq
        %v5135 = vshrl.u32 %v5134, 7
        %v5136 = vsub.s32 1, %v5135
        %v5137 = vrot.slane %v4935, %v5136
        %v5138 = vlaneseq
        %v5139 = vshrl.u32 %v5138, 7
        %v5140 = vsub.s32 2, %v5139
        %v5141 = vrot.slane %v4935, %v5140
        %v5142 = vlaneseq
        %v5143 = vshrl.u32 %v5142, 7
        %v5144 = vsub.s32 3, %v5143
        %v5145 = vrot.slane %v4935, %v5144
        %v5151 = vlaneseq
        %v5152 = vshrl.u32 %v5151, 7
        %v5153 = vsub.s32 0, %v5152
        %v5154 = vrot.slane %v5128, %v5153
        %v5155 = vlaneseq
        %v5156 = vshrl.u32 %v5155, 7
        %v5157 = vsub.s32 1, %v5156
        %v5158 = vrot.slane %v5128, %v5157
        %5161 = vmatprep.subr.mxu0 %v5001
        %5162 = vmatpush1.msra.mxu0 %v5000
        %5163 = vmatprep.subr.mxu0 %v5003
        %5164 = vmatpush1.msra.mxu0 %v5002
        %5165 = vmatprep.subr.mxu0 %v5005
        %5166 = vmatpush1.msra.mxu0 %v5004
        %5167 = vmatprep.subr.mxu0 %v5007
        %5168 = vmatpush1.msra.mxu0 %v5006
        %5169 = vmatprep.subr.mxu0 %v5009
        %5170 = vmatpush1.msra.mxu0 %v5008
        %5171 = vmatprep.subr.mxu0 %v5011
        %5172 = vmatpush1.msra.mxu0 %v5010
        %5173 = vmatprep.subr.mxu0 %v5013
        %5174 = vmatpush1.msra.mxu0 %v5012
        %5175 = vmatprep.subr.mxu0 %v5015
        %5176 = vmatpush1.msra.mxu0 %v5014
        %5177 = vmatprep.subr.mxu0 %v5017
        %5178 = vmatpush1.msra.mxu0 %v5016
        %5179 = vmatprep.subr.mxu0 %v5019
        %5180 = vmatpush1.msra.mxu0 %v5018
        %5181 = vmatprep.subr.mxu0 %v5021
        %5182 = vmatpush1.msra.mxu0 %v5020
        %5183 = vmatprep.subr.mxu0 %v5023
        %5184 = vmatpush1.msra.mxu0 %v5022
        %5185 = vmatprep.subr.mxu0 %v5025
        %5186 = vmatpush1.msra.mxu0 %v5024
        %5187 = vmatprep.subr.mxu0 %v5027
        %5188 = vmatpush1.msra.mxu0 %v5026
        %5189 = vmatprep.subr.mxu0 %v5029
        %5190 = vmatpush1.msra.mxu0 %v5028
        %5191 = vmatprep.subr.mxu0 %v5031
        %5192 = vmatpush1.msra.mxu0 %v5030
        %5193 = vmatprep.subr.mxu0 %v5033
        %5194 = vmatpush1.msra.mxu0 %v5032
        %5195 = vmatprep.subr.mxu0 %v5035
        %5196 = vmatpush1.msra.mxu0 %v5034
        %5197 = vmatprep.subr.mxu0 %v5037
        %5198 = vmatpush1.msra.mxu0 %v5036
        %5199 = vmatprep.subr.mxu0 %v5039
        %5200 = vmatpush1.msra.mxu0 %v5038
        %5201 = vmatprep.subr.mxu0 %v5041
        %5202 = vmatpush1.msra.mxu0 %v5040
        %5203 = vmatprep.subr.mxu0 %v5043
        %5204 = vmatpush1.msra.mxu0 %v5042
        %5205 = vmatprep.subr.mxu0 %v5045
        %5206 = vmatpush1.msra.mxu0 %v5044
        %5207 = vmatprep.subr.mxu0 %v5047
        %5208 = vmatpush1.msra.mxu0 %v5046
        %5209 = vmatprep.subr.mxu0 %v5049
        %5210 = vmatpush1.msra.mxu0 %v5048
        %5211 = vmatprep.subr.mxu0 %v5051
        %5212 = vmatpush1.msra.mxu0 %v5050
        %5213 = vmatprep.subr.mxu0 %v5053
        %5214 = vmatpush1.msra.mxu0 %v5052
        %5215 = vmatprep.subr.mxu0 %v5055
        %5216 = vmatpush1.msra.mxu0 %v5054
        %5217 = vmatprep.subr.mxu0 %v5057
        %5218 = vmatpush1.msra.mxu0 %v5056
        %5219 = vmatprep.subr.mxu0 %v5059
        %5220 = vmatpush1.msra.mxu0 %v5058
        %5221 = vmatprep.subr.mxu0 %v5061
        %5222 = vmatpush1.msra.mxu0 %v5060
        %5223 = vmatprep.subr.mxu0 %v5063
        %5224 = vmatpush1.msra.mxu0 %v5062
        %5225 = vmatprep.mubr.f32.mxu0 %v5137
        %5226 = vmatmul.mubr.f32.gmra.mrb[0].mxu0 %v5133
        %v5227 = vpop.f32.mrb[0].mxu0
        %v5228 = vadd.f32 %v5154, %v5227
        %v5229 = vpop.f32.mrb[0].mxu0
        %v5230 = vadd.f32 %v5158, %v5229
        %5231 = vdwg.mxu0
        %5232 = vmatprep.subr.mxu0 %v5065
        %5233 = vmatpush1.msra.mxu0 %v5064
        %5234 = vmatprep.subr.mxu0 %v5067
        %5235 = vmatpush1.msra.mxu0 %v5066
        %5236 = vmatprep.subr.mxu0 %v5069
        %5237 = vmatpush1.msra.mxu0 %v5068
        %5238 = vmatprep.subr.mxu0 %v5071
        %5239 = vmatpush1.msra.mxu0 %v5070
        %5240 = vmatprep.subr.mxu0 %v5073
        %5241 = vmatpush1.msra.mxu0 %v5072
        %5242 = vmatprep.subr.mxu0 %v5075
        %5243 = vmatpush1.msra.mxu0 %v5074
        %5244 = vmatprep.subr.mxu0 %v5077
        %5245 = vmatpush1.msra.mxu0 %v5076
        %5246 = vmatprep.subr.mxu0 %v5079
        %5247 = vmatpush1.msra.mxu0 %v5078
        %5248 = vmatprep.subr.mxu0 %v5081
        %5249 = vmatpush1.msra.mxu0 %v5080
        %5250 = vmatprep.subr.mxu0 %v5083
        %5251 = vmatpush1.msra.mxu0 %v5082
        %5252 = vmatprep.subr.mxu0 %v5085
        %5253 = vmatpush1.msra.mxu0 %v5084
        %5254 = vmatprep.subr.mxu0 %v5087
        %5255 = vmatpush1.msra.mxu0 %v5086
        %5256 = vmatprep.subr.mxu0 %v5089
        %5257 = vmatpush1.msra.mxu0 %v5088
        %5258 = vmatprep.subr.mxu0 %v5091
        %5259 = vmatpush1.msra.mxu0 %v5090
        %5260 = vmatprep.subr.mxu0 %v5093
        %5261 = vmatpush1.msra.mxu0 %v5092
        %5262 = vmatprep.subr.mxu0 %v5095
        %5263 = vmatpush1.msra.mxu0 %v5094
        %5264 = vmatprep.subr.mxu0 %v5097
        %5265 = vmatpush1.msra.mxu0 %v5096
        %5266 = vmatprep.subr.mxu0 %v5099
        %5267 = vmatpush1.msra.mxu0 %v5098
        %5268 = vmatprep.subr.mxu0 %v5101
        %5269 = vmatpush1.msra.mxu0 %v5100
        %5270 = vmatprep.subr.mxu0 %v5103
        %5271 = vmatpush1.msra.mxu0 %v5102
        %5272 = vmatprep.subr.mxu0 %v5105
        %5273 = vmatpush1.msra.mxu0 %v5104
        %5274 = vmatprep.subr.mxu0 %v5107
        %5275 = vmatpush1.msra.mxu0 %v5106
        %5276 = vmatprep.subr.mxu0 %v5109
        %5277 = vmatpush1.msra.mxu0 %v5108
        %5278 = vmatprep.subr.mxu0 %v5111
        %5279 = vmatpush1.msra.mxu0 %v5110
        %5280 = vmatprep.subr.mxu0 %v5113
        %5281 = vmatpush1.msra.mxu0 %v5112
        %5282 = vmatprep.subr.mxu0 %v5115
        %5283 = vmatpush1.msra.mxu0 %v5114
        %5284 = vmatprep.subr.mxu0 %v5117
        %5285 = vmatpush1.msra.mxu0 %v5116
        %5286 = vmatprep.subr.mxu0 %v5119
        %5287 = vmatpush1.msra.mxu0 %v5118
        %5288 = vmatprep.subr.mxu0 %v5121
        %5289 = vmatpush1.msra.mxu0 %v5120
        %5290 = vmatprep.subr.mxu0 %v5123
        %5291 = vmatpush1.msra.mxu0 %v5122
        %5292 = vmatprep.subr.mxu0 %v5125
        %5293 = vmatpush1.msra.mxu0 %v5124
        %5294 = vmatprep.subr.mxu0 %v5127
        %5295 = vmatpush1.msra.mxu0 %v5126
        %5296 = vmatprep.mubr.f32.mxu0 %v5145
        %5297 = vmatmul.mubr.f32.gmra.mrb[0].mxu0 %v5141
        %v5298 = vpop.f32.mrb[0].mxu0
        %v5299 = vadd.f32 %v5228, %v5298
        %v5300 = vpop.f32.mrb[0].mxu0
        %v5301 = vadd.f32 %v5230, %v5300
        %5302 = vdwg.mxu0
        %v5303 = vmax.f32 %v5299, 0.0
        %v5304 = vmax.f32 %v5301, 0.0
        %v5305 = vld [vmem:[%s10] sm:$0xf]
        %v5306 = vld [vmem:[%s10 + $0x4] sm:$0xf]
        %v5307 = vld [vmem:[%s10 + $0x8] sm:$0xf]
        %v5308 = vld [vmem:[%s10 + $0xc] sm:$0xf]
        %v5309 = vld [vmem:[%s10 + $0x10] sm:$0xf]
        %v5310 = vld [vmem:[%s10 + $0x14] sm:$0xf]
        %v5311 = vld [vmem:[%s10 + $0x18] sm:$0xf]
        %v5312 = vld [vmem:[%s10 + $0x1c] sm:$0xf]
        %v5313 = vld [vmem:[%s10 + $0x20] sm:$0xf]
        %v5314 = vld [vmem:[%s10 + $0x24] sm:$0xf]
        %v5315 = vld [vmem:[%s10 + $0x28] sm:$0xf]
        %v5316 = vld [vmem:[%s10 + $0x2c] sm:$0xf]
        %v5317 = vld [vmem:[%s10 + $0x30] sm:$0xf]
        %v5318 = vld [vmem:[%s10 + $0x34] sm:$0xf]
        %v5319 = vld [vmem:[%s10 + $0x38] sm:$0xf]
        %v5320 = vld [vmem:[%s10 + $0x3c] sm:$0xf]
        %v5321 = vld [vmem:[%s10 + $0x40] sm:$0xf]
        %v5322 = vld [vmem:[%s10 + $0x44] sm:$0xf]
        %v5323 = vld [vmem:[%s10 + $0x48] sm:$0xf]
        %v5324 = vld [vmem:[%s10 + $0x4c] sm:$0xf]
        %v5325 = vld [vmem:[%s10 + $0x50] sm:$0xf]
        %v5326 = vld [vmem:[%s10 + $0x54] sm:$0xf]
        %v5327 = vld [vmem:[%s10 + $0x58] sm:$0xf]
        %v5328 = vld [vmem:[%s10 + $0x5c] sm:$0xf]
        %v5329 = vld [vmem:[%s10 + $0x60] sm:$0xf]
        %v5330 = vld [vmem:[%s10 + $0x64] sm:$0xf]
        %v5331 = vld [vmem:[%s10 + $0x68] sm:$0xf]
        %v5332 = vld [vmem:[%s10 + $0x6c] sm:$0xf]
        %v5333 = vld [vmem:[%s10 + $0x70] sm:$0xf]
        %v5334 = vld [vmem:[%s10 + $0x74] sm:$0xf]
        %v5335 = vld [vmem:[%s10 + $0x78] sm:$0xf]
        %v5336 = vld [vmem:[%s10 + $0x7c] sm:$0xf]
        %v5337 = vunpack.c.l.bf16 %v5305
        %v5338 = vunpack.c.l.bf16 %v5306
        %v5339 = vunpack.c.l.bf16 %v5307
        %v5340 = vunpack.c.l.bf16 %v5308
        %v5341 = vunpack.c.l.bf16 %v5309
        %v5342 = vunpack.c.l.bf16 %v5310
        %v5343 = vunpack.c.l.bf16 %v5311
        %v5344 = vunpack.c.l.bf16 %v5312
        %v5345 = vunpack.c.l.bf16 %v5313
        %v5346 = vunpack.c.l.bf16 %v5314
        %v5347 = vunpack.c.l.bf16 %v5315
        %v5348 = vunpack.c.l.bf16 %v5316
        %v5349 = vunpack.c.l.bf16 %v5317
        %v5350 = vunpack.c.l.bf16 %v5318
        %v5351 = vunpack.c.l.bf16 %v5319
        %v5352 = vunpack.c.l.bf16 %v5320
        %v5353 = vunpack.c.l.bf16 %v5321
        %v5354 = vunpack.c.l.bf16 %v5322
        %v5355 = vunpack.c.l.bf16 %v5323
        %v5356 = vunpack.c.l.bf16 %v5324
        %v5357 = vunpack.c.l.bf16 %v5325
        %v5358 = vunpack.c.l.bf16 %v5326
        %v5359 = vunpack.c.l.bf16 %v5327
        %v5360 = vunpack.c.l.bf16 %v5328
        %v5361 = vunpack.c.l.bf16 %v5329
        %v5362 = vunpack.c.l.bf16 %v5330
        %v5363 = vunpack.c.l.bf16 %v5331
        %v5364 = vunpack.c.l.bf16 %v5332
        %v5365 = vunpack.c.l.bf16 %v5333
        %v5366 = vunpack.c.l.bf16 %v5334
        %v5367 = vunpack.c.l.bf16 %v5335
        %v5368 = vunpack.c.l.bf16 %v5336
        %v5369 = vld [vmem:[#allocation15] sm:$0x1]
        %5370 = vmatprep.subr.mxu0 0.0
        %5371 = vmatpush1.msra.mxu0 %v5337
        %5372 = vmatprep.subr.mxu0 0.0
        %5373 = vmatpush1.msra.mxu0 %v5338
        %5374 = vmatprep.subr.mxu0 0.0
        %5375 = vmatpush1.msra.mxu0 %v5339
        %5376 = vmatprep.subr.mxu0 0.0
        %5377 = vmatpush1.msra.mxu0 %v5340
        %5378 = vmatprep.subr.mxu0 0.0
        %5379 = vmatpush1.msra.mxu0 %v5341
        %5380 = vmatprep.subr.mxu0 0.0
        %5381 = vmatpush1.msra.mxu0 %v5342
        %5382 = vmatprep.subr.mxu0 0.0
        %5383 = vmatpush1.msra.mxu0 %v5343
        %5384 = vmatprep.subr.mxu0 0.0
        %5385 = vmatpush1.msra.mxu0 %v5344
        %5386 = vmatprep.subr.mxu0 0.0
        %5387 = vmatpush1.msra.mxu0 %v5345
        %5388 = vmatprep.subr.mxu0 0.0
        %5389 = vmatpush1.msra.mxu0 %v5346
        %5390 = vmatprep.subr.mxu0 0.0
        %5391 = vmatpush1.msra.mxu0 %v5347
        %5392 = vmatprep.subr.mxu0 0.0
        %5393 = vmatpush1.msra.mxu0 %v5348
        %5394 = vmatprep.subr.mxu0 0.0
        %5395 = vmatpush1.msra.mxu0 %v5349
        %5396 = vmatprep.subr.mxu0 0.0
        %5397 = vmatpush1.msra.mxu0 %v5350
        %5398 = vmatprep.subr.mxu0 0.0
        %5399 = vmatpush1.msra.mxu0 %v5351
        %5400 = vmatprep.subr.mxu0 0.0
        %5401 = vmatpush1.msra.mxu0 %v5352
        %5402 = vmatprep.subr.mxu0 0.0
        %5403 = vmatpush1.msra.mxu0 %v5353
        %5404 = vmatprep.subr.mxu0 0.0
        %5405 = vmatpush1.msra.mxu0 %v5354
        %5406 = vmatprep.subr.mxu0 0.0
        %5407 = vmatpush1.msra.mxu0 %v5355
        %5408 = vmatprep.subr.mxu0 0.0
        %5409 = vmatpush1.msra.mxu0 %v5356
        %5410 = vmatprep.subr.mxu0 0.0
        %5411 = vmatpush1.msra.mxu0 %v5357
        %5412 = vmatprep.subr.mxu0 0.0
        %5413 = vmatpush1.msra.mxu0 %v5358
        %5414 = vmatprep.subr.mxu0 0.0
        %5415 = vmatpush1.msra.mxu0 %v5359
        %5416 = vmatprep.subr.mxu0 0.0
        %5417 = vmatpush1.msra.mxu0 %v5360
        %5418 = vmatprep.subr.mxu0 0.0
        %5419 = vmatpush1.msra.mxu0 %v5361
        %5420 = vmatprep.subr.mxu0 0.0
        %5421 = vmatpush1.msra.mxu0 %v5362
        %5422 = vmatprep.subr.mxu0 0.0
        %5423 = vmatpush1.msra.mxu0 %v5363
        %5424 = vmatprep.subr.mxu0 0.0
        %5425 = vmatpush1.msra.mxu0 %v5364
        %5426 = vmatprep.subr.mxu0 0.0
        %5427 = vmatpush1.msra.mxu0 %v5365
        %5428 = vmatprep.subr.mxu0 0.0
        %5429 = vmatpush1.msra.mxu0 %v5366
        %5430 = vmatprep.subr.mxu0 0.0
        %5431 = vmatpush1.msra.mxu0 %v5367
        %5432 = vmatprep.subr.mxu0 0.0
        %5433 = vmatpush1.msra.mxu0 %v5368
        %5434 = vmatprep.mubr.f32.mxu0 %v5304
        %5435 = vmatmul.mubr.f32.gmra.mrb[0].mxu0 %v5303
        %v5436 = vpop.f32.mrb[0].mxu0
        %v5437 = vadd.f32 %v5369, %v5436
        %v5438 = vpop.f32.mrb[0].mxu0
        %5439 = vdwg.mxu0
        %vm5440 = vcmask 8192
        %5441 = vst.msk [vmem:[%s677] sm:$0x1] %vm5440, %v5437
        %s5442 = sand.u32 %s325, 1
        %s5443 = scalar_lea.sflag [#allocation6], %s5442
        %s5444 = sand.u32 %s325, 1
        %s5445 = smul.addr %s5444, 128
        %s5446 = scalar_lea.vmem [#allocation16], %s5445
        %p5447 = scmp.lt.s32.totalorder %s43, 1
        %s5448 = scalar_select %p5447, %s43, 1
        %s5449 = smul.addr %s5448, 16
        %s5450 = smul.addr %s5449, 8
        %s5451 = scalar_lea.vmem %s13, %s5450
        %p5452 = scmp.lt.s32.totalorder %s43, 1
        %s5453 = scalar_select %p5452, %s43, 1
        %s5454 = smul.addr %s5453, 16
        %s5455 = smul.addr %s5454, 8
        %s5456 = scalar_lea.vmem %s14, %s5455
        %s5457 = sand.u32 %s403, 1
        %s5458 = scalar_lea.sflag [#allocation18], %s5457
        %s5459 = sand.u32 %s403, 1
        %s5460 = scalar_lea.vmem [#allocation17], %s5459
        // Predicated region
        $region97: #{tpu_custom_call.1} parent=67 // pred_check
          %p5461 = pneg %p335
        $region98: #{tpu_custom_call.1} parent=67 // pred_check_branch
          %5463 = sbr.rel (%p5461) target = $region100
        $region99: #{tpu_custom_call.1} parent=67 // pred_region
          %s5465 = ssub.s32 2048, 2048
          %5466 = vsyncadd %s5443, %s5465
          %s5467 = smul.addr %s43, 16
          %s5468 = smul.addr %s5467, 128
          %s5469 = scalar_lea.hbm %s12, %s5468
          %s5470 = sshll.u32 %s5446, 4
          %s5471 = int_to_ptr.vmem [resolvable:$true] %s5470
          %5476 = dma.vmem_to_hbm [thread:$0]  %s5471, 2048, %s5469, %s5443, 128, 128, 8
        $region100: #{tpu_custom_call.1} parent=67 // pred_fallthru
          _
        // Predicated region
        $region101: #{tpu_custom_call.1} parent=67 // pred_check
          %p5477 = pneg %p361
        $region102: #{tpu_custom_call.1} parent=67 // pred_check_branch
          %5479 = sbr.rel (%p5477) target = $region104
        $region103: #{tpu_custom_call.1} parent=67 // pred_region
          _
        $region104: #{tpu_custom_call.1} parent=67 // pred_fallthru
          _
        // Predicated region
        $region105: #{tpu_custom_call.1} parent=67 // pred_check
          %p5480 = pneg %p387
        $region106: #{tpu_custom_call.1} parent=67 // pred_check_branch
          %5482 = sbr.rel (%p5480) target = $region108
        $region107: #{tpu_custom_call.1} parent=67 // pred_region
          _
        $region108: #{tpu_custom_call.1} parent=67 // pred_fallthru
          _
        // Predicated region
        $region109: #{tpu_custom_call.1} parent=67 // pred_check
          %p5483 = pneg %p413
        $region110: #{tpu_custom_call.1} parent=67 // pred_check_branch
          %5485 = sbr.rel (%p5483) target = $region112
        $region111: #{tpu_custom_call.1} parent=67 // pred_region
          %s5487 = ssub.s32 16, 16
          %5488 = vsyncadd %s5458, %s5487
          %s5489 = smul.addr %s43, 16
          %s5490 = scalar_lea.hbm %s15, %s5489
          %s5492 = sshll.u32 %s5460, 4
          %s5493 = int_to_ptr.vmem [resolvable:$true] %s5492
          %5495 = dma.vmem_to_hbm [thread:$0]  %s5493, 16, %s5490, %s5458
        $region112: #{tpu_custom_call.1} parent=67 // pred_fallthru
          _
      $region68: #{tpu_custom_call.1} parent=5 // pred_fallthru
        _
      %p5496 = scmp.le.s32.totalorder 2, %s38
      // Predicated region
      $region113: #{tpu_custom_call.1} parent=5 // pred_check
        %p5497 = pneg %p5496
      $region114: #{tpu_custom_call.1} parent=5 // pred_check_branch
        %5499 = sbr.rel (%p5497) target = $region116
      $region115: #{tpu_custom_call.1} parent=5 // pred_region
        %s5500 = ssub.s32 %s38, 2
        // Predicated region
        $region117: #{tpu_custom_call.1} parent=115 // pred_check
          %p5501 = pneg %p341
        $region118: #{tpu_custom_call.1} parent=115 // pred_check_branch
          %5503 = sbr.rel (%p5501) target = $region120
        $region119: #{tpu_custom_call.1} parent=115 // pred_region
          %s5504 = sand.u32 %s326, 1
          %s5505 = scalar_lea.sflag [#allocation6], %s5504
          %s5506 = sand.u32 %s326, 1
          %s5507 = smul.addr %s5506, 128
          %s5508 = scalar_lea.vmem [#allocation16], %s5507
          %5509 = dma.done %s5505, 2048
        $region120: #{tpu_custom_call.1} parent=115 // pred_fallthru
          _
        // Predicated region
        $region121: #{tpu_custom_call.1} parent=115 // pred_check
          %p5510 = pneg %p367
        $region122: #{tpu_custom_call.1} parent=115 // pred_check_branch
          %5512 = sbr.rel (%p5510) target = $region124
        $region123: #{tpu_custom_call.1} parent=115 // pred_region
          %p5513 = scmp.lt.s32.totalorder %s44, 1
          %s5514 = scalar_select %p5513, %s44, 1
          %s5515 = smul.addr %s5514, 16
          %s5516 = smul.addr %s5515, 8
          %s5517 = scalar_lea.vmem %s13, %s5516
        $region124: #{tpu_custom_call.1} parent=115 // pred_fallthru
          _
        // Predicated region
        $region125: #{tpu_custom_call.1} parent=115 // pred_check
          %p5518 = pneg %p393
        $region126: #{tpu_custom_call.1} parent=115 // pred_check_branch
          %5520 = sbr.rel (%p5518) target = $region128
        $region127: #{tpu_custom_call.1} parent=115 // pred_region
          %p5521 = scmp.lt.s32.totalorder %s44, 1
          %s5522 = scalar_select %p5521, %s44, 1
          %s5523 = smul.addr %s5522, 16
          %s5524 = smul.addr %s5523, 8
          %s5525 = scalar_lea.vmem %s14, %s5524
        $region128: #{tpu_custom_call.1} parent=115 // pred_fallthru
          _
        // Predicated region
        $region129: #{tpu_custom_call.1} parent=115 // pred_check
          %p5526 = pneg %p419
        $region130: #{tpu_custom_call.1} parent=115 // pred_check_branch
          %5528 = sbr.rel (%p5526) target = $region132
        $region131: #{tpu_custom_call.1} parent=115 // pred_region
          %s5529 = sand.u32 %s404, 1
          %s5530 = scalar_lea.sflag [#allocation18], %s5529
          %s5531 = sand.u32 %s404, 1
          %s5532 = scalar_lea.vmem [#allocation17], %s5531
          %5533 = dma.done %s5530, 16
        $region132: #{tpu_custom_call.1} parent=115 // pred_fallthru
          _
      $region116: #{tpu_custom_call.1} parent=5 // pred_fallthru
        _
    $region6: #{tpu_custom_call.1} parent=1 // loop_footer
      %s42 = sadd.s32 1, %s38
    $region7: #{tpu_custom_call.1} parent=1 // loop_footer_branch
      %37 = sbr.rel target = $region3
    $region8: #{tpu_custom_call.1} parent=1 // loop_exit
      _
    %5534 = vsyncpa [#allocation5], 1
    %s5535 = scalar_lea.sflag [#allocation5], 1
    %5536 = vsyncpa %s5535, 1
    %5537 = vsyncpa [#allocation8], 1
    %s5538 = scalar_lea.sflag [#allocation8], 1
    %5539 = vsyncpa %s5538, 1
    %5540 = vsyncpa [#allocation11], 1
    %5541 = vsyncpa [#allocation14], 1
    %5542 = vsyncpa [#allocation6], 1
    %s5543 = scalar_lea.sflag [#allocation6], 1
    %5544 = vsyncpa %s5543, 1
    %5545 = vsyncpa [#allocation18], 1
    %s5546 = scalar_lea.sflag [#allocation18], 1
    %5547 = vsyncpa %s5546, 1

</llo_original>
